<compile_context>
chip_gen: v6e
topology: v6e:2x2x1
jax: 0.10.0
libtpu: 0.0.40
codegen_flags: <defaults>
</compile_context>

<pallas_src>
import numpy as np
import jax
import jax.numpy as jnp
from jax.experimental import pallas as pl
from jax.experimental.pallas import tpu as pltpu


def round_up(x, m):
    return ((x + m - 1) // m) * m


def _vmem_limit(estimate_bytes):
    # Headroom over the estimated resident set; floor 32 MiB, capped below the
    # 128 MiB physical VMEM of v5e/v6e. On v7x (64 MiB physical) at realistic
    # hidden sizes, shrink Tc (chunk length) rather than raising this further.
    return int(min(max(int(estimate_bytes * 1.25) + (4 << 20), 32 << 20), 100 << 20))


# ----------------------------------------------------------------------------
# Pallas kernel 1: fused bi-directional ON-LSTM recurrence (both dirs interleaved)
# ----------------------------------------------------------------------------
# TODO(synk): the real on_lstm1 / on_lstm2 modules are external constructor args
# (internals not given); a standard ON-LSTM cell (Shen et al., chunk_size=1) is
# implemented here with deterministically initialized weights.
def run_bi_onlstm(x_f, x_b, wx_f, wx_b, wh_f, wh_b, b_f, b_b, *, H, Tc):
    """x_f/x_b: [Tp, Np, Dp] bf16 (forward / host-reversed input, time-major).
    wx_*: [Dp, 6*Hp] bf16, wh_*: [Hp, 6*Hp] bf16, b_*: [1, 6*Hp] f32.
    Returns (h_fwd, h_bwd), each [Tp, Np, Hp] bf16."""
    Tp, Np, Dp = x_f.shape
    Hp = wh_f.shape[0]
    G6 = wh_f.shape[1]                      # 6 * Hp
    num_chunks = Tp // Tc

    def kernel(xf_ref, xb_ref, wxf_ref, wxb_ref, whf_ref, whb_ref,
               bf_ref, bb_ref, of_ref, ob_ref,
               h0_sc, c0_sc, h1_sc, c1_sc, pre0_sc, pre1_sc):
        @pl.when(pl.program_id(0) == 0)
        def _():
            h0_sc[...] = jnp.zeros_like(h0_sc)
            c0_sc[...] = jnp.zeros_like(c0_sc)
            h1_sc[...] = jnp.zeros_like(h1_sc)
            c1_sc[...] = jnp.zeros_like(c1_sc)

        # ---- hoisted input projections: one large-M matmul per direction ----
        # (M = Tc*Np rows instead of Tc tiny M=Np matmuls; bias folded in here
        #  so the step body has no per-step bias broadcast)
        xf2 = xf_ref[...].reshape(Tc * Np, Dp)
        xb2 = xb_ref[...].reshape(Tc * Np, Dp)
        pre0_sc[...] = (jnp.dot(xf2, wxf_ref[...], preferred_element_type=jnp.float32)
                        + bf_ref[...]).astype(jnp.bfloat16).reshape(Tc, Np, G6)
        pre1_sc[...] = (jnp.dot(xb2, wxb_ref[...], preferred_element_type=jnp.float32)
                        + bb_ref[...]).astype(jnp.bfloat16).reshape(Tc, Np, G6)

        # ---- per-chunk constants hoisted out of the time loop ----
        row = jax.lax.broadcasted_iota(jnp.int32, (Hp, Hp), 0)
        col = jax.lax.broadcasted_iota(jnp.int32, (Hp, Hp), 1)
        tri = (row <= col).astype(jnp.bfloat16)            # cumsum as bf16 MXU matmul
        lane = jax.lax.broadcasted_iota(jnp.int32, (1, Hp), 1)
        valid = lane < H                                   # mask padded hidden lanes

        def cumax(z):                                      # cumsum(softmax(z)) on real lanes
            zm = jnp.where(valid, z, -1e30)                # z is f32 -> -1e30 is safe
            m = jnp.max(zm, axis=-1, keepdims=True)
            e = jnp.exp(zm - m)
            sm = e * pl.reciprocal(jnp.sum(e, axis=-1, keepdims=True), approx=True)
            return jnp.dot(sm.astype(jnp.bfloat16), tri, preferred_element_type=jnp.float32)

        def sigmoid(v):                                    # tanh path -> EUP, overflow-safe
            return 0.5 * (jnp.tanh(0.5 * v) + 1.0)

        def cell(pre_x, h, c, wh_ref):
            pre = pre_x.astype(jnp.float32) + jnp.dot(
                h.astype(jnp.bfloat16), wh_ref[...], preferred_element_type=jnp.float32)
            # consume 128-lane-aligned gate slices incrementally (short live ranges)
            mf = cumax(pre[:, 0 * Hp:1 * Hp])              # master forget gate
            mi = 1.0 - cumax(pre[:, 1 * Hp:2 * Hp])        # master input gate
            w = mf * mi
            c_new = (sigmoid(pre[:, 2 * Hp:3 * Hp]) * w + (mf - w)) * c       # f_hat * c
            c_new = c_new + ((sigmoid(pre[:, 3 * Hp:4 * Hp]) * w + (mi - w))  # + i_hat * g
                             * jnp.tanh(pre[:, 5 * Hp:6 * Hp]))
            h_new = sigmoid(pre[:, 4 * Hp:5 * Hp]) * jnp.tanh(c_new)
            return h_new, c_new

        def step(t, carry):
            hf, cf, hb, cb = carry
            hf, cf = cell(pre0_sc[t], hf, cf, whf_ref)     # forward direction
            of_ref[t] = hf.astype(jnp.bfloat16)
            hb, cb = cell(pre1_sc[t], hb, cb, whb_ref)     # backward direction (independent)
            ob_ref[t] = hb.astype(jnp.bfloat16)
            return (hf, cf, hb, cb)

        hf, cf, hb, cb = jax.lax.fori_loop(
            0, Tc, step, (h0_sc[...], c0_sc[...], h1_sc[...], c1_sc[...]))
        h0_sc[...] = hf                                    # persist across T-chunks
        c0_sc[...] = cf
        h1_sc[...] = hb
        c1_sc[...] = cb

    # resident-set estimate: double-buffered ins/outs + scratch + kernel temporaries
    est = (2 * (2 * Tc * Np * Dp * 2 + 2 * Dp * G6 * 2 + 2 * Hp * G6 * 2 + 2 * G6 * 4)
           + 2 * (2 * Tc * Np * Hp * 2)
           + 4 * Np * Hp * 4 + 2 * Tc * Np * G6 * 2
           + Hp * Hp * 2 + Tc * Np * G6 * 4 + 16 * Np * Hp * 4)

    return pl.pallas_call(
        kernel,
        out_shape=(jax.ShapeDtypeStruct((Tp, Np, Hp), jnp.bfloat16),
                   jax.ShapeDtypeStruct((Tp, Np, Hp), jnp.bfloat16)),
        grid_spec=pltpu.PrefetchScalarGridSpec(
            num_scalar_prefetch=0,
            grid=(num_chunks,),
            in_specs=[
                pl.BlockSpec((Tc, Np, Dp), lambda t: (t, 0, 0)),
                pl.BlockSpec((Tc, Np, Dp), lambda t: (t, 0, 0)),
                pl.BlockSpec((Dp, G6), lambda t: (0, 0)),
                pl.BlockSpec((Dp, G6), lambda t: (0, 0)),
                pl.BlockSpec((Hp, G6), lambda t: (0, 0)),
                pl.BlockSpec((Hp, G6), lambda t: (0, 0)),
                pl.BlockSpec((1, G6), lambda t: (0, 0)),
                pl.BlockSpec((1, G6), lambda t: (0, 0)),
            ],
            out_specs=(
                pl.BlockSpec((Tc, Np, Hp), lambda t: (t, 0, 0)),
                pl.BlockSpec((Tc, Np, Hp), lambda t: (t, 0, 0)),
            ),
            scratch_shapes=[
                pltpu.VMEM((Np, Hp), jnp.float32),         # h fwd
                pltpu.VMEM((Np, Hp), jnp.float32),         # c fwd (kept f32)
                pltpu.VMEM((Np, Hp), jnp.float32),         # h bwd
                pltpu.VMEM((Np, Hp), jnp.float32),         # c bwd
                pltpu.VMEM((Tc, Np, G6), jnp.bfloat16),    # hoisted x-projection fwd
                pltpu.VMEM((Tc, Np, G6), jnp.bfloat16),    # hoisted x-projection bwd
            ],
        ),
        compiler_params=pltpu.CompilerParams(
            dimension_semantics=("arbitrary",),            # chunk axis is the recurrence
            vmem_limit_bytes=_vmem_limit(est),
        ),
    )(x_f, x_b, wx_f, wx_b, wh_f, wh_b, b_f, b_b)


# ----------------------------------------------------------------------------
# Pallas kernel 2: fused FNN (Linear over concat(h_fwd, h_bwd)) + softmax
# Reads the ON-LSTM output layout directly -> no host transpose/concat/pad pass.
# ----------------------------------------------------------------------------
def run_fnn_softmax(hid_f, hid_b, w_f, w_b, b, *, L, Tt):
    """hid_f/hid_b: [Tp, Np, Hp] bf16; w_f/w_b: [Hp, Lp] bf16; b: [1, Lp] f32."""
    Tp, Np, Hp = hid_f.shape
    Lp = w_f.shape[1]
    R = Tt * Np                                            # rows per grid step

    def kernel(hf_ref, hb_ref, wf_ref, wb_ref, b_ref, logits_ref, probs_ref):
        hf = hf_ref[...].reshape(R, Hp)
        hb = hb_ref[...].reshape(R, Hp)
        logits = (jnp.dot(hf, wf_ref[...], preferred_element_type=jnp.float32)
                  + jnp.dot(hb, wb_ref[...], preferred_element_type=jnp.float32)
                  + b_ref[...])
        logits_ref[...] = logits
        lane = jax.lax.broadcasted_iota(jnp.int32, (1, Lp), 1)
        zm = jnp.where(lane < L, logits, -1e30)            # f32, mask padded tag lanes
        m = jnp.max(zm, axis=-1, keepdims=True)
        e = jnp.exp(zm - m)
        probs_ref[...] = e / jnp.sum(e, axis=-1, keepdims=True)

    est = (2 * (2 * Tt * Np * Hp * 2 + 2 * Hp * Lp * 2 + Lp * 4)
           + 2 * 2 * R * Lp * 4 + 8 * R * Lp * 4)

    return pl.pallas_call(
        kernel,
        out_shape=(jax.ShapeDtypeStruct((Tp * Np, Lp), jnp.float32),
                   jax.ShapeDtypeStruct((Tp * Np, Lp), jnp.float32)),
        grid_spec=pltpu.PrefetchScalarGridSpec(
            num_scalar_prefetch=0,
            grid=(Tp // Tt,),
            in_specs=[
                pl.BlockSpec((Tt, Np, Hp), lambda i: (i, 0, 0)),
                pl.BlockSpec((Tt, Np, Hp), lambda i: (i, 0, 0)),
                pl.BlockSpec((Hp, Lp), lambda i: (0, 0)),
                pl.BlockSpec((Hp, Lp), lambda i: (0, 0)),
                pl.BlockSpec((1, Lp), lambda i: (0, 0)),
            ],
            out_specs=(
                pl.BlockSpec((R, Lp), lambda i: (i, 0)),
                pl.BlockSpec((R, Lp), lambda i: (i, 0)),
            ),
        ),
        compiler_params=pltpu.CompilerParams(
            dimension_semantics=("parallel",),
            vmem_limit_bytes=_vmem_limit(est),
        ),
    )(hid_f, hid_b, w_f, w_b, b)


# ----------------------------------------------------------------------------
# Host-side CRF Viterbi decode (torchcrf.decode semantics, list-producing glue)
# ----------------------------------------------------------------------------
def viterbi_decode(emissions, length, start_trans, end_trans, trans):
    score = start_trans + emissions[0]
    history = []
    for t in range(1, int(length)):
        broadcast = score[:, None] + trans + emissions[t][None, :]
        history.append(broadcast.argmax(0))
        score = broadcast.max(0)
    score = score + end_trans
    best = int(score.argmax())
    tags = [best]
    for bp in reversed(history):
        best = int(bp[best])
        tags.append(best)
    tags.reverse()
    return tags


# ----------------------------------------------------------------------------
# Model wrapper (glue + kernels)
# ----------------------------------------------------------------------------
def bert_bi_onlstm_forward(params, input_id, input_mask, token_map, arg_seq,
                           crf_mask, seq_len):
    B, S = input_id.shape
    h = params["hidden_size"]
    seq_num = crf_mask.shape[1]
    T = crf_mask.shape[2]                         # max_token_len
    token_len = [len(tm) for tm in token_map]
    H, Hp, Dp, L, Lp = params["H"], params["Hp"], params["Dp"], params["L"], params["Lp"]

    # --- get_input (bert_noCLS variant: token pooling + arg_seq, no CLS) -------
    # TODO(synk): the BERT backbone (self.model) is an external module; it is
    # substituted by a deterministic embedding lookup (same output shape).
    bert_output = params["embed"][np.asarray(input_id)]             # [B, S, h]
    bert_output = bert_output * np.asarray(input_mask)[:, :, None]

    # get_token_input: single-subword copy, multi-subword max-pool (ragged glue)
    token_input = np.zeros((B, T, h), np.float32)
    for i in range(B):
        for j, span in enumerate(token_map[i]):
            if len(span) == 1:
                token_input[i, j] = bert_output[i, span[0]]
            elif len(span) > 1:
                token_input[i, j] = bert_output[i, span[0]:span[-1] + 1].max(0)

    new_temp_input = np.repeat(token_input[:, None, :, :], seq_num, axis=1)   # [B,seq_num,T,h]
    temp_logits = np.concatenate([new_temp_input, np.asarray(arg_seq)], axis=-1)
    Din = temp_logits.shape[-1]                   # h + 5

    # reversed-token copy (input2): only the first token_len positions, rest zero
    input2 = np.zeros_like(temp_logits)
    for i in range(B):
        tl = token_len[i]
        for j in range(tl):
            input2[i, :, j] = temp_logits[i, :, tl - j - 1]

    # --- fused bidirectional ON-LSTM kernel (time-major, padded/lane-dense) ---
    # All B*seq_num rows are batched into one call (fills the MXU M dimension
    # as the workload grows; Np scales up automatically via padding).
    N = B * seq_num
    Np = round_up(max(N, 8), 8)
    Tc = T if T <= 128 else 128
    Tp = round_up(T, Tc)

    x_f = np.zeros((Tp, Np, Dp), np.float32)
    x_b = np.zeros((Tp, Np, Dp), np.float32)
    x_f[:T, :N, :Din] = np.transpose(temp_logits, (2, 0, 1, 3)).reshape(T, N, Din)
    x_b[:T, :N, :Din] = np.transpose(input2, (2, 0, 1, 3)).reshape(T, N, Din)

    hid_f, hid_b = run_bi_onlstm(
        jnp.asarray(x_f, jnp.bfloat16), jnp.asarray(x_b, jnp.bfloat16),
        params["wx_f"], params["wx_b"], params["wh_f"], params["wh_b"],
        params["b_f"], params["b_b"], H=H, Tc=Tc)            # each [Tp, Np, Hp] bf16

    # --- FNN + softmax kernel (consumes bf16 LSTM output layout directly) ----
    # Dropout(0.1) is identity at inference time.
    logits_flat, probs_flat = run_fnn_softmax(
        hid_f, hid_b, params["fnn_w_f"], params["fnn_w_b"], params["fnn_b"],
        L=L, Tt=Tc)
    logits = jnp.transpose(
        logits_flat.reshape(Tp, Np, Lp)[:T, :N, :L].reshape(T, B, seq_num, L),
        (1, 2, 0, 3))                                        # [B, seq_num, T, L]
    probs = jnp.transpose(
        probs_flat.reshape(Tp, Np, Lp)[:T, :N, :L].reshape(T, B, seq_num, L),
        (1, 2, 0, 3))

    jax.block_until_ready((logits, probs))

    # --- CRF decode (host glue, produces Python lists like torchcrf) -------
    # TODO(synk): CRF NLL loss path (rel_tags != None) not implemented.
    logits_np = np.asarray(logits)
    crf_mask_np = np.asarray(crf_mask)
    lengths = crf_mask_np.sum(axis=-1).astype(np.int32)              # [B, seq_num]
    start_t = np.asarray(params["crf_start"])
    end_t = np.asarray(params["crf_end"])
    trans = np.asarray(params["crf_trans"])

    result, logits_result = [], []
    for i in range(B):
        temp_result = [
            viterbi_decode(logits_np[i, s], lengths[i, s], start_t, end_t, trans)
            for s in range(seq_num)
        ]
        result.append(temp_result[0:int(seq_len[i])])
        logits_result.append(probs[i, 0:int(seq_len[i])])
    return result, logits_result, logits, probs


# ----------------------------------------------------------------------------
# Deterministic parameter construction (fused + zero-padded weight layout)
# ----------------------------------------------------------------------------
def make_params(key, hidden_size, rel_label, vocab=50):
    h = hidden_size
    Din = h + 5              # bert_noCLS get_input: token_input (h) + arg_seq (5)
    H = h + 5                # ON-LSTM hidden so that 2*H == FNN in-dim 2*(h+5)
    L = rel_label
    Dp = round_up(Din, 128)
    Hp = round_up(H, 128)
    Lp = round_up(L, 128)

    ks = jax.random.split(key, 10)
    u = lambda k, shp, s: (np.asarray(jax.random.uniform(k, shp, jnp.float32)) * 2.0 - 1.0) * s

    # unfused logical weights, then packed into a lane-aligned fused layout
    wx_small = u(ks[1], (2, 6, Din, H), 0.1)
    wh_small = u(ks[2], (2, 6, H, H), 0.1)
    b_small = u(ks[3], (2, 6, H), 0.1)

    wx = np.zeros((2, Dp, 6 * Hp), np.float32)
    wh = np.zeros((2, Hp, 6 * Hp), np.float32)
    bb = np.zeros((2, 1, 6 * Hp), np.float32)
    for d in range(2):
        for g in range(6):
            wx[d, :Din, g * Hp:g * Hp + H] = wx_small[d, g]
            wh[d, :H, g * Hp:g * Hp + H] = wh_small[d, g]
            bb[d, 0, g * Hp:g * Hp + H] = b_small[d, g]

    fnn_w_small = u(ks[4], (2 * H, L), 0.1)
    fnn_b_small = u(ks[5], (L,), 0.1)
    fnn_w_f = np.zeros((Hp, Lp), np.float32)
    fnn_w_b = np.zeros((Hp, Lp), np.float32)
    fnn_w_f[:H, :L] = fnn_w_small[:H]
    fnn_w_b[:H, :L] = fnn_w_small[H:]
    fnn_b = np.zeros((1, Lp), np.float32)
    fnn_b[0, :L] = fnn_b_small

    return {
        "hidden_size": h, "Din": Din, "H": H, "Dp": Dp, "Hp": Hp, "L": L, "Lp": Lp,
        "embed": u(ks[0], (vocab, h), 0.5),
        "wx_f": jnp.asarray(wx[0], jnp.bfloat16),
        "wx_b": jnp.asarray(wx[1], jnp.bfloat16),
        "wh_f": jnp.asarray(wh[0], jnp.bfloat16),
        "wh_b": jnp.asarray(wh[1], jnp.bfloat16),
        "b_f": jnp.asarray(bb[0], jnp.float32),
        "b_b": jnp.asarray(bb[1], jnp.float32),
        "fnn_w_f": jnp.asarray(fnn_w_f, jnp.bfloat16),
        "fnn_w_b": jnp.asarray(fnn_w_b, jnp.bfloat16),
        "fnn_b": jnp.asarray(fnn_b, jnp.float32),
        "crf_start": u(ks[6], (L,), 0.1),
        "crf_end": u(ks[7], (L,), 0.1),
        "crf_trans": u(ks[8], (L, L), 0.1),
    }


if __name__ == "__main__":
    # small shapes
    B, S, h, rel_label, seq_num = 2, 16, 32, 7, 3
    key = jax.random.PRNGKey(0)
    k_par, k_id, k_arg = jax.random.split(key, 3)
    params = make_params(k_par, h, rel_label)

    # ragged subword->token maps (mix of 1-subword and multi-subword tokens)
    token_map = [
        [[0], [1, 2], [3], [4, 5, 6], [7], [8]],                  # 6 tokens
        [[0], [1], [2, 3], [4], [5], [6, 7], [8], [9]],           # 8 tokens
    ]
    T = max(len(tm) for tm in token_map)                          # max_token_len = 8

    input_id = np.asarray(jax.random.randint(k_id, (B, S), 0, 50, jnp.int32))
    input_mask = np.ones((B, S), np.float32)
    input_mask[0, 12:] = 0.0
    input_mask[1, 14:] = 0.0
    arg_seq = np.asarray(jax.random.uniform(k_arg, (B, seq_num, T, 5), jnp.float32))

    # crf_mask: prefix masks per (example, arg-sequence); first position always on
    lens = np.array([[6, 5, 4], [8, 7, 3]], np.int32)
    crf_mask = (np.arange(T)[None, None, :] < lens[:, :, None]).astype(np.int32)
    seq_len = [3, 2]

    result, logits_result, logits, probs = bert_bi_onlstm_forward(
        params, input_id, input_mask, token_map, arg_seq, crf_mask, seq_len)

    jax.block_until_ready((logits, probs))
    assert logits.shape == (B, seq_num, T, rel_label)
    assert probs.shape == (B, seq_num, T, rel_label)
    assert len(result) == B and len(result[0]) == seq_len[0] and len(result[1]) == seq_len[1]
    assert bool(jnp.all(jnp.isfinite(logits))) and bool(jnp.all(jnp.isfinite(probs)))
    print("KERNEL_OK")
</pallas_src>

<mosaic_0001>
module attributes {stable_mosaic.version = 11 : i64} {
  func.func @kernel(%arg0: i32, %arg1: memref<8x8x128xbf16, #tpu.memory_space<vmem>>, %arg2: memref<8x8x128xbf16, #tpu.memory_space<vmem>>, %arg3: memref<128x768xbf16, #tpu.memory_space<vmem>>, %arg4: memref<128x768xbf16, #tpu.memory_space<vmem>>, %arg5: memref<128x768xbf16, #tpu.memory_space<vmem>>, %arg6: memref<128x768xbf16, #tpu.memory_space<vmem>>, %arg7: memref<1x768xf32, #tpu.memory_space<vmem>>, %arg8: memref<1x768xf32, #tpu.memory_space<vmem>>, %arg9: memref<8x8x128xbf16, #tpu.memory_space<vmem>>, %arg10: memref<8x8x128xbf16, #tpu.memory_space<vmem>>, %arg11: memref<8x128xf32, #tpu.memory_space<vmem>>, %arg12: memref<8x128xf32, #tpu.memory_space<vmem>>, %arg13: memref<8x128xf32, #tpu.memory_space<vmem>>, %arg14: memref<8x128xf32, #tpu.memory_space<vmem>>, %arg15: memref<8x8x768xbf16, #tpu.memory_space<vmem>>, %arg16: memref<8x8x768xbf16, #tpu.memory_space<vmem>>) attributes {dimension_semantics = [#tpu.dimension_semantics<arbitrary>], iteration_bounds = array<i64: 1>, scalar_prefetch = 0 : i64, scratch_operands = 6 : i64, tpu.core_type = #tpu.core_type<tc>, window_params = [{transform_indices = @transform_0, window_bounds = array<i64: 8, 8, 128>}, {transform_indices = @transform_1, window_bounds = array<i64: 8, 8, 128>}, {pipeline_mode = #tpu.pipeline_mode<synchronous>, transform_indices = @transform_2, window_bounds = array<i64: 128, 768>}, {pipeline_mode = #tpu.pipeline_mode<synchronous>, transform_indices = @transform_3, window_bounds = array<i64: 128, 768>}, {pipeline_mode = #tpu.pipeline_mode<synchronous>, transform_indices = @transform_4, window_bounds = array<i64: 128, 768>}, {pipeline_mode = #tpu.pipeline_mode<synchronous>, transform_indices = @transform_5, window_bounds = array<i64: 128, 768>}, {pipeline_mode = #tpu.pipeline_mode<synchronous>, transform_indices = @transform_6, window_bounds = array<i64: 1, 768>}, {pipeline_mode = #tpu.pipeline_mode<synchronous>, transform_indices = @transform_7, window_bounds = array<i64: 1, 768>}, {transform_indices = @transform_8, window_bounds = array<i64: 8, 8, 128>}, {transform_indices = @transform_9, window_bounds = array<i64: 8, 8, 128>}]} {
    %c0_i32 = arith.constant 0 : i32
    %0 = arith.cmpi eq, %arg0, %c0_i32 : i32
    %1 = arith.extui %0 : i1 to i32
    %c0_i32_0 = arith.constant 0 : i32
    %2 = arith.cmpi ne, %1, %c0_i32_0 : i32
    scf.if %2 {
      %cst_39 = arith.constant 0.000000e+00 : f32
      %42 = vector.broadcast %cst_39 : f32 to vector<8x128xf32>
      %c0_40 = arith.constant 0 : index
      %c0_41 = arith.constant 0 : index
      %43 = vector.load %arg11[%c0_40, %c0_41] : memref<8x128xf32, #tpu.memory_space<vmem>>, vector<8x128xf32>
      tpu.vector_store %arg11[%c0_40, %c0_41], %42 {strides = array<i32>} : memref<8x128xf32, #tpu.memory_space<vmem>>, vector<8x128xf32>,
      %cst_42 = arith.constant 0.000000e+00 : f32
      %44 = vector.broadcast %cst_42 : f32 to vector<8x128xf32>
      %c0_43 = arith.constant 0 : index
      %c0_44 = arith.constant 0 : index
      %45 = vector.load %arg12[%c0_43, %c0_44] : memref<8x128xf32, #tpu.memory_space<vmem>>, vector<8x128xf32>
      tpu.vector_store %arg12[%c0_43, %c0_44], %44 {strides = array<i32>} : memref<8x128xf32, #tpu.memory_space<vmem>>, vector<8x128xf32>,
      %cst_45 = arith.constant 0.000000e+00 : f32
      %46 = vector.broadcast %cst_45 : f32 to vector<8x128xf32>
      %c0_46 = arith.constant 0 : index
      %c0_47 = arith.constant 0 : index
      %47 = vector.load %arg13[%c0_46, %c0_47] : memref<8x128xf32, #tpu.memory_space<vmem>>, vector<8x128xf32>
      tpu.vector_store %arg13[%c0_46, %c0_47], %46 {strides = array<i32>} : memref<8x128xf32, #tpu.memory_space<vmem>>, vector<8x128xf32>,
      %cst_48 = arith.constant 0.000000e+00 : f32
      %48 = vector.broadcast %cst_48 : f32 to vector<8x128xf32>
      %c0_49 = arith.constant 0 : index
      %c0_50 = arith.constant 0 : index
      %49 = vector.load %arg14[%c0_49, %c0_50] : memref<8x128xf32, #tpu.memory_space<vmem>>, vector<8x128xf32>
      tpu.vector_store %arg14[%c0_49, %c0_50], %48 {strides = array<i32>} : memref<8x128xf32, #tpu.memory_space<vmem>>, vector<8x128xf32>,
    } else {
    }
    %c0 = arith.constant 0 : index
    %c0_1 = arith.constant 0 : index
    %c0_2 = arith.constant 0 : index
    %3 = vector.load %arg1[%c0, %c0_1, %c0_2] : memref<8x8x128xbf16, #tpu.memory_space<vmem>>, vector<8x8x128xbf16>
    %4 = vector.shape_cast %3 : vector<8x8x128xbf16> to vector<64x128xbf16>
    %c0_3 = arith.constant 0 : index
    %c0_4 = arith.constant 0 : index
    %c0_5 = arith.constant 0 : index
    %5 = vector.load %arg2[%c0_3, %c0_4, %c0_5] : memref<8x8x128xbf16, #tpu.memory_space<vmem>>, vector<8x8x128xbf16>
    %6 = vector.shape_cast %5 : vector<8x8x128xbf16> to vector<64x128xbf16>
    %c0_6 = arith.constant 0 : index
    %c0_7 = arith.constant 0 : index
    %7 = vector.load %arg3[%c0_6, %c0_7] : memref<128x768xbf16, #tpu.memory_space<vmem>>, vector<128x768xbf16>
    %cst = arith.constant dense<0.000000e+00> : vector<64x768xf32>
    %8 = tpu.matmul %4, %7, %cst {dimension_numbers = #tpu.dot_dimension_numbers<[1], [0], [0], [1], [0, 0, 1, 1], [], []>} : vector<64x128xbf16>, vector<128x768xbf16>, vector<64x768xf32> -> vector<64x768xf32>
    %c0_8 = arith.constant 0 : index
    %c0_9 = arith.constant 0 : index
    %9 = vector.load %arg7[%c0_8, %c0_9] : memref<1x768xf32, #tpu.memory_space<vmem>>, vector<1x768xf32>
    %10 = vector.broadcast %9 : vector<1x768xf32> to vector<64x768xf32>
    %11 = arith.addf %8, %10 : vector<64x768xf32>
    %12 = arith.truncf %11 : vector<64x768xf32> to vector<64x768xbf16>
    %13 = vector.shape_cast %12 : vector<64x768xbf16> to vector<8x8x768xbf16>
    %c0_10 = arith.constant 0 : index
    %c0_11 = arith.constant 0 : index
    %c0_12 = arith.constant 0 : index
    %14 = vector.load %arg15[%c0_10, %c0_11, %c0_12] : memref<8x8x768xbf16, #tpu.memory_space<vmem>>, vector<8x8x768xbf16>
    tpu.vector_store %arg15[%c0_10, %c0_11, %c0_12], %13 {strides = array<i32>} : memref<8x8x768xbf16, #tpu.memory_space<vmem>>, vector<8x8x768xbf16>,
    %c0_13 = arith.constant 0 : index
    %c0_14 = arith.constant 0 : index
    %15 = vector.load %arg4[%c0_13, %c0_14] : memref<128x768xbf16, #tpu.memory_space<vmem>>, vector<128x768xbf16>
    %cst_15 = arith.constant dense<0.000000e+00> : vector<64x768xf32>
    %16 = tpu.matmul %6, %15, %cst_15 {dimension_numbers = #tpu.dot_dimension_numbers<[1], [0], [0], [1], [0, 0, 1, 1], [], []>} : vector<64x128xbf16>, vector<128x768xbf16>, vector<64x768xf32> -> vector<64x768xf32>
    %c0_16 = arith.constant 0 : index
    %c0_17 = arith.constant 0 : index
    %17 = vector.load %arg8[%c0_16, %c0_17] : memref<1x768xf32, #tpu.memory_space<vmem>>, vector<1x768xf32>
    %18 = vector.broadcast %17 : vector<1x768xf32> to vector<64x768xf32>
    %19 = arith.addf %16, %18 : vector<64x768xf32>
    %20 = arith.truncf %19 : vector<64x768xf32> to vector<64x768xbf16>
    %21 = vector.shape_cast %20 : vector<64x768xbf16> to vector<8x8x768xbf16>
    %c0_18 = arith.constant 0 : index
    %c0_19 = arith.constant 0 : index
    %c0_20 = arith.constant 0 : index
    %22 = vector.load %arg16[%c0_18, %c0_19, %c0_20] : memref<8x8x768xbf16, #tpu.memory_space<vmem>>, vector<8x8x768xbf16>
    tpu.vector_store %arg16[%c0_18, %c0_19, %c0_20], %21 {strides = array<i32>} : memref<8x8x768xbf16, #tpu.memory_space<vmem>>, vector<8x8x768xbf16>,
    %23 = tpu.iota {dimensions = array<i32: 0>} : vector<128x128xi32>
    %24 = tpu.iota {dimensions = array<i32: 1>} : vector<128x128xi32>
    %25 = arith.cmpi sle, %23, %24 : vector<128x128xi32>
    %26 = arith.extui %25 : vector<128x128xi1> to vector<128x128xi32>
    %27 = arith.sitofp %26 : vector<128x128xi32> to vector<128x128xf32>
    %28 = arith.truncf %27 : vector<128x128xf32> to vector<128x128xbf16>
    %29 = tpu.iota {dimensions = array<i32: 1>} : vector<1x128xi32>
    %c37_i32 = arith.constant 37 : i32
    %30 = vector.broadcast %c37_i32 : i32 to vector<1x128xi32>
    %31 = arith.cmpi slt, %29, %30 : vector<1x128xi32>
    %c0_21 = arith.constant 0 : index
    %c0_22 = arith.constant 0 : index
    %32 = vector.load %arg11[%c0_21, %c0_22] : memref<8x128xf32, #tpu.memory_space<vmem>>, vector<8x128xf32>
    %c0_23 = arith.constant 0 : index
    %c0_24 = arith.constant 0 : index
    %33 = vector.load %arg12[%c0_23, %c0_24] : memref<8x128xf32, #tpu.memory_space<vmem>>, vector<8x128xf32>
    %c0_25 = arith.constant 0 : index
    %c0_26 = arith.constant 0 : index
    %34 = vector.load %arg13[%c0_25, %c0_26] : memref<8x128xf32, #tpu.memory_space<vmem>>, vector<8x128xf32>
    %c0_27 = arith.constant 0 : index
    %c0_28 = arith.constant 0 : index
    %35 = vector.load %arg14[%c0_27, %c0_28] : memref<8x128xf32, #tpu.memory_space<vmem>>, vector<8x128xf32>
    %c0_i32_29 = arith.constant 0 : i32
    %c8_i32 = arith.constant 8 : i32
    %36 = arith.addi %c0_i32_29, %c8_i32 : i32
    %c1_i32 = arith.constant 1 : i32
    %37:4 = scf.for %arg17 = %c0_i32_29 to %36 step %c1_i32 iter_args(%arg18 = %32, %arg19 = %33, %arg20 = %34, %arg21 = %35) -> (vector<8x128xf32>, vector<8x128xf32>, vector<8x128xf32>, vector<8x128xf32>)  : i32 {
      %42 = arith.index_cast %arg17 : i32 to index
      %c0_39 = arith.constant 0 : index
      %c0_40 = arith.constant 0 : index
      %43 = vector.load %arg15[%42, %c0_39, %c0_40] : memref<8x8x768xbf16, #tpu.memory_space<vmem>>, vector<1x8x768xbf16>
      %44 = vector.shape_cast %43 : vector<1x8x768xbf16> to vector<8x768xbf16>
      %45 = arith.extf %44 : vector<8x768xbf16> to vector<8x768xf32>
      %46 = arith.truncf %arg18 : vector<8x128xf32> to vector<8x128xbf16>
      %c0_41 = arith.constant 0 : index
      %c0_42 = arith.constant 0 : index
      %47 = vector.load %arg5[%c0_41, %c0_42] : memref<128x768xbf16, #tpu.memory_space<vmem>>, vector<128x768xbf16>
      %cst_43 = arith.constant dense<0.000000e+00> : vector<8x768xf32>
      %48 = tpu.matmul %46, %47, %cst_43 {dimension_numbers = #tpu.dot_dimension_numbers<[1], [0], [0], [1], [0, 0, 1, 1], [], []>} : vector<8x128xbf16>, vector<128x768xbf16>, vector<8x768xf32> -> vector<8x768xf32>
      %49 = arith.addf %45, %48 : vector<8x768xf32>
      %50 = vector.extract_strided_slice %49 {offsets = [0, 0], sizes = [8, 128], strides = [1, 1]} : vector<8x768xf32> to vector<8x128xf32>
      %cst_44 = arith.constant -1.000000e+30 : f32
      %51 = vector.shape_cast %31 : vector<1x128xi1> to vector<1x128xi1>
      %52 = vector.broadcast %51 : vector<1x128xi1> to vector<8x128xi1>
      %53 = vector.broadcast %cst_44 : f32 to vector<8x128xf32>
      %54 = arith.select %52, %50, %53 : vector<8x128xi1>, vector<8x128xf32>
      %cst_45 = arith.constant dense<0xFF800000> : vector<8xf32>
      %55 = vector.multi_reduction <maximumf>, %54, %cst_45 [1] : vector<8x128xf32> to vector<8xf32>
      %56 = vector.shape_cast %55 : vector<8xf32> to vector<8x1xf32>
      %57 = vector.broadcast %56 : vector<8x1xf32> to vector<8x128xf32>
      %58 = arith.subf %54, %57 : vector<8x128xf32>
      %59 = math.exp %58 : vector<8x128xf32>
      %cst_46 = arith.constant dense<0.000000e+00> : vector<8xf32>
      %60 = vector.multi_reduction <add>, %59, %cst_46 [1] : vector<8x128xf32> to vector<8xf32>
      %61 = vector.shape_cast %60 : vector<8xf32> to vector<8x1xf32>
      %62 = tpu.reciprocal %61 {approx = true} : vector<8x1xf32> -> vector<8x1xf32>
      %63 = vector.broadcast %62 : vector<8x1xf32> to vector<8x128xf32>
      %64 = arith.mulf %59, %63 : vector<8x128xf32>
      %65 = arith.truncf %64 : vector<8x128xf32> to vector<8x128xbf16>
      %cst_47 = arith.constant dense<0.000000e+00> : vector<8x128xf32>
      %66 = tpu.matmul %65, %28, %cst_47 {dimension_numbers = #tpu.dot_dimension_numbers<[1], [0], [0], [1], [0, 0, 1, 1], [], []>} : vector<8x128xbf16>, vector<128x128xbf16>, vector<8x128xf32> -> vector<8x128xf32>
      %67 = vector.extract_strided_slice %49 {offsets = [0, 128], sizes = [8, 128], strides = [1, 1]} : vector<8x768xf32> to vector<8x128xf32>
      %cst_48 = arith.constant -1.000000e+30 : f32
      %68 = vector.shape_cast %31 : vector<1x128xi1> to vector<1x128xi1>
      %69 = vector.broadcast %68 : vector<1x128xi1> to vector<8x128xi1>
      %70 = vector.broadcast %cst_48 : f32 to vector<8x128xf32>
      %71 = arith.select %69, %67, %70 : vector<8x128xi1>, vector<8x128xf32>
      %cst_49 = arith.constant dense<0xFF800000> : vector<8xf32>
      %72 = vector.multi_reduction <maximumf>, %71, %cst_49 [1] : vector<8x128xf32> to vector<8xf32>
      %73 = vector.shape_cast %72 : vector<8xf32> to vector<8x1xf32>
      %74 = vector.broadcast %73 : vector<8x1xf32> to vector<8x128xf32>
      %75 = arith.subf %71, %74 : vector<8x128xf32>
      %76 = math.exp %75 : vector<8x128xf32>
      %cst_50 = arith.constant dense<0.000000e+00> : vector<8xf32>
      %77 = vector.multi_reduction <add>, %76, %cst_50 [1] : vector<8x128xf32> to vector<8xf32>
      %78 = vector.shape_cast %77 : vector<8xf32> to vector<8x1xf32>
      %79 = tpu.reciprocal %78 {approx = true} : vector<8x1xf32> -> vector<8x1xf32>
      %80 = vector.broadcast %79 : vector<8x1xf32> to vector<8x128xf32>
      %81 = arith.mulf %76, %80 : vector<8x128xf32>
      %82 = arith.truncf %81 : vector<8x128xf32> to vector<8x128xbf16>
      %cst_51 = arith.constant dense<0.000000e+00> : vector<8x128xf32>
      %83 = tpu.matmul %82, %28, %cst_51 {dimension_numbers = #tpu.dot_dimension_numbers<[1], [0], [0], [1], [0, 0, 1, 1], [], []>} : vector<8x128xbf16>, vector<128x128xbf16>, vector<8x128xf32> -> vector<8x128xf32>
      %cst_52 = arith.constant 1.000000e+00 : f32
      %84 = vector.broadcast %cst_52 : f32 to vector<8x128xf32>
      %85 = arith.subf %84, %83 : vector<8x128xf32>
      %86 = arith.mulf %66, %85 : vector<8x128xf32>
      %87 = vector.extract_strided_slice %49 {offsets = [0, 256], sizes = [8, 128], strides = [1, 1]} : vector<8x768xf32> to vector<8x128xf32>
      %cst_53 = arith.constant 5.000000e-01 : f32
      %88 = vector.broadcast %cst_53 : f32 to vector<8x128xf32>
      %89 = arith.mulf %88, %87 : vector<8x128xf32>
      %90 = math.tanh %89 : vector<8x128xf32>
      %cst_54 = arith.constant 1.000000e+00 : f32
      %91 = vector.broadcast %cst_54 : f32 to vector<8x128xf32>
      %92 = arith.addf %90, %91 : vector<8x128xf32>
      %cst_55 = arith.constant 5.000000e-01 : f32
      %93 = vector.broadcast %cst_55 : f32 to vector<8x128xf32>
      %94 = arith.mulf %93, %92 : vector<8x128xf32>
      %95 = arith.mulf %94, %86 : vector<8x128xf32>
      %96 = arith.subf %66, %86 : vector<8x128xf32>
      %97 = arith.addf %95, %96 : vector<8x128xf32>
      %98 = arith.mulf %97, %arg19 : vector<8x128xf32>
      %99 = vector.extract_strided_slice %49 {offsets = [0, 384], sizes = [8, 128], strides = [1, 1]} : vector<8x768xf32> to vector<8x128xf32>
      %cst_56 = arith.constant 5.000000e-01 : f32
      %100 = vector.broadcast %cst_56 : f32 to vector<8x128xf32>
      %101 = arith.mulf %100, %99 : vector<8x128xf32>
      %102 = math.tanh %101 : vector<8x128xf32>
      %cst_57 = arith.constant 1.000000e+00 : f32
      %103 = vector.broadcast %cst_57 : f32 to vector<8x128xf32>
      %104 = arith.addf %102, %103 : vector<8x128xf32>
      %cst_58 = arith.constant 5.000000e-01 : f32
      %105 = vector.broadcast %cst_58 : f32 to vector<8x128xf32>
      %106 = arith.mulf %105, %104 : vector<8x128xf32>
      %107 = arith.mulf %106, %86 : vector<8x128xf32>
      %108 = arith.subf %85, %86 : vector<8x128xf32>
      %109 = arith.addf %107, %108 : vector<8x128xf32>
      %110 = vector.extract_strided_slice %49 {offsets = [0, 640], sizes = [8, 128], strides = [1, 1]} : vector<8x768xf32> to vector<8x128xf32>
      %111 = math.tanh %110 : vector<8x128xf32>
      %112 = arith.mulf %109, %111 : vector<8x128xf32>
      %113 = arith.addf %98, %112 : vector<8x128xf32>
      %114 = vector.extract_strided_slice %49 {offsets = [0, 512], sizes = [8, 128], strides = [1, 1]} : vector<8x768xf32> to vector<8x128xf32>
      %cst_59 = arith.constant 5.000000e-01 : f32
      %115 = vector.broadcast %cst_59 : f32 to vector<8x128xf32>
      %116 = arith.mulf %115, %114 : vector<8x128xf32>
      %117 = math.tanh %116 : vector<8x128xf32>
      %cst_60 = arith.constant 1.000000e+00 : f32
      %118 = vector.broadcast %cst_60 : f32 to vector<8x128xf32>
      %119 = arith.addf %117, %118 : vector<8x128xf32>
      %cst_61 = arith.constant 5.000000e-01 : f32
      %120 = vector.broadcast %cst_61 : f32 to vector<8x128xf32>
      %121 = arith.mulf %120, %119 : vector<8x128xf32>
      %122 = math.tanh %113 : vector<8x128xf32>
      %123 = arith.mulf %121, %122 : vector<8x128xf32>
      %124 = arith.truncf %123 : vector<8x128xf32> to vector<8x128xbf16>
      %125 = arith.index_cast %arg17 : i32 to index
      %c0_62 = arith.constant 0 : index
      %c0_63 = arith.constant 0 : index
      %126 = vector.load %arg9[%125, %c0_62, %c0_63] : memref<8x8x128xbf16, #tpu.memory_space<vmem>>, vector<1x8x128xbf16>
      %127 = vector.shape_cast %126 : vector<1x8x128xbf16> to vector<8x128xbf16>
      %128 = vector.shape_cast %124 : vector<8x128xbf16> to vector<1x8x128xbf16>
      tpu.vector_store %arg9[%125, %c0_62, %c0_63], %128 {strides = array<i32>} : memref<8x8x128xbf16, #tpu.memory_space<vmem>>, vector<1x8x128xbf16>,
      %129 = arith.index_cast %arg17 : i32 to index
      %c0_64 = arith.constant 0 : index
      %c0_65 = arith.constant 0 : index
      %130 = vector.load %arg16[%129, %c0_64, %c0_65] : memref<8x8x768xbf16, #tpu.memory_space<vmem>>, vector<1x8x768xbf16>
      %131 = vector.shape_cast %130 : vector<1x8x768xbf16> to vector<8x768xbf16>
      %132 = arith.extf %131 : vector<8x768xbf16> to vector<8x768xf32>
      %133 = arith.truncf %arg20 : vector<8x128xf32> to vector<8x128xbf16>
      %c0_66 = arith.constant 0 : index
      %c0_67 = arith.constant 0 : index
      %134 = vector.load %arg6[%c0_66, %c0_67] : memref<128x768xbf16, #tpu.memory_space<vmem>>, vector<128x768xbf16>
      %cst_68 = arith.constant dense<0.000000e+00> : vector<8x768xf32>
      %135 = tpu.matmul %133, %134, %cst_68 {dimension_numbers = #tpu.dot_dimension_numbers<[1], [0], [0], [1], [0, 0, 1, 1], [], []>} : vector<8x128xbf16>, vector<128x768xbf16>, vector<8x768xf32> -> vector<8x768xf32>
      %136 = arith.addf %132, %135 : vector<8x768xf32>
      %137 = vector.extract_strided_slice %136 {offsets = [0, 0], sizes = [8, 128], strides = [1, 1]} : vector<8x768xf32> to vector<8x128xf32>
      %cst_69 = arith.constant -1.000000e+30 : f32
      %138 = vector.shape_cast %31 : vector<1x128xi1> to vector<1x128xi1>
      %139 = vector.broadcast %138 : vector<1x128xi1> to vector<8x128xi1>
      %140 = vector.broadcast %cst_69 : f32 to vector<8x128xf32>
      %141 = arith.select %139, %137, %140 : vector<8x128xi1>, vector<8x128xf32>
      %cst_70 = arith.constant dense<0xFF800000> : vector<8xf32>
      %142 = vector.multi_reduction <maximumf>, %141, %cst_70 [1] : vector<8x128xf32> to vector<8xf32>
      %143 = vector.shape_cast %142 : vector<8xf32> to vector<8x1xf32>
      %144 = vector.broadcast %143 : vector<8x1xf32> to vector<8x128xf32>
      %145 = arith.subf %141, %144 : vector<8x128xf32>
      %146 = math.exp %145 : vector<8x128xf32>
      %cst_71 = arith.constant dense<0.000000e+00> : vector<8xf32>
      %147 = vector.multi_reduction <add>, %146, %cst_71 [1] : vector<8x128xf32> to vector<8xf32>
      %148 = vector.shape_cast %147 : vector<8xf32> to vector<8x1xf32>
      %149 = tpu.reciprocal %148 {approx = true} : vector<8x1xf32> -> vector<8x1xf32>
      %150 = vector.broadcast %149 : vector<8x1xf32> to vector<8x128xf32>
      %151 = arith.mulf %146, %150 : vector<8x128xf32>
      %152 = arith.truncf %151 : vector<8x128xf32> to vector<8x128xbf16>
      %cst_72 = arith.constant dense<0.000000e+00> : vector<8x128xf32>
      %153 = tpu.matmul %152, %28, %cst_72 {dimension_numbers = #tpu.dot_dimension_numbers<[1], [0], [0], [1], [0, 0, 1, 1], [], []>} : vector<8x128xbf16>, vector<128x128xbf16>, vector<8x128xf32> -> vector<8x128xf32>
      %154 = vector.extract_strided_slice %136 {offsets = [0, 128], sizes = [8, 128], strides = [1, 1]} : vector<8x768xf32> to vector<8x128xf32>
      %cst_73 = arith.constant -1.000000e+30 : f32
      %155 = vector.shape_cast %31 : vector<1x128xi1> to vector<1x128xi1>
      %156 = vector.broadcast %155 : vector<1x128xi1> to vector<8x128xi1>
      %157 = vector.broadcast %cst_73 : f32 to vector<8x128xf32>
      %158 = arith.select %156, %154, %157 : vector<8x128xi1>, vector<8x128xf32>
      %cst_74 = arith.constant dense<0xFF800000> : vector<8xf32>
      %159 = vector.multi_reduction <maximumf>, %158, %cst_74 [1] : vector<8x128xf32> to vector<8xf32>
      %160 = vector.shape_cast %159 : vector<8xf32> to vector<8x1xf32>
      %161 = vector.broadcast %160 : vector<8x1xf32> to vector<8x128xf32>
      %162 = arith.subf %158, %161 : vector<8x128xf32>
      %163 = math.exp %162 : vector<8x128xf32>
      %cst_75 = arith.constant dense<0.000000e+00> : vector<8xf32>
      %164 = vector.multi_reduction <add>, %163, %cst_75 [1] : vector<8x128xf32> to vector<8xf32>
      %165 = vector.shape_cast %164 : vector<8xf32> to vector<8x1xf32>
      %166 = tpu.reciprocal %165 {approx = true} : vector<8x1xf32> -> vector<8x1xf32>
      %167 = vector.broadcast %166 : vector<8x1xf32> to vector<8x128xf32>
      %168 = arith.mulf %163, %167 : vector<8x128xf32>
      %169 = arith.truncf %168 : vector<8x128xf32> to vector<8x128xbf16>
      %cst_76 = arith.constant dense<0.000000e+00> : vector<8x128xf32>
      %170 = tpu.matmul %169, %28, %cst_76 {dimension_numbers = #tpu.dot_dimension_numbers<[1], [0], [0], [1], [0, 0, 1, 1], [], []>} : vector<8x128xbf16>, vector<128x128xbf16>, vector<8x128xf32> -> vector<8x128xf32>
      %cst_77 = arith.constant 1.000000e+00 : f32
      %171 = vector.broadcast %cst_77 : f32 to vector<8x128xf32>
      %172 = arith.subf %171, %170 : vector<8x128xf32>
      %173 = arith.mulf %153, %172 : vector<8x128xf32>
      %174 = vector.extract_strided_slice %136 {offsets = [0, 256], sizes = [8, 128], strides = [1, 1]} : vector<8x768xf32> to vector<8x128xf32>
      %cst_78 = arith.constant 5.000000e-01 : f32
      %175 = vector.broadcast %cst_78 : f32 to vector<8x128xf32>
      %176 = arith.mulf %175, %174 : vector<8x128xf32>
      %177 = math.tanh %176 : vector<8x128xf32>
      %cst_79 = arith.constant 1.000000e+00 : f32
      %178 = vector.broadcast %cst_79 : f32 to vector<8x128xf32>
      %179 = arith.addf %177, %178 : vector<8x128xf32>
      %cst_80 = arith.constant 5.000000e-01 : f32
      %180 = vector.broadcast %cst_80 : f32 to vector<8x128xf32>
      %181 = arith.mulf %180, %179 : vector<8x128xf32>
      %182 = arith.mulf %181, %173 : vector<8x128xf32>
      %183 = arith.subf %153, %173 : vector<8x128xf32>
      %184 = arith.addf %182, %183 : vector<8x128xf32>
      %185 = arith.mulf %184, %arg21 : vector<8x128xf32>
      %186 = vector.extract_strided_slice %136 {offsets = [0, 384], sizes = [8, 128], strides = [1, 1]} : vector<8x768xf32> to vector<8x128xf32>
      %cst_81 = arith.constant 5.000000e-01 : f32
      %187 = vector.broadcast %cst_81 : f32 to vector<8x128xf32>
      %188 = arith.mulf %187, %186 : vector<8x128xf32>
      %189 = math.tanh %188 : vector<8x128xf32>
      %cst_82 = arith.constant 1.000000e+00 : f32
      %190 = vector.broadcast %cst_82 : f32 to vector<8x128xf32>
      %191 = arith.addf %189, %190 : vector<8x128xf32>
      %cst_83 = arith.constant 5.000000e-01 : f32
      %192 = vector.broadcast %cst_83 : f32 to vector<8x128xf32>
      %193 = arith.mulf %192, %191 : vector<8x128xf32>
      %194 = arith.mulf %193, %173 : vector<8x128xf32>
      %195 = arith.subf %172, %173 : vector<8x128xf32>
      %196 = arith.addf %194, %195 : vector<8x128xf32>
      %197 = vector.extract_strided_slice %136 {offsets = [0, 640], sizes = [8, 128], strides = [1, 1]} : vector<8x768xf32> to vector<8x128xf32>
      %198 = math.tanh %197 : vector<8x128xf32>
      %199 = arith.mulf %196, %198 : vector<8x128xf32>
      %200 = arith.addf %185, %199 : vector<8x128xf32>
      %201 = vector.extract_strided_slice %136 {offsets = [0, 512], sizes = [8, 128], strides = [1, 1]} : vector<8x768xf32> to vector<8x128xf32>
      %cst_84 = arith.constant 5.000000e-01 : f32
      %202 = vector.broadcast %cst_84 : f32 to vector<8x128xf32>
      %203 = arith.mulf %202, %201 : vector<8x128xf32>
      %204 = math.tanh %203 : vector<8x128xf32>
      %cst_85 = arith.constant 1.000000e+00 : f32
      %205 = vector.broadcast %cst_85 : f32 to vector<8x128xf32>
      %206 = arith.addf %204, %205 : vector<8x128xf32>
      %cst_86 = arith.constant 5.000000e-01 : f32
      %207 = vector.broadcast %cst_86 : f32 to vector<8x128xf32>
      %208 = arith.mulf %207, %206 : vector<8x128xf32>
      %209 = math.tanh %200 : vector<8x128xf32>
      %210 = arith.mulf %208, %209 : vector<8x128xf32>
      %211 = arith.truncf %210 : vector<8x128xf32> to vector<8x128xbf16>
      %212 = arith.index_cast %arg17 : i32 to index
      %c0_87 = arith.constant 0 : index
      %c0_88 = arith.constant 0 : index
      %213 = vector.load %arg10[%212, %c0_87, %c0_88] : memref<8x8x128xbf16, #tpu.memory_space<vmem>>, vector<1x8x128xbf16>
      %214 = vector.shape_cast %213 : vector<1x8x128xbf16> to vector<8x128xbf16>
      %215 = vector.shape_cast %211 : vector<8x128xbf16> to vector<1x8x128xbf16>
      tpu.vector_store %arg10[%212, %c0_87, %c0_88], %215 {strides = array<i32>} : memref<8x8x128xbf16, #tpu.memory_space<vmem>>, vector<1x8x128xbf16>,
      scf.yield %123, %113, %210, %200 : vector<8x128xf32>, vector<8x128xf32>, vector<8x128xf32>, vector<8x128xf32>
    }
    %c8_i32_30 = arith.constant 8 : i32
    %c0_31 = arith.constant 0 : index
    %c0_32 = arith.constant 0 : index
    %38 = vector.load %arg11[%c0_31, %c0_32] : memref<8x128xf32, #tpu.memory_space<vmem>>, vector<8x128xf32>
    tpu.vector_store %arg11[%c0_31, %c0_32], %37#0 {strides = array<i32>} : memref<8x128xf32, #tpu.memory_space<vmem>>, vector<8x128xf32>,
    %c0_33 = arith.constant 0 : index
    %c0_34 = arith.constant 0 : index
    %39 = vector.load %arg12[%c0_33, %c0_34] : memref<8x128xf32, #tpu.memory_space<vmem>>, vector<8x128xf32>
    tpu.vector_store %arg12[%c0_33, %c0_34], %37#1 {strides = array<i32>} : memref<8x128xf32, #tpu.memory_space<vmem>>, vector<8x128xf32>,
    %c0_35 = arith.constant 0 : index
    %c0_36 = arith.constant 0 : index
    %40 = vector.load %arg13[%c0_35, %c0_36] : memref<8x128xf32, #tpu.memory_space<vmem>>, vector<8x128xf32>
    tpu.vector_store %arg13[%c0_35, %c0_36], %37#2 {strides = array<i32>} : memref<8x128xf32, #tpu.memory_space<vmem>>, vector<8x128xf32>,
    %c0_37 = arith.constant 0 : index
    %c0_38 = arith.constant 0 : index
    %41 = vector.load %arg14[%c0_37, %c0_38] : memref<8x128xf32, #tpu.memory_space<vmem>>, vector<8x128xf32>
    tpu.vector_store %arg14[%c0_37, %c0_38], %37#3 {strides = array<i32>} : memref<8x128xf32, #tpu.memory_space<vmem>>, vector<8x128xf32>,
    return
  }
  func.func @transform_0(%arg0: i32) -> (i32, i32, i32) {
    %c0_i32 = arith.constant 0 : i32
    %c0_i32_0 = arith.constant 0 : i32
    %c0_i32_1 = arith.constant 0 : i32
    return %arg0, %c0_i32, %c0_i32_0 : i32, i32, i32
  }
  func.func @transform_1(%arg0: i32) -> (i32, i32, i32) {
    %c0_i32 = arith.constant 0 : i32
    %c0_i32_0 = arith.constant 0 : i32
    %c0_i32_1 = arith.constant 0 : i32
    return %arg0, %c0_i32, %c0_i32_0 : i32, i32, i32
  }
  func.func @transform_2(%arg0: i32) -> (i32, i32) {
    %c0_i32 = arith.constant 0 : i32
    %c0_i32_0 = arith.constant 0 : i32
    %c0_i32_1 = arith.constant 0 : i32
    return %c0_i32, %c0_i32_0 : i32, i32
  }
  func.func @transform_3(%arg0: i32) -> (i32, i32) {
    %c0_i32 = arith.constant 0 : i32
    %c0_i32_0 = arith.constant 0 : i32
    %c0_i32_1 = arith.constant 0 : i32
    return %c0_i32, %c0_i32_0 : i32, i32
  }
  func.func @transform_4(%arg0: i32) -> (i32, i32) {
    %c0_i32 = arith.constant 0 : i32
    %c0_i32_0 = arith.constant 0 : i32
    %c0_i32_1 = arith.constant 0 : i32
    return %c0_i32, %c0_i32_0 : i32, i32
  }
  func.func @transform_5(%arg0: i32) -> (i32, i32) {
    %c0_i32 = arith.constant 0 : i32
    %c0_i32_0 = arith.constant 0 : i32
    %c0_i32_1 = arith.constant 0 : i32
    return %c0_i32, %c0_i32_0 : i32, i32
  }
  func.func @transform_6(%arg0: i32) -> (i32, i32) {
    %c0_i32 = arith.constant 0 : i32
    %c0_i32_0 = arith.constant 0 : i32
    %c0_i32_1 = arith.constant 0 : i32
    return %c0_i32, %c0_i32_0 : i32, i32
  }
  func.func @transform_7(%arg0: i32) -> (i32, i32) {
    %c0_i32 = arith.constant 0 : i32
    %c0_i32_0 = arith.constant 0 : i32
    %c0_i32_1 = arith.constant 0 : i32
    return %c0_i32, %c0_i32_0 : i32, i32
  }
  func.func @transform_8(%arg0: i32) -> (i32, i32, i32) {
    %c0_i32 = arith.constant 0 : i32
    %c0_i32_0 = arith.constant 0 : i32
    %c0_i32_1 = arith.constant 0 : i32
    return %arg0, %c0_i32, %c0_i32_0 : i32, i32, i32
  }
  func.func @transform_9(%arg0: i32) -> (i32, i32, i32) {
    %c0_i32 = arith.constant 0 : i32
    %c0_i32_0 = arith.constant 0 : i32
    %c0_i32_1 = arith.constant 0 : i32
    return %arg0, %c0_i32, %c0_i32_0 : i32, i32, i32
  }
}

</mosaic_0001>

<llo_original>
// kernel: tpu_custom_call.1
$region0: #{tpu_custom_call.1}
  #allocation0 [shape = 'u32[]', space=smem, size = 0x4, offset = 0x4, fixed_abs, tag = 'smem constant byte address 0x4 - core index']
  #allocation1 [shape = 'u32[144,128]{1,0:T(1,128)}', space=vmem, size = 0x12000, scoped, tag = 'internal scratch']
  #allocation2 [shape = 'f32[8,128]{1,0:T(8,128)}', space=vmem, size = 0x1000, scoped, tag = 'scratch operand']
  #allocation3 [shape = 'f32[8,128]{1,0:T(8,128)}', space=vmem, size = 0x1000, scoped, tag = 'scratch operand']
  #allocation4 [shape = 'f32[8,128]{1,0:T(8,128)}', space=vmem, size = 0x1000, scoped, tag = 'scratch operand']
  #allocation5 [shape = 'f32[8,128]{1,0:T(8,128)}', space=vmem, size = 0x1000, scoped, tag = 'scratch operand']
  #allocation6 [shape = 'bf16[8,8,768]{2,1,0:T(8,128)(2,1)}', space=vmem, size = 0x18000, scoped, tag = 'scratch operand']
  #allocation7 [shape = 'bf16[8,8,768]{2,1,0:T(8,128)(2,1)}', space=vmem, size = 0x18000, scoped, tag = 'scratch operand']
  %s0 = inlined_call_operand.hbm [shape: bf16[8,8,128], index: 0, kind: input, shape index: {}]
  %s1 = inlined_call_operand.hbm [shape: bf16[8,8,128], index: 1, kind: input, shape index: {}]
  %s2 = inlined_call_operand.hbm [shape: bf16[128,768], index: 2, kind: input, shape index: {}]
  %s3 = inlined_call_operand.hbm [shape: bf16[128,768], index: 3, kind: input, shape index: {}]
  %s4 = inlined_call_operand.hbm [shape: bf16[128,768], index: 4, kind: input, shape index: {}]
  %s5 = inlined_call_operand.hbm [shape: bf16[128,768], index: 5, kind: input, shape index: {}]
  %s6 = inlined_call_operand.vmem [shape: f32[1,768], index: 6, kind: input, shape index: {}]
  %s7 = inlined_call_operand.vmem [shape: f32[1,768], index: 7, kind: input, shape index: {}]
  %s8 = inlined_call_operand.hbm [shape: bf16[8,8,128], index: 8, kind: output, shape index: {0}]
  %s9 = inlined_call_operand.hbm [shape: bf16[8,8,128], index: 9, kind: output, shape index: {1}]
  %10 = xla_tuple %s8, %s9
  %s11 = sld [smem:[#allocation0]]
  $region85: #{tpu_custom_call.1} parent=0
    _
  %s13 = ssub.s32 1, %s11
  %s14 = scalar_select 0, %s13, %s11
  $region1: #{tpu_custom_call.1} parent=0
    #allocation8 [shape = 'u8[16384]{0}', space=vmem, size = 0x4000, scoped, tag = 'input window, operand 0, single buffered']
    #allocation9 [shape = 's32[1]{0}', space=sflag, size = 0x4, scoped, tag = 'scoped memory for tpu_custom_call.1']
    #allocation10 [shape = 's32[1]{0}', space=sflag, size = 0x4, scoped, tag = 'scoped memory for tpu_custom_call.1']
    #allocation11 [shape = 'u8[16384]{0}', space=vmem, size = 0x4000, scoped, tag = 'input window, operand 1, single buffered']
    #allocation12 [shape = 's32[1]{0}', space=sflag, size = 0x4, scoped, tag = 'scoped memory for tpu_custom_call.1']
    #allocation13 [shape = 'u8[196608]{0}', space=vmem, size = 0x30000, scoped, tag = 'input window, operand 2, single buffered']
    #allocation14 [shape = 'u8[196608]{0}', space=vmem, size = 0x30000, scoped, tag = 'input window, operand 3, single buffered']
    #allocation15 [shape = 's32[1]{0}', space=sflag, size = 0x4, scoped, tag = 'scoped memory for tpu_custom_call.1']
    #allocation16 [shape = 'u8[196608]{0}', space=vmem, size = 0x30000, scoped, tag = 'input window, operand 4, single buffered']
    #allocation17 [shape = 'u8[196608]{0}', space=vmem, size = 0x30000, scoped, tag = 'input window, operand 5, single buffered']
    #allocation18 [shape = 's32[1]{0}', space=sflag, size = 0x4, scoped, tag = 'scoped memory for tpu_custom_call.1']
    #allocation19 [shape = 'u8[16384]{0}', space=vmem, size = 0x4000, scoped, tag = 'output window, operand 0, single buffered']
    #allocation20 [shape = 'u8[16384]{0}', space=vmem, size = 0x4000, scoped, tag = 'output window, operand 1, single buffered']
    #allocation21 [shape = 's32[1]{0}', space=sflag, size = 0x4, scoped, tag = 'scoped memory for tpu_custom_call.1']
    %15 = vsyncpa [#allocation9], 0
    %16 = vsyncpa [#allocation12], 0
    %17 = vsyncpa [#allocation15], 0
    %18 = vsyncpa [#allocation18], 0
    %19 = vsyncpa [#allocation10], 0
    %20 = vsyncpa [#allocation21], 0
    // Predicated region
    $region2: #{tpu_custom_call.1} parent=1 // pred_check
      _
    $region3: #{tpu_custom_call.1} parent=1 // pred_check_branch
      %22 = sbr.rel (0) target = $region5
    $region4: #{tpu_custom_call.1} parent=1 // pred_region
      %s24 = ssub.s32 512, 512
      %25 = vsyncadd [#allocation9], %s24
      %s26 = sshll.u32 [#allocation8], 4
      %s27 = int_to_ptr.vmem [resolvable:$true] %s26
      %32 = dma.hbm_to_vmem [thread:$0]  %s0, 512, %s27, [#allocation9], 64, 64, 4
    $region5: #{tpu_custom_call.1} parent=1 // pred_fallthru
      _
    // Predicated region
    $region6: #{tpu_custom_call.1} parent=1 // pred_check
      _
    $region7: #{tpu_custom_call.1} parent=1 // pred_check_branch
      %34 = sbr.rel (0) target = $region9
    $region8: #{tpu_custom_call.1} parent=1 // pred_region
      %s36 = ssub.s32 512, 512
      %37 = vsyncadd [#allocation12], %s36
      %s38 = sshll.u32 [#allocation11], 4
      %s39 = int_to_ptr.vmem [resolvable:$true] %s38
      %44 = dma.hbm_to_vmem [thread:$0]  %s1, 512, %s39, [#allocation12], 64, 64, 4
    $region9: #{tpu_custom_call.1} parent=1 // pred_fallthru
      _
    // Predicated region
    $region10: #{tpu_custom_call.1} parent=1 // pred_check
      _
    $region11: #{tpu_custom_call.1} parent=1 // pred_check_branch
      %46 = sbr.rel (0) target = $region13
    $region12: #{tpu_custom_call.1} parent=1 // pred_region
      %s48 = ssub.s32 6144, 6144
      %49 = vsyncadd [#allocation12], %s48
      %s50 = sshll.u32 [#allocation13], 4
      %s51 = int_to_ptr.vmem [resolvable:$true] %s50
      %56 = dma.hbm_to_vmem [thread:$0]  %s2, 6144, %s51, [#allocation12], 384, 384, 24
    $region13: #{tpu_custom_call.1} parent=1 // pred_fallthru
      _
    // Predicated region
    $region14: #{tpu_custom_call.1} parent=1 // pred_check
      _
    $region15: #{tpu_custom_call.1} parent=1 // pred_check_branch
      %58 = sbr.rel (0) target = $region17
    $region16: #{tpu_custom_call.1} parent=1 // pred_region
      %s60 = ssub.s32 6144, 6144
      %61 = vsyncadd [#allocation15], %s60
      %s62 = sshll.u32 [#allocation14], 4
      %s63 = int_to_ptr.vmem [resolvable:$true] %s62
      %68 = dma.hbm_to_vmem [thread:$0]  %s3, 6144, %s63, [#allocation15], 384, 384, 24
    $region17: #{tpu_custom_call.1} parent=1 // pred_fallthru
      _
    // Predicated region
    $region18: #{tpu_custom_call.1} parent=1 // pred_check
      _
    $region19: #{tpu_custom_call.1} parent=1 // pred_check_branch
      %70 = sbr.rel (0) target = $region21
    $region20: #{tpu_custom_call.1} parent=1 // pred_region
      %s72 = ssub.s32 6144, 6144
      %73 = vsyncadd [#allocation15], %s72
      %s74 = sshll.u32 [#allocation16], 4
      %s75 = int_to_ptr.vmem [resolvable:$true] %s74
      %80 = dma.hbm_to_vmem [thread:$0]  %s4, 6144, %s75, [#allocation15], 384, 384, 24
    $region21: #{tpu_custom_call.1} parent=1 // pred_fallthru
      _
    // Predicated region
    $region22: #{tpu_custom_call.1} parent=1 // pred_check
      _
    $region23: #{tpu_custom_call.1} parent=1 // pred_check_branch
      %82 = sbr.rel (0) target = $region25
    $region24: #{tpu_custom_call.1} parent=1 // pred_region
      %s84 = ssub.s32 6144, 6144
      %85 = vsyncadd [#allocation18], %s84
      %s86 = sshll.u32 [#allocation17], 4
      %s87 = int_to_ptr.vmem [resolvable:$true] %s86
      %92 = dma.hbm_to_vmem [thread:$0]  %s5, 6144, %s87, [#allocation18], 384, 384, 24
    $region25: #{tpu_custom_call.1} parent=1 // pred_fallthru
      _
    // Predicated region
    $region26: #{tpu_custom_call.1} parent=1 // pred_check
      _
    $region27: #{tpu_custom_call.1} parent=1 // pred_check_branch
      %94 = sbr.rel (0) target = $region29
    $region28: #{tpu_custom_call.1} parent=1 // pred_region
      _
    $region29: #{tpu_custom_call.1} parent=1 // pred_fallthru
      _
    // Predicated region
    $region30: #{tpu_custom_call.1} parent=1 // pred_check
      _
    $region31: #{tpu_custom_call.1} parent=1 // pred_check_branch
      %96 = sbr.rel (0) target = $region33
    $region32: #{tpu_custom_call.1} parent=1 // pred_region
      _
    $region33: #{tpu_custom_call.1} parent=1 // pred_fallthru
      _
    // Predicated region
    $region34: #{tpu_custom_call.1} parent=1 // pred_check
      _
    $region35: #{tpu_custom_call.1} parent=1 // pred_check_branch
      %98 = sbr.rel (0) target = $region37
    $region36: #{tpu_custom_call.1} parent=1 // pred_region
      %99 = dma.done [#allocation9], 512
    $region37: #{tpu_custom_call.1} parent=1 // pred_fallthru
      _
    // Predicated region
    $region38: #{tpu_custom_call.1} parent=1 // pred_check
      _
    $region39: #{tpu_custom_call.1} parent=1 // pred_check_branch
      %101 = sbr.rel (0) target = $region41
    $region40: #{tpu_custom_call.1} parent=1 // pred_region
      %102 = dma.done [#allocation12], 512
    $region41: #{tpu_custom_call.1} parent=1 // pred_fallthru
      _
    // Predicated region
    $region42: #{tpu_custom_call.1} parent=1 // pred_check
      _
    $region43: #{tpu_custom_call.1} parent=1 // pred_check_branch
      %104 = sbr.rel (0) target = $region45
    $region44: #{tpu_custom_call.1} parent=1 // pred_region
      %105 = dma.done [#allocation12], 6144
    $region45: #{tpu_custom_call.1} parent=1 // pred_fallthru
      _
    // Predicated region
    $region46: #{tpu_custom_call.1} parent=1 // pred_check
      _
    $region47: #{tpu_custom_call.1} parent=1 // pred_check_branch
      %107 = sbr.rel (0) target = $region49
    $region48: #{tpu_custom_call.1} parent=1 // pred_region
      %108 = dma.done [#allocation15], 6144
    $region49: #{tpu_custom_call.1} parent=1 // pred_fallthru
      _
    // Predicated region
    $region50: #{tpu_custom_call.1} parent=1 // pred_check
      _
    $region51: #{tpu_custom_call.1} parent=1 // pred_check_branch
      %110 = sbr.rel (0) target = $region53
    $region52: #{tpu_custom_call.1} parent=1 // pred_region
      %111 = dma.done [#allocation15], 6144
    $region53: #{tpu_custom_call.1} parent=1 // pred_fallthru
      _
    // Predicated region
    $region54: #{tpu_custom_call.1} parent=1 // pred_check
      _
    $region55: #{tpu_custom_call.1} parent=1 // pred_check_branch
      %113 = sbr.rel (0) target = $region57
    $region56: #{tpu_custom_call.1} parent=1 // pred_region
      %114 = dma.done [#allocation18], 6144
    $region57: #{tpu_custom_call.1} parent=1 // pred_fallthru
      _
    %p116 = scmp.eq.s32.totalorder 0, 0
    // Predicated region
    $region58: #{tpu_custom_call.1} parent=1 // pred_check
      %p117 = pneg %p116
    $region59: #{tpu_custom_call.1} parent=1 // pred_check_branch
      %119 = sbr.rel (%p117) target = $region61
    $region60: #{tpu_custom_call.1} parent=1 // pred_region
      %120 = vst [vmem:[#allocation2] sm:$0xff] 0.0
      %121 = vst [vmem:[#allocation3] sm:$0xff] 0.0
      %122 = vst [vmem:[#allocation4] sm:$0xff] 0.0
      %123 = vst [vmem:[#allocation5] sm:$0xff] 0.0
    $region61: #{tpu_custom_call.1} parent=1 // pred_fallthru
      _
    %v124 = vld [vmem:[#allocation8] sm:$0xf]
    %v125 = vld [vmem:[#allocation8 + $0x4] sm:$0xf]
    %v126 = vld [vmem:[#allocation8 + $0x8] sm:$0xf]
    %v127 = vld [vmem:[#allocation8 + $0xc] sm:$0xf]
    %v128 = vld [vmem:[#allocation8 + $0x10] sm:$0xf]
    %v129 = vld [vmem:[#allocation8 + $0x14] sm:$0xf]
    %v130 = vld [vmem:[#allocation8 + $0x18] sm:$0xf]
    %v131 = vld [vmem:[#allocation8 + $0x1c] sm:$0xf]
    %v132 = vld [vmem:[#allocation11] sm:$0xf]
    %v133 = vld [vmem:[#allocation11 + $0x4] sm:$0xf]
    %v134 = vld [vmem:[#allocation11 + $0x8] sm:$0xf]
    %v135 = vld [vmem:[#allocation11 + $0xc] sm:$0xf]
    %v136 = vld [vmem:[#allocation11 + $0x10] sm:$0xf]
    %v137 = vld [vmem:[#allocation11 + $0x14] sm:$0xf]
    %v138 = vld [vmem:[#allocation11 + $0x18] sm:$0xf]
    %v139 = vld [vmem:[#allocation11 + $0x1c] sm:$0xf]
    %v140 = vld [vmem:[#allocation13] sm:$0xff]
    %v141 = vld [vmem:[#allocation13 + $0x8] sm:$0xff]
    %v142 = vld [vmem:[#allocation13 + $0x10] sm:$0xff]
    %v143 = vld [vmem:[#allocation13 + $0x18] sm:$0xff]
    %v144 = vld [vmem:[#allocation13 + $0x20] sm:$0xff]
    %v145 = vld [vmem:[#allocation13 + $0x28] sm:$0xff]
    %v146 = vld [vmem:[#allocation13 + $0x30] sm:$0xff]
    %v147 = vld [vmem:[#allocation13 + $0x38] sm:$0xff]
    %v148 = vld [vmem:[#allocation13 + $0x40] sm:$0xff]
    %v149 = vld [vmem:[#allocation13 + $0x48] sm:$0xff]
    %v150 = vld [vmem:[#allocation13 + $0x50] sm:$0xff]
    %v151 = vld [vmem:[#allocation13 + $0x58] sm:$0xff]
    %v152 = vld [vmem:[#allocation13 + $0x60] sm:$0xff]
    %v153 = vld [vmem:[#allocation13 + $0x68] sm:$0xff]
    %v154 = vld [vmem:[#allocation13 + $0x70] sm:$0xff]
    %v155 = vld [vmem:[#allocation13 + $0x78] sm:$0xff]
    %v156 = vld [vmem:[#allocation13 + $0x80] sm:$0xff]
    %v157 = vld [vmem:[#allocation13 + $0x88] sm:$0xff]
    %v158 = vld [vmem:[#allocation13 + $0x90] sm:$0xff]
    %v159 = vld [vmem:[#allocation13 + $0x98] sm:$0xff]
    %v160 = vld [vmem:[#allocation13 + $0xa0] sm:$0xff]
    %v161 = vld [vmem:[#allocation13 + $0xa8] sm:$0xff]
    %v162 = vld [vmem:[#allocation13 + $0xb0] sm:$0xff]
    %v163 = vld [vmem:[#allocation13 + $0xb8] sm:$0xff]
    %v164 = vld [vmem:[#allocation13 + $0xc0] sm:$0xff]
    %v165 = vld [vmem:[#allocation13 + $0xc8] sm:$0xff]
    %v166 = vld [vmem:[#allocation13 + $0xd0] sm:$0xff]
    %v167 = vld [vmem:[#allocation13 + $0xd8] sm:$0xff]
    %v168 = vld [vmem:[#allocation13 + $0xe0] sm:$0xff]
    %v169 = vld [vmem:[#allocation13 + $0xe8] sm:$0xff]
    %v170 = vld [vmem:[#allocation13 + $0xf0] sm:$0xff]
    %v171 = vld [vmem:[#allocation13 + $0xf8] sm:$0xff]
    %v172 = vld [vmem:[#allocation13 + $0x100] sm:$0xff]
    %v173 = vld [vmem:[#allocation13 + $0x108] sm:$0xff]
    %v174 = vld [vmem:[#allocation13 + $0x110] sm:$0xff]
    %v175 = vld [vmem:[#allocation13 + $0x118] sm:$0xff]
    %v176 = vld [vmem:[#allocation13 + $0x120] sm:$0xff]
    %v177 = vld [vmem:[#allocation13 + $0x128] sm:$0xff]
    %v178 = vld [vmem:[#allocation13 + $0x130] sm:$0xff]
    %v179 = vld [vmem:[#allocation13 + $0x138] sm:$0xff]
    %v180 = vld [vmem:[#allocation13 + $0x140] sm:$0xff]
    %v181 = vld [vmem:[#allocation13 + $0x148] sm:$0xff]
    %v182 = vld [vmem:[#allocation13 + $0x150] sm:$0xff]
    %v183 = vld [vmem:[#allocation13 + $0x158] sm:$0xff]
    %v184 = vld [vmem:[#allocation13 + $0x160] sm:$0xff]
    %v185 = vld [vmem:[#allocation13 + $0x168] sm:$0xff]
    %v186 = vld [vmem:[#allocation13 + $0x170] sm:$0xff]
    %v187 = vld [vmem:[#allocation13 + $0x178] sm:$0xff]
    %v188 = vld [vmem:[%s6] sm:$0x3f]
    %v190 = vlaneseq
    %v191 = vshrl.u32 %v190, 7
    %v192 = vsub.s32 0, %v191
    %v193 = vrot.slane %v188, %v192
    %v194 = vlaneseq
    %v195 = vshrl.u32 %v194, 7
    %v196 = vsub.s32 1, %v195
    %v197 = vrot.slane %v188, %v196
    %v198 = vlaneseq
    %v199 = vshrl.u32 %v198, 7
    %v200 = vsub.s32 2, %v199
    %v201 = vrot.slane %v188, %v200
    %v202 = vlaneseq
    %v203 = vshrl.u32 %v202, 7
    %v204 = vsub.s32 3, %v203
    %v205 = vrot.slane %v188, %v204
    %v206 = vlaneseq
    %v207 = vshrl.u32 %v206, 7
    %v208 = vsub.s32 4, %v207
    %v209 = vrot.slane %v188, %v208
    %v210 = vlaneseq
    %v211 = vshrl.u32 %v210, 7
    %v212 = vsub.s32 5, %v211
    %v213 = vrot.slane %v188, %v212
    %v228 = vunpack.c.l.b16 %v124
    %v229 = vunpack.c.l.b16 %v125
    %v230 = vunpack.c.l.b16 %v126
    %v231 = vunpack.c.l.b16 %v127
    %v232 = vunpack.c.l.b16 %v128
    %v233 = vunpack.c.l.b16 %v129
    %v234 = vunpack.c.l.b16 %v130
    %v235 = vunpack.c.l.b16 %v131
    %v236 = vpack.c.b16 %v229, %v228
    %v237 = vpack.c.b16 %v231, %v230
    %v238 = vpack.c.b16 %v233, %v232
    %v239 = vpack.c.b16 %v235, %v234
    %v292 = vunpack.c.l.b16 %v140
    %v293 = vunpack.c.h.b16 %v140
    %v294 = vunpack.c.l.b16 %v141
    %v295 = vunpack.c.h.b16 %v141
    %v296 = vunpack.c.l.b16 %v142
    %v297 = vunpack.c.h.b16 %v142
    %v298 = vunpack.c.l.b16 %v143
    %v299 = vunpack.c.h.b16 %v143
    %v300 = vunpack.c.l.b16 %v144
    %v301 = vunpack.c.h.b16 %v144
    %v302 = vunpack.c.l.b16 %v145
    %v303 = vunpack.c.h.b16 %v145
    %v304 = vunpack.c.l.b16 %v146
    %v305 = vunpack.c.h.b16 %v146
    %v306 = vunpack.c.l.b16 %v147
    %v307 = vunpack.c.h.b16 %v147
    %v308 = vunpack.c.l.b16 %v148
    %v309 = vunpack.c.h.b16 %v148
    %v310 = vunpack.c.l.b16 %v149
    %v311 = vunpack.c.h.b16 %v149
    %v312 = vunpack.c.l.b16 %v150
    %v313 = vunpack.c.h.b16 %v150
    %v314 = vunpack.c.l.b16 %v151
    %v315 = vunpack.c.h.b16 %v151
    %v316 = vunpack.c.l.b16 %v152
    %v317 = vunpack.c.h.b16 %v152
    %v318 = vunpack.c.l.b16 %v153
    %v319 = vunpack.c.h.b16 %v153
    %v320 = vunpack.c.l.b16 %v154
    %v321 = vunpack.c.h.b16 %v154
    %v322 = vunpack.c.l.b16 %v155
    %v323 = vunpack.c.h.b16 %v155
    %v324 = vunpack.c.l.b16 %v156
    %v325 = vunpack.c.h.b16 %v156
    %v326 = vunpack.c.l.b16 %v157
    %v327 = vunpack.c.h.b16 %v157
    %v328 = vunpack.c.l.b16 %v158
    %v329 = vunpack.c.h.b16 %v158
    %v330 = vunpack.c.l.b16 %v159
    %v331 = vunpack.c.h.b16 %v159
    %v332 = vunpack.c.l.b16 %v160
    %v333 = vunpack.c.h.b16 %v160
    %v334 = vunpack.c.l.b16 %v161
    %v335 = vunpack.c.h.b16 %v161
    %v336 = vunpack.c.l.b16 %v162
    %v337 = vunpack.c.h.b16 %v162
    %v338 = vunpack.c.l.b16 %v163
    %v339 = vunpack.c.h.b16 %v163
    %v340 = vunpack.c.l.b16 %v164
    %v341 = vunpack.c.h.b16 %v164
    %v342 = vunpack.c.l.b16 %v165
    %v343 = vunpack.c.h.b16 %v165
    %v344 = vunpack.c.l.b16 %v166
    %v345 = vunpack.c.h.b16 %v166
    %v346 = vunpack.c.l.b16 %v167
    %v347 = vunpack.c.h.b16 %v167
    %v348 = vunpack.c.l.b16 %v168
    %v349 = vunpack.c.h.b16 %v168
    %v350 = vunpack.c.l.b16 %v169
    %v351 = vunpack.c.h.b16 %v169
    %v352 = vunpack.c.l.b16 %v170
    %v353 = vunpack.c.h.b16 %v170
    %v354 = vunpack.c.l.b16 %v171
    %v355 = vunpack.c.h.b16 %v171
    %v356 = vunpack.c.l.b16 %v172
    %v357 = vunpack.c.h.b16 %v172
    %v358 = vunpack.c.l.b16 %v173
    %v359 = vunpack.c.h.b16 %v173
    %v360 = vunpack.c.l.b16 %v174
    %v361 = vunpack.c.h.b16 %v174
    %v362 = vunpack.c.l.b16 %v175
    %v363 = vunpack.c.h.b16 %v175
    %v364 = vunpack.c.l.b16 %v176
    %v365 = vunpack.c.h.b16 %v176
    %v366 = vunpack.c.l.b16 %v177
    %v367 = vunpack.c.h.b16 %v177
    %v368 = vunpack.c.l.b16 %v178
    %v369 = vunpack.c.h.b16 %v178
    %v370 = vunpack.c.l.b16 %v179
    %v371 = vunpack.c.h.b16 %v179
    %v372 = vunpack.c.l.b16 %v180
    %v373 = vunpack.c.h.b16 %v180
    %v374 = vunpack.c.l.b16 %v181
    %v375 = vunpack.c.h.b16 %v181
    %v376 = vunpack.c.l.b16 %v182
    %v377 = vunpack.c.h.b16 %v182
    %v378 = vunpack.c.l.b16 %v183
    %v379 = vunpack.c.h.b16 %v183
    %v380 = vunpack.c.l.b16 %v184
    %v381 = vunpack.c.h.b16 %v184
    %v382 = vunpack.c.l.b16 %v185
    %v383 = vunpack.c.h.b16 %v185
    %v384 = vunpack.c.l.b16 %v186
    %v385 = vunpack.c.h.b16 %v186
    %v386 = vunpack.c.l.b16 %v187
    %v387 = vunpack.c.h.b16 %v187
    %v388 = vpack.c.b16 %v298, %v292
    %v389 = vpack.c.b16 %v299, %v293
    %v390 = vpack.c.b16 %v300, %v294
    %v391 = vpack.c.b16 %v301, %v295
    %v392 = vpack.c.b16 %v302, %v296
    %v393 = vpack.c.b16 %v303, %v297
    %v394 = vpack.c.b16 %v310, %v304
    %v395 = vpack.c.b16 %v311, %v305
    %v396 = vpack.c.b16 %v312, %v306
    %v397 = vpack.c.b16 %v313, %v307
    %v398 = vpack.c.b16 %v314, %v308
    %v399 = vpack.c.b16 %v315, %v309
    %v400 = vpack.c.b16 %v322, %v316
    %v401 = vpack.c.b16 %v323, %v317
    %v402 = vpack.c.b16 %v324, %v318
    %v403 = vpack.c.b16 %v325, %v319
    %v404 = vpack.c.b16 %v326, %v320
    %v405 = vpack.c.b16 %v327, %v321
    %v406 = vpack.c.b16 %v334, %v328
    %v407 = vpack.c.b16 %v335, %v329
    %v408 = vpack.c.b16 %v336, %v330
    %v409 = vpack.c.b16 %v337, %v331
    %v410 = vpack.c.b16 %v338, %v332
    %v411 = vpack.c.b16 %v339, %v333
    %v412 = vpack.c.b16 %v346, %v340
    %v413 = vpack.c.b16 %v347, %v341
    %v414 = vpack.c.b16 %v348, %v342
    %v415 = vpack.c.b16 %v349, %v343
    %v416 = vpack.c.b16 %v350, %v344
    %v417 = vpack.c.b16 %v351, %v345
    %v418 = vpack.c.b16 %v358, %v352
    %v419 = vpack.c.b16 %v359, %v353
    %v420 = vpack.c.b16 %v360, %v354
    %v421 = vpack.c.b16 %v361, %v355
    %v422 = vpack.c.b16 %v362, %v356
    %v423 = vpack.c.b16 %v363, %v357
    %v424 = vpack.c.b16 %v370, %v364
    %v425 = vpack.c.b16 %v371, %v365
    %v426 = vpack.c.b16 %v372, %v366
    %v427 = vpack.c.b16 %v373, %v367
    %v428 = vpack.c.b16 %v374, %v368
    %v429 = vpack.c.b16 %v375, %v369
    %v430 = vpack.c.b16 %v382, %v376
    %v431 = vpack.c.b16 %v383, %v377
    %v432 = vpack.c.b16 %v384, %v378
    %v433 = vpack.c.b16 %v385, %v379
    %v434 = vpack.c.b16 %v386, %v380
    %v435 = vpack.c.b16 %v387, %v381
    %484 = vmatprep.subr.bf16.mxu0 %v431
    %485 = vmatpush1.bf16.msra.mxu0 %v430
    %486 = vmatprep.subr.bf16.mxu0 %v425
    %487 = vmatpush1.bf16.msra.mxu0 %v424
    %488 = vmatprep.subr.bf16.mxu0 %v419
    %489 = vmatpush1.bf16.msra.mxu0 %v418
    %490 = vmatprep.subr.bf16.mxu0 %v413
    %491 = vmatpush1.bf16.msra.mxu0 %v412
    %492 = vmatprep.subr.bf16.mxu0 %v407
    %493 = vmatpush1.bf16.msra.mxu0 %v406
    %494 = vmatprep.subr.bf16.mxu0 %v401
    %495 = vmatpush1.bf16.msra.mxu0 %v400
    %496 = vmatprep.subr.bf16.mxu0 %v395
    %497 = vmatpush1.bf16.msra.mxu0 %v394
    %498 = vmatprep.subr.bf16.mxu0 %v389
    %499 = vmatpush1.bf16.msra.mxu0 %v388
    %500 = vmatprep.subr.bf16.mxu0 0
    %501 = vmatpush2.bf16.msra.mxu0 0
    %502 = vmatprep.subr.bf16.mxu0 0
    %503 = vmatpush2.bf16.msra.mxu0 0
    %504 = vmatprep.subr.bf16.mxu0 0
    %505 = vmatpush2.bf16.msra.mxu0 0
    %506 = vmatprep.subr.bf16.mxu0 0
    %507 = vmatpush2.bf16.msra.mxu0 0
    %508 = vmatprep.subr.bf16.mxu0 0
    %509 = vmatpush2.bf16.msra.mxu0 0
    %510 = vmatprep.subr.bf16.mxu0 0
    %511 = vmatpush2.bf16.msra.mxu0 0
    %512 = vmatprep.subr.bf16.mxu0 0
    %513 = vmatpush2.bf16.msra.mxu0 0
    %514 = vmatprep.subr.bf16.mxu0 0
    %515 = vmatpush2.bf16.msra.mxu0 0
    %516 = vmatprep.mubr.bf16.mxu0 0
    %517 = vmatmul.mubr.bf16.gmra.mxu0 %v236
    %v518 = vpop.f32.mrf.mxu0
    %v519 = vadd.f32 %v193, %v518
    %v520 = vpop.f32.mrf.mxu0
    %v521 = vadd.f32 %v197, %v520
    %v522 = vpop.f32.mrf.mxu0
    %v523 = vadd.f32 %v193, %v522
    %v524 = vpop.f32.mrf.mxu0
    %v525 = vadd.f32 %v197, %v524
    %526 = vmatprep.mubr.bf16.mxu0 0
    %527 = vmatmul.mubr.bf16.gmra.mxu0 %v237
    %v528 = vpop.f32.mrf.mxu0
    %v529 = vadd.f32 %v193, %v528
    %v530 = vpop.f32.mrf.mxu0
    %v531 = vadd.f32 %v197, %v530
    %v532 = vpop.f32.mrf.mxu0
    %v533 = vadd.f32 %v193, %v532
    %v534 = vpop.f32.mrf.mxu0
    %v535 = vadd.f32 %v197, %v534
    %536 = vmatprep.mubr.bf16.mxu0 0
    %537 = vmatmul.mubr.bf16.gmra.mxu0 %v238
    %v538 = vpop.f32.mrf.mxu0
    %v539 = vadd.f32 %v193, %v538
    %v540 = vpop.f32.mrf.mxu0
    %v541 = vadd.f32 %v197, %v540
    %v542 = vpop.f32.mrf.mxu0
    %v543 = vadd.f32 %v193, %v542
    %v544 = vpop.f32.mrf.mxu0
    %v545 = vadd.f32 %v197, %v544
    %546 = vmatprep.mubr.bf16.mxu0 0
    %547 = vmatmul.mubr.bf16.gmra.mxu0 %v239
    %v548 = vpop.f32.mrf.mxu0
    %v549 = vadd.f32 %v193, %v548
    %v550 = vpop.f32.mrf.mxu0
    %v551 = vadd.f32 %v197, %v550
    %v552 = vpop.f32.mrf.mxu0
    %v553 = vadd.f32 %v193, %v552
    %v554 = vpop.f32.mrf.mxu0
    %v555 = vadd.f32 %v197, %v554
    %556 = vdwg.mxu0
    %557 = vmatprep.subr.bf16.mxu0 %v433
    %558 = vmatpush1.bf16.msra.mxu0 %v432
    %559 = vmatprep.subr.bf16.mxu0 %v427
    %560 = vmatpush1.bf16.msra.mxu0 %v426
    %561 = vmatprep.subr.bf16.mxu0 %v421
    %562 = vmatpush1.bf16.msra.mxu0 %v420
    %563 = vmatprep.subr.bf16.mxu0 %v415
    %564 = vmatpush1.bf16.msra.mxu0 %v414
    %565 = vmatprep.subr.bf16.mxu0 %v409
    %566 = vmatpush1.bf16.msra.mxu0 %v408
    %567 = vmatprep.subr.bf16.mxu0 %v403
    %568 = vmatpush1.bf16.msra.mxu0 %v402
    %569 = vmatprep.subr.bf16.mxu0 %v397
    %570 = vmatpush1.bf16.msra.mxu0 %v396
    %571 = vmatprep.subr.bf16.mxu0 %v391
    %572 = vmatpush1.bf16.msra.mxu0 %v390
    %573 = vmatprep.subr.bf16.mxu0 0
    %574 = vmatpush2.bf16.msra.mxu0 0
    %575 = vmatprep.subr.bf16.mxu0 0
    %576 = vmatpush2.bf16.msra.mxu0 0
    %577 = vmatprep.subr.bf16.mxu0 0
    %578 = vmatpush2.bf16.msra.mxu0 0
    %579 = vmatprep.subr.bf16.mxu0 0
    %580 = vmatpush2.bf16.msra.mxu0 0
    %581 = vmatprep.subr.bf16.mxu0 0
    %582 = vmatpush2.bf16.msra.mxu0 0
    %583 = vmatprep.subr.bf16.mxu0 0
    %584 = vmatpush2.bf16.msra.mxu0 0
    %585 = vmatprep.subr.bf16.mxu0 0
    %586 = vmatpush2.bf16.msra.mxu0 0
    %587 = vmatprep.subr.bf16.mxu0 0
    %588 = vmatpush2.bf16.msra.mxu0 0
    %589 = vmatprep.mubr.bf16.mxu0 0
    %590 = vmatmul.mubr.bf16.gmra.mxu0 %v236
    %v591 = vpop.f32.mrf.mxu0
    %v592 = vadd.f32 %v201, %v591
    %v593 = vpop.f32.mrf.mxu0
    %v594 = vadd.f32 %v205, %v593
    %v595 = vpop.f32.mrf.mxu0
    %v596 = vadd.f32 %v201, %v595
    %v597 = vpop.f32.mrf.mxu0
    %v598 = vadd.f32 %v205, %v597
    %599 = vmatprep.mubr.bf16.mxu0 0
    %600 = vmatmul.mubr.bf16.gmra.mxu0 %v237
    %v601 = vpop.f32.mrf.mxu0
    %v602 = vadd.f32 %v201, %v601
    %v603 = vpop.f32.mrf.mxu0
    %v604 = vadd.f32 %v205, %v603
    %v605 = vpop.f32.mrf.mxu0
    %v606 = vadd.f32 %v201, %v605
    %v607 = vpop.f32.mrf.mxu0
    %v608 = vadd.f32 %v205, %v607
    %609 = vmatprep.mubr.bf16.mxu0 0
    %610 = vmatmul.mubr.bf16.gmra.mxu0 %v238
    %v611 = vpop.f32.mrf.mxu0
    %v612 = vadd.f32 %v201, %v611
    %v613 = vpop.f32.mrf.mxu0
    %v614 = vadd.f32 %v205, %v613
    %v615 = vpop.f32.mrf.mxu0
    %v616 = vadd.f32 %v201, %v615
    %v617 = vpop.f32.mrf.mxu0
    %v618 = vadd.f32 %v205, %v617
    %619 = vmatprep.mubr.bf16.mxu0 0
    %620 = vmatmul.mubr.bf16.gmra.mxu0 %v239
    %v621 = vpop.f32.mrf.mxu0
    %v622 = vadd.f32 %v201, %v621
    %v623 = vpop.f32.mrf.mxu0
    %v624 = vadd.f32 %v205, %v623
    %v625 = vpop.f32.mrf.mxu0
    %v626 = vadd.f32 %v201, %v625
    %v627 = vpop.f32.mrf.mxu0
    %v628 = vadd.f32 %v205, %v627
    %629 = vdwg.mxu0
    %630 = vmatprep.subr.bf16.mxu0 %v435
    %631 = vmatpush1.bf16.msra.mxu0 %v434
    %632 = vmatprep.subr.bf16.mxu0 %v429
    %633 = vmatpush1.bf16.msra.mxu0 %v428
    %634 = vmatprep.subr.bf16.mxu0 %v423
    %635 = vmatpush1.bf16.msra.mxu0 %v422
    %636 = vmatprep.subr.bf16.mxu0 %v417
    %637 = vmatpush1.bf16.msra.mxu0 %v416
    %638 = vmatprep.subr.bf16.mxu0 %v411
    %639 = vmatpush1.bf16.msra.mxu0 %v410
    %640 = vmatprep.subr.bf16.mxu0 %v405
    %641 = vmatpush1.bf16.msra.mxu0 %v404
    %642 = vmatprep.subr.bf16.mxu0 %v399
    %643 = vmatpush1.bf16.msra.mxu0 %v398
    %644 = vmatprep.subr.bf16.mxu0 %v393
    %645 = vmatpush1.bf16.msra.mxu0 %v392
    %646 = vmatprep.subr.bf16.mxu0 0
    %647 = vmatpush2.bf16.msra.mxu0 0
    %648 = vmatprep.subr.bf16.mxu0 0
    %649 = vmatpush2.bf16.msra.mxu0 0
    %650 = vmatprep.subr.bf16.mxu0 0
    %651 = vmatpush2.bf16.msra.mxu0 0
    %652 = vmatprep.subr.bf16.mxu0 0
    %653 = vmatpush2.bf16.msra.mxu0 0
    %654 = vmatprep.subr.bf16.mxu0 0
    %655 = vmatpush2.bf16.msra.mxu0 0
    %656 = vmatprep.subr.bf16.mxu0 0
    %657 = vmatpush2.bf16.msra.mxu0 0
    %658 = vmatprep.subr.bf16.mxu0 0
    %659 = vmatpush2.bf16.msra.mxu0 0
    %660 = vmatprep.subr.bf16.mxu0 0
    %661 = vmatpush2.bf16.msra.mxu0 0
    %662 = vmatprep.mubr.bf16.mxu0 0
    %663 = vmatmul.mubr.bf16.gmra.mxu0 %v236
    %v664 = vpop.f32.mrf.mxu0
    %v665 = vadd.f32 %v209, %v664
    %v666 = vpop.f32.mrf.mxu0
    %v667 = vadd.f32 %v213, %v666
    %v668 = vpop.f32.mrf.mxu0
    %v669 = vadd.f32 %v209, %v668
    %v670 = vpop.f32.mrf.mxu0
    %v671 = vadd.f32 %v213, %v670
    %672 = vmatprep.mubr.bf16.mxu0 0
    %673 = vmatmul.mubr.bf16.gmra.mxu0 %v237
    %v674 = vpop.f32.mrf.mxu0
    %v675 = vadd.f32 %v209, %v674
    %v676 = vpop.f32.mrf.mxu0
    %v677 = vadd.f32 %v213, %v676
    %v678 = vpop.f32.mrf.mxu0
    %v679 = vadd.f32 %v209, %v678
    %v680 = vpop.f32.mrf.mxu0
    %v681 = vadd.f32 %v213, %v680
    %682 = vmatprep.mubr.bf16.mxu0 0
    %683 = vmatmul.mubr.bf16.gmra.mxu0 %v238
    %v684 = vpop.f32.mrf.mxu0
    %v685 = vadd.f32 %v209, %v684
    %v686 = vpop.f32.mrf.mxu0
    %v687 = vadd.f32 %v213, %v686
    %v688 = vpop.f32.mrf.mxu0
    %v689 = vadd.f32 %v209, %v688
    %v690 = vpop.f32.mrf.mxu0
    %v691 = vadd.f32 %v213, %v690
    %692 = vmatprep.mubr.bf16.mxu0 0
    %693 = vmatmul.mubr.bf16.gmra.mxu0 %v239
    %v694 = vpop.f32.mrf.mxu0
    %v695 = vadd.f32 %v209, %v694
    %v696 = vpop.f32.mrf.mxu0
    %v697 = vadd.f32 %v213, %v696
    %v698 = vpop.f32.mrf.mxu0
    %v699 = vadd.f32 %v209, %v698
    %v700 = vpop.f32.mrf.mxu0
    %v701 = vadd.f32 %v213, %v700
    %702 = vdwg.mxu0
    %v703 = vpack.c.bf16 %v523, %v519
    %v704 = vpack.c.bf16 %v525, %v521
    %v705 = vpack.c.bf16 %v596, %v592
    %v706 = vpack.c.bf16 %v598, %v594
    %v707 = vpack.c.bf16 %v669, %v665
    %v708 = vpack.c.bf16 %v671, %v667
    %v709 = vpack.c.bf16 %v533, %v529
    %v710 = vpack.c.bf16 %v535, %v531
    %v711 = vpack.c.bf16 %v606, %v602
    %v712 = vpack.c.bf16 %v608, %v604
    %v713 = vpack.c.bf16 %v679, %v675
    %v714 = vpack.c.bf16 %v681, %v677
    %v715 = vpack.c.bf16 %v543, %v539
    %v716 = vpack.c.bf16 %v545, %v541
    %v717 = vpack.c.bf16 %v616, %v612
    %v718 = vpack.c.bf16 %v618, %v614
    %v719 = vpack.c.bf16 %v689, %v685
    %v720 = vpack.c.bf16 %v691, %v687
    %v721 = vpack.c.bf16 %v553, %v549
    %v722 = vpack.c.bf16 %v555, %v551
    %v723 = vpack.c.bf16 %v626, %v622
    %v724 = vpack.c.bf16 %v628, %v624
    %v725 = vpack.c.bf16 %v699, %v695
    %v726 = vpack.c.bf16 %v701, %v697
    %v751 = vunpack.c.l.b16 %v703
    %v752 = vunpack.c.l.b16 %v704
    %v753 = vunpack.c.l.b16 %v705
    %v754 = vunpack.c.l.b16 %v706
    %v755 = vunpack.c.l.b16 %v707
    %v756 = vunpack.c.l.b16 %v708
    %v757 = vunpack.c.h.b16 %v703
    %v758 = vunpack.c.h.b16 %v704
    %v759 = vunpack.c.h.b16 %v705
    %v760 = vunpack.c.h.b16 %v706
    %v761 = vunpack.c.h.b16 %v707
    %v762 = vunpack.c.h.b16 %v708
    %v763 = vunpack.c.l.b16 %v709
    %v764 = vunpack.c.l.b16 %v710
    %v765 = vunpack.c.l.b16 %v711
    %v766 = vunpack.c.l.b16 %v712
    %v767 = vunpack.c.l.b16 %v713
    %v768 = vunpack.c.l.b16 %v714
    %v769 = vunpack.c.h.b16 %v709
    %v770 = vunpack.c.h.b16 %v710
    %v771 = vunpack.c.h.b16 %v711
    %v772 = vunpack.c.h.b16 %v712
    %v773 = vunpack.c.h.b16 %v713
    %v774 = vunpack.c.h.b16 %v714
    %v775 = vunpack.c.l.b16 %v715
    %v776 = vunpack.c.l.b16 %v716
    %v777 = vunpack.c.l.b16 %v717
    %v778 = vunpack.c.l.b16 %v718
    %v779 = vunpack.c.l.b16 %v719
    %v780 = vunpack.c.l.b16 %v720
    %v781 = vunpack.c.h.b16 %v715
    %v782 = vunpack.c.h.b16 %v716
    %v783 = vunpack.c.h.b16 %v717
    %v784 = vunpack.c.h.b16 %v718
    %v785 = vunpack.c.h.b16 %v719
    %v786 = vunpack.c.h.b16 %v720
    %v787 = vunpack.c.l.b16 %v721
    %v788 = vunpack.c.l.b16 %v722
    %v789 = vunpack.c.l.b16 %v723
    %v790 = vunpack.c.l.b16 %v724
    %v791 = vunpack.c.l.b16 %v725
    %v792 = vunpack.c.l.b16 %v726
    %v793 = vunpack.c.h.b16 %v721
    %v794 = vunpack.c.h.b16 %v722
    %v795 = vunpack.c.h.b16 %v723
    %v796 = vunpack.c.h.b16 %v724
    %v797 = vunpack.c.h.b16 %v725
    %v798 = vunpack.c.h.b16 %v726
    %v799 = vpack.c.b16 %v752, %v751
    %v800 = vpack.c.b16 %v754, %v753
    %v801 = vpack.c.b16 %v756, %v755
    %v802 = vpack.c.b16 %v758, %v757
    %v803 = vpack.c.b16 %v760, %v759
    %v804 = vpack.c.b16 %v762, %v761
    %v805 = vpack.c.b16 %v764, %v763
    %v806 = vpack.c.b16 %v766, %v765
    %v807 = vpack.c.b16 %v768, %v767
    %v808 = vpack.c.b16 %v770, %v769
    %v809 = vpack.c.b16 %v772, %v771
    %v810 = vpack.c.b16 %v774, %v773
    %v811 = vpack.c.b16 %v776, %v775
    %v812 = vpack.c.b16 %v778, %v777
    %v813 = vpack.c.b16 %v780, %v779
    %v814 = vpack.c.b16 %v782, %v781
    %v815 = vpack.c.b16 %v784, %v783
    %v816 = vpack.c.b16 %v786, %v785
    %v817 = vpack.c.b16 %v788, %v787
    %v818 = vpack.c.b16 %v790, %v789
    %v819 = vpack.c.b16 %v792, %v791
    %v820 = vpack.c.b16 %v794, %v793
    %v821 = vpack.c.b16 %v796, %v795
    %v822 = vpack.c.b16 %v798, %v797
    %847 = vst [vmem:[#allocation6] sm:$0xff] %v799
    %848 = vst [vmem:[#allocation6 + $0x8] sm:$0xff] %v800
    %849 = vst [vmem:[#allocation6 + $0x10] sm:$0xff] %v801
    %850 = vst [vmem:[#allocation6 + $0x18] sm:$0xff] %v802
    %851 = vst [vmem:[#allocation6 + $0x20] sm:$0xff] %v803
    %852 = vst [vmem:[#allocation6 + $0x28] sm:$0xff] %v804
    %853 = vst [vmem:[#allocation6 + $0x30] sm:$0xff] %v805
    %854 = vst [vmem:[#allocation6 + $0x38] sm:$0xff] %v806
    %855 = vst [vmem:[#allocation6 + $0x40] sm:$0xff] %v807
    %856 = vst [vmem:[#allocation6 + $0x48] sm:$0xff] %v808
    %857 = vst [vmem:[#allocation6 + $0x50] sm:$0xff] %v809
    %858 = vst [vmem:[#allocation6 + $0x58] sm:$0xff] %v810
    %859 = vst [vmem:[#allocation6 + $0x60] sm:$0xff] %v811
    %860 = vst [vmem:[#allocation6 + $0x68] sm:$0xff] %v812
    %861 = vst [vmem:[#allocation6 + $0x70] sm:$0xff] %v813
    %862 = vst [vmem:[#allocation6 + $0x78] sm:$0xff] %v814
    %863 = vst [vmem:[#allocation6 + $0x80] sm:$0xff] %v815
    %864 = vst [vmem:[#allocation6 + $0x88] sm:$0xff] %v816
    %865 = vst [vmem:[#allocation6 + $0x90] sm:$0xff] %v817
    %866 = vst [vmem:[#allocation6 + $0x98] sm:$0xff] %v818
    %867 = vst [vmem:[#allocation6 + $0xa0] sm:$0xff] %v819
    %868 = vst [vmem:[#allocation6 + $0xa8] sm:$0xff] %v820
    %869 = vst [vmem:[#allocation6 + $0xb0] sm:$0xff] %v821
    %870 = vst [vmem:[#allocation6 + $0xb8] sm:$0xff] %v822
    %v871 = vld [vmem:[#allocation14] sm:$0xff]
    %v872 = vld [vmem:[#allocation14 + $0x8] sm:$0xff]
    %v873 = vld [vmem:[#allocation14 + $0x10] sm:$0xff]
    %v874 = vld [vmem:[#allocation14 + $0x18] sm:$0xff]
    %v875 = vld [vmem:[#allocation14 + $0x20] sm:$0xff]
    %v876 = vld [vmem:[#allocation14 + $0x28] sm:$0xff]
    %v877 = vld [vmem:[#allocation14 + $0x30] sm:$0xff]
    %v878 = vld [vmem:[#allocation14 + $0x38] sm:$0xff]
    %v879 = vld [vmem:[#allocation14 + $0x40] sm:$0xff]
    %v880 = vld [vmem:[#allocation14 + $0x48] sm:$0xff]
    %v881 = vld [vmem:[#allocation14 + $0x50] sm:$0xff]
    %v882 = vld [vmem:[#allocation14 + $0x58] sm:$0xff]
    %v883 = vld [vmem:[#allocation14 + $0x60] sm:$0xff]
    %v884 = vld [vmem:[#allocation14 + $0x68] sm:$0xff]
    %v885 = vld [vmem:[#allocation14 + $0x70] sm:$0xff]
    %v886 = vld [vmem:[#allocation14 + $0x78] sm:$0xff]
    %v887 = vld [vmem:[#allocation14 + $0x80] sm:$0xff]
    %v888 = vld [vmem:[#allocation14 + $0x88] sm:$0xff]
    %v889 = vld [vmem:[#allocation14 + $0x90] sm:$0xff]
    %v890 = vld [vmem:[#allocation14 + $0x98] sm:$0xff]
    %v891 = vld [vmem:[#allocation14 + $0xa0] sm:$0xff]
    %v892 = vld [vmem:[#allocation14 + $0xa8] sm:$0xff]
    %v893 = vld [vmem:[#allocation14 + $0xb0] sm:$0xff]
    %v894 = vld [vmem:[#allocation14 + $0xb8] sm:$0xff]
    %v895 = vld [vmem:[#allocation14 + $0xc0] sm:$0xff]
    %v896 = vld [vmem:[#allocation14 + $0xc8] sm:$0xff]
    %v897 = vld [vmem:[#allocation14 + $0xd0] sm:$0xff]
    %v898 = vld [vmem:[#allocation14 + $0xd8] sm:$0xff]
    %v899 = vld [vmem:[#allocation14 + $0xe0] sm:$0xff]
    %v900 = vld [vmem:[#allocation14 + $0xe8] sm:$0xff]
    %v901 = vld [vmem:[#allocation14 + $0xf0] sm:$0xff]
    %v902 = vld [vmem:[#allocation14 + $0xf8] sm:$0xff]
    %v903 = vld [vmem:[#allocation14 + $0x100] sm:$0xff]
    %v904 = vld [vmem:[#allocation14 + $0x108] sm:$0xff]
    %v905 = vld [vmem:[#allocation14 + $0x110] sm:$0xff]
    %v906 = vld [vmem:[#allocation14 + $0x118] sm:$0xff]
    %v907 = vld [vmem:[#allocation14 + $0x120] sm:$0xff]
    %v908 = vld [vmem:[#allocation14 + $0x128] sm:$0xff]
    %v909 = vld [vmem:[#allocation14 + $0x130] sm:$0xff]
    %v910 = vld [vmem:[#allocation14 + $0x138] sm:$0xff]
    %v911 = vld [vmem:[#allocation14 + $0x140] sm:$0xff]
    %v912 = vld [vmem:[#allocation14 + $0x148] sm:$0xff]
    %v913 = vld [vmem:[#allocation14 + $0x150] sm:$0xff]
    %v914 = vld [vmem:[#allocation14 + $0x158] sm:$0xff]
    %v915 = vld [vmem:[#allocation14 + $0x160] sm:$0xff]
    %v916 = vld [vmem:[#allocation14 + $0x168] sm:$0xff]
    %v917 = vld [vmem:[#allocation14 + $0x170] sm:$0xff]
    %v918 = vld [vmem:[#allocation14 + $0x178] sm:$0xff]
    %v919 = vld [vmem:[%s7] sm:$0x3f]
    %v921 = vlaneseq
    %v922 = vshrl.u32 %v921, 7
    %v923 = vsub.s32 0, %v922
    %v924 = vrot.slane %v919, %v923
    %v925 = vlaneseq
    %v926 = vshrl.u32 %v925, 7
    %v927 = vsub.s32 1, %v926
    %v928 = vrot.slane %v919, %v927
    %v929 = vlaneseq
    %v930 = vshrl.u32 %v929, 7
    %v931 = vsub.s32 2, %v930
    %v932 = vrot.slane %v919, %v931
    %v933 = vlaneseq
    %v934 = vshrl.u32 %v933, 7
    %v935 = vsub.s32 3, %v934
    %v936 = vrot.slane %v919, %v935
    %v937 = vlaneseq
    %v938 = vshrl.u32 %v937, 7
    %v939 = vsub.s32 4, %v938
    %v940 = vrot.slane %v919, %v939
    %v941 = vlaneseq
    %v942 = vshrl.u32 %v941, 7
    %v943 = vsub.s32 5, %v942
    %v944 = vrot.slane %v919, %v943
    %v959 = vunpack.c.l.b16 %v132
    %v960 = vunpack.c.l.b16 %v133
    %v961 = vunpack.c.l.b16 %v134
    %v962 = vunpack.c.l.b16 %v135
    %v963 = vunpack.c.l.b16 %v136
    %v964 = vunpack.c.l.b16 %v137
    %v965 = vunpack.c.l.b16 %v138
    %v966 = vunpack.c.l.b16 %v139
    %v967 = vpack.c.b16 %v960, %v959
    %v968 = vpack.c.b16 %v962, %v961
    %v969 = vpack.c.b16 %v964, %v963
    %v970 = vpack.c.b16 %v966, %v965
    %v1023 = vunpack.c.l.b16 %v871
    %v1024 = vunpack.c.h.b16 %v871
    %v1025 = vunpack.c.l.b16 %v872
    %v1026 = vunpack.c.h.b16 %v872
    %v1027 = vunpack.c.l.b16 %v873
    %v1028 = vunpack.c.h.b16 %v873
    %v1029 = vunpack.c.l.b16 %v874
    %v1030 = vunpack.c.h.b16 %v874
    %v1031 = vunpack.c.l.b16 %v875
    %v1032 = vunpack.c.h.b16 %v875
    %v1033 = vunpack.c.l.b16 %v876
    %v1034 = vunpack.c.h.b16 %v876
    %v1035 = vunpack.c.l.b16 %v877
    %v1036 = vunpack.c.h.b16 %v877
    %v1037 = vunpack.c.l.b16 %v878
    %v1038 = vunpack.c.h.b16 %v878
    %v1039 = vunpack.c.l.b16 %v879
    %v1040 = vunpack.c.h.b16 %v879
    %v1041 = vunpack.c.l.b16 %v880
    %v1042 = vunpack.c.h.b16 %v880
    %v1043 = vunpack.c.l.b16 %v881
    %v1044 = vunpack.c.h.b16 %v881
    %v1045 = vunpack.c.l.b16 %v882
    %v1046 = vunpack.c.h.b16 %v882
    %v1047 = vunpack.c.l.b16 %v883
    %v1048 = vunpack.c.h.b16 %v883
    %v1049 = vunpack.c.l.b16 %v884
    %v1050 = vunpack.c.h.b16 %v884
    %v1051 = vunpack.c.l.b16 %v885
    %v1052 = vunpack.c.h.b16 %v885
    %v1053 = vunpack.c.l.b16 %v886
    %v1054 = vunpack.c.h.b16 %v886
    %v1055 = vunpack.c.l.b16 %v887
    %v1056 = vunpack.c.h.b16 %v887
    %v1057 = vunpack.c.l.b16 %v888
    %v1058 = vunpack.c.h.b16 %v888
    %v1059 = vunpack.c.l.b16 %v889
    %v1060 = vunpack.c.h.b16 %v889
    %v1061 = vunpack.c.l.b16 %v890
    %v1062 = vunpack.c.h.b16 %v890
    %v1063 = vunpack.c.l.b16 %v891
    %v1064 = vunpack.c.h.b16 %v891
    %v1065 = vunpack.c.l.b16 %v892
    %v1066 = vunpack.c.h.b16 %v892
    %v1067 = vunpack.c.l.b16 %v893
    %v1068 = vunpack.c.h.b16 %v893
    %v1069 = vunpack.c.l.b16 %v894
    %v1070 = vunpack.c.h.b16 %v894
    %v1071 = vunpack.c.l.b16 %v895
    %v1072 = vunpack.c.h.b16 %v895
    %v1073 = vunpack.c.l.b16 %v896
    %v1074 = vunpack.c.h.b16 %v896
    %v1075 = vunpack.c.l.b16 %v897
    %v1076 = vunpack.c.h.b16 %v897
    %v1077 = vunpack.c.l.b16 %v898
    %v1078 = vunpack.c.h.b16 %v898
    %v1079 = vunpack.c.l.b16 %v899
    %v1080 = vunpack.c.h.b16 %v899
    %v1081 = vunpack.c.l.b16 %v900
    %v1082 = vunpack.c.h.b16 %v900
    %v1083 = vunpack.c.l.b16 %v901
    %v1084 = vunpack.c.h.b16 %v901
    %v1085 = vunpack.c.l.b16 %v902
    %v1086 = vunpack.c.h.b16 %v902
    %v1087 = vunpack.c.l.b16 %v903
    %v1088 = vunpack.c.h.b16 %v903
    %v1089 = vunpack.c.l.b16 %v904
    %v1090 = vunpack.c.h.b16 %v904
    %v1091 = vunpack.c.l.b16 %v905
    %v1092 = vunpack.c.h.b16 %v905
    %v1093 = vunpack.c.l.b16 %v906
    %v1094 = vunpack.c.h.b16 %v906
    %v1095 = vunpack.c.l.b16 %v907
    %v1096 = vunpack.c.h.b16 %v907
    %v1097 = vunpack.c.l.b16 %v908
    %v1098 = vunpack.c.h.b16 %v908
    %v1099 = vunpack.c.l.b16 %v909
    %v1100 = vunpack.c.h.b16 %v909
    %v1101 = vunpack.c.l.b16 %v910
    %v1102 = vunpack.c.h.b16 %v910
    %v1103 = vunpack.c.l.b16 %v911
    %v1104 = vunpack.c.h.b16 %v911
    %v1105 = vunpack.c.l.b16 %v912
    %v1106 = vunpack.c.h.b16 %v912
    %v1107 = vunpack.c.l.b16 %v913
    %v1108 = vunpack.c.h.b16 %v913
    %v1109 = vunpack.c.l.b16 %v914
    %v1110 = vunpack.c.h.b16 %v914
    %v1111 = vunpack.c.l.b16 %v915
    %v1112 = vunpack.c.h.b16 %v915
    %v1113 = vunpack.c.l.b16 %v916
    %v1114 = vunpack.c.h.b16 %v916
    %v1115 = vunpack.c.l.b16 %v917
    %v1116 = vunpack.c.h.b16 %v917
    %v1117 = vunpack.c.l.b16 %v918
    %v1118 = vunpack.c.h.b16 %v918
    %v1119 = vpack.c.b16 %v1029, %v1023
    %v1120 = vpack.c.b16 %v1030, %v1024
    %v1121 = vpack.c.b16 %v1031, %v1025
    %v1122 = vpack.c.b16 %v1032, %v1026
    %v1123 = vpack.c.b16 %v1033, %v1027
    %v1124 = vpack.c.b16 %v1034, %v1028
    %v1125 = vpack.c.b16 %v1041, %v1035
    %v1126 = vpack.c.b16 %v1042, %v1036
    %v1127 = vpack.c.b16 %v1043, %v1037
    %v1128 = vpack.c.b16 %v1044, %v1038
    %v1129 = vpack.c.b16 %v1045, %v1039
    %v1130 = vpack.c.b16 %v1046, %v1040
    %v1131 = vpack.c.b16 %v1053, %v1047
    %v1132 = vpack.c.b16 %v1054, %v1048
    %v1133 = vpack.c.b16 %v1055, %v1049
    %v1134 = vpack.c.b16 %v1056, %v1050
    %v1135 = vpack.c.b16 %v1057, %v1051
    %v1136 = vpack.c.b16 %v1058, %v1052
    %v1137 = vpack.c.b16 %v1065, %v1059
    %v1138 = vpack.c.b16 %v1066, %v1060
    %v1139 = vpack.c.b16 %v1067, %v1061
    %v1140 = vpack.c.b16 %v1068, %v1062
    %v1141 = vpack.c.b16 %v1069, %v1063
    %v1142 = vpack.c.b16 %v1070, %v1064
    %v1143 = vpack.c.b16 %v1077, %v1071
    %v1144 = vpack.c.b16 %v1078, %v1072
    %v1145 = vpack.c.b16 %v1079, %v1073
    %v1146 = vpack.c.b16 %v1080, %v1074
    %v1147 = vpack.c.b16 %v1081, %v1075
    %v1148 = vpack.c.b16 %v1082, %v1076
    %v1149 = vpack.c.b16 %v1089, %v1083
    %v1150 = vpack.c.b16 %v1090, %v1084
    %v1151 = vpack.c.b16 %v1091, %v1085
    %v1152 = vpack.c.b16 %v1092, %v1086
    %v1153 = vpack.c.b16 %v1093, %v1087
    %v1154 = vpack.c.b16 %v1094, %v1088
    %v1155 = vpack.c.b16 %v1101, %v1095
    %v1156 = vpack.c.b16 %v1102, %v1096
    %v1157 = vpack.c.b16 %v1103, %v1097
    %v1158 = vpack.c.b16 %v1104, %v1098
    %v1159 = vpack.c.b16 %v1105, %v1099
    %v1160 = vpack.c.b16 %v1106, %v1100
    %v1161 = vpack.c.b16 %v1113, %v1107
    %v1162 = vpack.c.b16 %v1114, %v1108
    %v1163 = vpack.c.b16 %v1115, %v1109
    %v1164 = vpack.c.b16 %v1116, %v1110
    %v1165 = vpack.c.b16 %v1117, %v1111
    %v1166 = vpack.c.b16 %v1118, %v1112
    %1215 = vmatprep.subr.bf16.mxu0 %v1162
    %1216 = vmatpush1.bf16.msra.mxu0 %v1161
    %1217 = vmatprep.subr.bf16.mxu0 %v1156
    %1218 = vmatpush1.bf16.msra.mxu0 %v1155
    %1219 = vmatprep.subr.bf16.mxu0 %v1150
    %1220 = vmatpush1.bf16.msra.mxu0 %v1149
    %1221 = vmatprep.subr.bf16.mxu0 %v1144
    %1222 = vmatpush1.bf16.msra.mxu0 %v1143
    %1223 = vmatprep.subr.bf16.mxu0 %v1138
    %1224 = vmatpush1.bf16.msra.mxu0 %v1137
    %1225 = vmatprep.subr.bf16.mxu0 %v1132
    %1226 = vmatpush1.bf16.msra.mxu0 %v1131
    %1227 = vmatprep.subr.bf16.mxu0 %v1126
    %1228 = vmatpush1.bf16.msra.mxu0 %v1125
    %1229 = vmatprep.subr.bf16.mxu0 %v1120
    %1230 = vmatpush1.bf16.msra.mxu0 %v1119
    %1231 = vmatprep.subr.bf16.mxu0 0
    %1232 = vmatpush2.bf16.msra.mxu0 0
    %1233 = vmatprep.subr.bf16.mxu0 0
    %1234 = vmatpush2.bf16.msra.mxu0 0
    %1235 = vmatprep.subr.bf16.mxu0 0
    %1236 = vmatpush2.bf16.msra.mxu0 0
    %1237 = vmatprep.subr.bf16.mxu0 0
    %1238 = vmatpush2.bf16.msra.mxu0 0
    %1239 = vmatprep.subr.bf16.mxu0 0
    %1240 = vmatpush2.bf16.msra.mxu0 0
    %1241 = vmatprep.subr.bf16.mxu0 0
    %1242 = vmatpush2.bf16.msra.mxu0 0
    %1243 = vmatprep.subr.bf16.mxu0 0
    %1244 = vmatpush2.bf16.msra.mxu0 0
    %1245 = vmatprep.subr.bf16.mxu0 0
    %1246 = vmatpush2.bf16.msra.mxu0 0
    %1247 = vmatprep.mubr.bf16.mxu0 0
    %1248 = vmatmul.mubr.bf16.gmra.mxu0 %v967
    %v1249 = vpop.f32.mrf.mxu0
    %v1250 = vadd.f32 %v924, %v1249
    %v1251 = vpop.f32.mrf.mxu0
    %v1252 = vadd.f32 %v928, %v1251
    %v1253 = vpop.f32.mrf.mxu0
    %v1254 = vadd.f32 %v924, %v1253
    %v1255 = vpop.f32.mrf.mxu0
    %v1256 = vadd.f32 %v928, %v1255
    %1257 = vmatprep.mubr.bf16.mxu0 0
    %1258 = vmatmul.mubr.bf16.gmra.mxu0 %v968
    %v1259 = vpop.f32.mrf.mxu0
    %v1260 = vadd.f32 %v924, %v1259
    %v1261 = vpop.f32.mrf.mxu0
    %v1262 = vadd.f32 %v928, %v1261
    %v1263 = vpop.f32.mrf.mxu0
    %v1264 = vadd.f32 %v924, %v1263
    %v1265 = vpop.f32.mrf.mxu0
    %v1266 = vadd.f32 %v928, %v1265
    %1267 = vmatprep.mubr.bf16.mxu0 0
    %1268 = vmatmul.mubr.bf16.gmra.mxu0 %v969
    %v1269 = vpop.f32.mrf.mxu0
    %v1270 = vadd.f32 %v924, %v1269
    %v1271 = vpop.f32.mrf.mxu0
    %v1272 = vadd.f32 %v928, %v1271
    %v1273 = vpop.f32.mrf.mxu0
    %v1274 = vadd.f32 %v924, %v1273
    %v1275 = vpop.f32.mrf.mxu0
    %v1276 = vadd.f32 %v928, %v1275
    %1277 = vmatprep.mubr.bf16.mxu0 0
    %1278 = vmatmul.mubr.bf16.gmra.mxu0 %v970
    %v1279 = vpop.f32.mrf.mxu0
    %v1280 = vadd.f32 %v924, %v1279
    %v1281 = vpop.f32.mrf.mxu0
    %v1282 = vadd.f32 %v928, %v1281
    %v1283 = vpop.f32.mrf.mxu0
    %v1284 = vadd.f32 %v924, %v1283
    %v1285 = vpop.f32.mrf.mxu0
    %v1286 = vadd.f32 %v928, %v1285
    %1287 = vdwg.mxu0
    %1288 = vmatprep.subr.bf16.mxu0 %v1164
    %1289 = vmatpush1.bf16.msra.mxu0 %v1163
    %1290 = vmatprep.subr.bf16.mxu0 %v1158
    %1291 = vmatpush1.bf16.msra.mxu0 %v1157
    %1292 = vmatprep.subr.bf16.mxu0 %v1152
    %1293 = vmatpush1.bf16.msra.mxu0 %v1151
    %1294 = vmatprep.subr.bf16.mxu0 %v1146
    %1295 = vmatpush1.bf16.msra.mxu0 %v1145
    %1296 = vmatprep.subr.bf16.mxu0 %v1140
    %1297 = vmatpush1.bf16.msra.mxu0 %v1139
    %1298 = vmatprep.subr.bf16.mxu0 %v1134
    %1299 = vmatpush1.bf16.msra.mxu0 %v1133
    %1300 = vmatprep.subr.bf16.mxu0 %v1128
    %1301 = vmatpush1.bf16.msra.mxu0 %v1127
    %1302 = vmatprep.subr.bf16.mxu0 %v1122
    %1303 = vmatpush1.bf16.msra.mxu0 %v1121
    %1304 = vmatprep.subr.bf16.mxu0 0
    %1305 = vmatpush2.bf16.msra.mxu0 0
    %1306 = vmatprep.subr.bf16.mxu0 0
    %1307 = vmatpush2.bf16.msra.mxu0 0
    %1308 = vmatprep.subr.bf16.mxu0 0
    %1309 = vmatpush2.bf16.msra.mxu0 0
    %1310 = vmatprep.subr.bf16.mxu0 0
    %1311 = vmatpush2.bf16.msra.mxu0 0
    %1312 = vmatprep.subr.bf16.mxu0 0
    %1313 = vmatpush2.bf16.msra.mxu0 0
    %1314 = vmatprep.subr.bf16.mxu0 0
    %1315 = vmatpush2.bf16.msra.mxu0 0
    %1316 = vmatprep.subr.bf16.mxu0 0
    %1317 = vmatpush2.bf16.msra.mxu0 0
    %1318 = vmatprep.subr.bf16.mxu0 0
    %1319 = vmatpush2.bf16.msra.mxu0 0
    %1320 = vmatprep.mubr.bf16.mxu0 0
    %1321 = vmatmul.mubr.bf16.gmra.mxu0 %v967
    %v1322 = vpop.f32.mrf.mxu0
    %v1323 = vadd.f32 %v932, %v1322
    %v1324 = vpop.f32.mrf.mxu0
    %v1325 = vadd.f32 %v936, %v1324
    %v1326 = vpop.f32.mrf.mxu0
    %v1327 = vadd.f32 %v932, %v1326
    %v1328 = vpop.f32.mrf.mxu0
    %v1329 = vadd.f32 %v936, %v1328
    %1330 = vmatprep.mubr.bf16.mxu0 0
    %1331 = vmatmul.mubr.bf16.gmra.mxu0 %v968
    %v1332 = vpop.f32.mrf.mxu0
    %v1333 = vadd.f32 %v932, %v1332
    %v1334 = vpop.f32.mrf.mxu0
    %v1335 = vadd.f32 %v936, %v1334
    %v1336 = vpop.f32.mrf.mxu0
    %v1337 = vadd.f32 %v932, %v1336
    %v1338 = vpop.f32.mrf.mxu0
    %v1339 = vadd.f32 %v936, %v1338
    %1340 = vmatprep.mubr.bf16.mxu0 0
    %1341 = vmatmul.mubr.bf16.gmra.mxu0 %v969
    %v1342 = vpop.f32.mrf.mxu0
    %v1343 = vadd.f32 %v932, %v1342
    %v1344 = vpop.f32.mrf.mxu0
    %v1345 = vadd.f32 %v936, %v1344
    %v1346 = vpop.f32.mrf.mxu0
    %v1347 = vadd.f32 %v932, %v1346
    %v1348 = vpop.f32.mrf.mxu0
    %v1349 = vadd.f32 %v936, %v1348
    %1350 = vmatprep.mubr.bf16.mxu0 0
    %1351 = vmatmul.mubr.bf16.gmra.mxu0 %v970
    %v1352 = vpop.f32.mrf.mxu0
    %v1353 = vadd.f32 %v932, %v1352
    %v1354 = vpop.f32.mrf.mxu0
    %v1355 = vadd.f32 %v936, %v1354
    %v1356 = vpop.f32.mrf.mxu0
    %v1357 = vadd.f32 %v932, %v1356
    %v1358 = vpop.f32.mrf.mxu0
    %v1359 = vadd.f32 %v936, %v1358
    %1360 = vdwg.mxu0
    %1361 = vmatprep.subr.bf16.mxu0 %v1166
    %1362 = vmatpush1.bf16.msra.mxu0 %v1165
    %1363 = vmatprep.subr.bf16.mxu0 %v1160
    %1364 = vmatpush1.bf16.msra.mxu0 %v1159
    %1365 = vmatprep.subr.bf16.mxu0 %v1154
    %1366 = vmatpush1.bf16.msra.mxu0 %v1153
    %1367 = vmatprep.subr.bf16.mxu0 %v1148
    %1368 = vmatpush1.bf16.msra.mxu0 %v1147
    %1369 = vmatprep.subr.bf16.mxu0 %v1142
    %1370 = vmatpush1.bf16.msra.mxu0 %v1141
    %1371 = vmatprep.subr.bf16.mxu0 %v1136
    %1372 = vmatpush1.bf16.msra.mxu0 %v1135
    %1373 = vmatprep.subr.bf16.mxu0 %v1130
    %1374 = vmatpush1.bf16.msra.mxu0 %v1129
    %1375 = vmatprep.subr.bf16.mxu0 %v1124
    %1376 = vmatpush1.bf16.msra.mxu0 %v1123
    %1377 = vmatprep.subr.bf16.mxu0 0
    %1378 = vmatpush2.bf16.msra.mxu0 0
    %1379 = vmatprep.subr.bf16.mxu0 0
    %1380 = vmatpush2.bf16.msra.mxu0 0
    %1381 = vmatprep.subr.bf16.mxu0 0
    %1382 = vmatpush2.bf16.msra.mxu0 0
    %1383 = vmatprep.subr.bf16.mxu0 0
    %1384 = vmatpush2.bf16.msra.mxu0 0
    %1385 = vmatprep.subr.bf16.mxu0 0
    %1386 = vmatpush2.bf16.msra.mxu0 0
    %1387 = vmatprep.subr.bf16.mxu0 0
    %1388 = vmatpush2.bf16.msra.mxu0 0
    %1389 = vmatprep.subr.bf16.mxu0 0
    %1390 = vmatpush2.bf16.msra.mxu0 0
    %1391 = vmatprep.subr.bf16.mxu0 0
    %1392 = vmatpush2.bf16.msra.mxu0 0
    %1393 = vmatprep.mubr.bf16.mxu0 0
    %1394 = vmatmul.mubr.bf16.gmra.mxu0 %v967
    %v1395 = vpop.f32.mrf.mxu0
    %v1396 = vadd.f32 %v940, %v1395
    %v1397 = vpop.f32.mrf.mxu0
    %v1398 = vadd.f32 %v944, %v1397
    %v1399 = vpop.f32.mrf.mxu0
    %v1400 = vadd.f32 %v940, %v1399
    %v1401 = vpop.f32.mrf.mxu0
    %v1402 = vadd.f32 %v944, %v1401
    %1403 = vmatprep.mubr.bf16.mxu0 0
    %1404 = vmatmul.mubr.bf16.gmra.mxu0 %v968
    %v1405 = vpop.f32.mrf.mxu0
    %v1406 = vadd.f32 %v940, %v1405
    %v1407 = vpop.f32.mrf.mxu0
    %v1408 = vadd.f32 %v944, %v1407
    %v1409 = vpop.f32.mrf.mxu0
    %v1410 = vadd.f32 %v940, %v1409
    %v1411 = vpop.f32.mrf.mxu0
    %v1412 = vadd.f32 %v944, %v1411
    %1413 = vmatprep.mubr.bf16.mxu0 0
    %1414 = vmatmul.mubr.bf16.gmra.mxu0 %v969
    %v1415 = vpop.f32.mrf.mxu0
    %v1416 = vadd.f32 %v940, %v1415
    %v1417 = vpop.f32.mrf.mxu0
    %v1418 = vadd.f32 %v944, %v1417
    %v1419 = vpop.f32.mrf.mxu0
    %v1420 = vadd.f32 %v940, %v1419
    %v1421 = vpop.f32.mrf.mxu0
    %v1422 = vadd.f32 %v944, %v1421
    %1423 = vmatprep.mubr.bf16.mxu0 0
    %1424 = vmatmul.mubr.bf16.gmra.mxu0 %v970
    %v1425 = vpop.f32.mrf.mxu0
    %v1426 = vadd.f32 %v940, %v1425
    %v1427 = vpop.f32.mrf.mxu0
    %v1428 = vadd.f32 %v944, %v1427
    %v1429 = vpop.f32.mrf.mxu0
    %v1430 = vadd.f32 %v940, %v1429
    %v1431 = vpop.f32.mrf.mxu0
    %v1432 = vadd.f32 %v944, %v1431
    %1433 = vdwg.mxu0
    %v1434 = vpack.c.bf16 %v1254, %v1250
    %v1435 = vpack.c.bf16 %v1256, %v1252
    %v1436 = vpack.c.bf16 %v1327, %v1323
    %v1437 = vpack.c.bf16 %v1329, %v1325
    %v1438 = vpack.c.bf16 %v1400, %v1396
    %v1439 = vpack.c.bf16 %v1402, %v1398
    %v1440 = vpack.c.bf16 %v1264, %v1260
    %v1441 = vpack.c.bf16 %v1266, %v1262
    %v1442 = vpack.c.bf16 %v1337, %v1333
    %v1443 = vpack.c.bf16 %v1339, %v1335
    %v1444 = vpack.c.bf16 %v1410, %v1406
    %v1445 = vpack.c.bf16 %v1412, %v1408
    %v1446 = vpack.c.bf16 %v1274, %v1270
    %v1447 = vpack.c.bf16 %v1276, %v1272
    %v1448 = vpack.c.bf16 %v1347, %v1343
    %v1449 = vpack.c.bf16 %v1349, %v1345
    %v1450 = vpack.c.bf16 %v1420, %v1416
    %v1451 = vpack.c.bf16 %v1422, %v1418
    %v1452 = vpack.c.bf16 %v1284, %v1280
    %v1453 = vpack.c.bf16 %v1286, %v1282
    %v1454 = vpack.c.bf16 %v1357, %v1353
    %v1455 = vpack.c.bf16 %v1359, %v1355
    %v1456 = vpack.c.bf16 %v1430, %v1426
    %v1457 = vpack.c.bf16 %v1432, %v1428
    %v1482 = vunpack.c.l.b16 %v1434
    %v1483 = vunpack.c.l.b16 %v1435
    %v1484 = vunpack.c.l.b16 %v1436
    %v1485 = vunpack.c.l.b16 %v1437
    %v1486 = vunpack.c.l.b16 %v1438
    %v1487 = vunpack.c.l.b16 %v1439
    %v1488 = vunpack.c.h.b16 %v1434
    %v1489 = vunpack.c.h.b16 %v1435
    %v1490 = vunpack.c.h.b16 %v1436
    %v1491 = vunpack.c.h.b16 %v1437
    %v1492 = vunpack.c.h.b16 %v1438
    %v1493 = vunpack.c.h.b16 %v1439
    %v1494 = vunpack.c.l.b16 %v1440
    %v1495 = vunpack.c.l.b16 %v1441
    %v1496 = vunpack.c.l.b16 %v1442
    %v1497 = vunpack.c.l.b16 %v1443
    %v1498 = vunpack.c.l.b16 %v1444
    %v1499 = vunpack.c.l.b16 %v1445
    %v1500 = vunpack.c.h.b16 %v1440
    %v1501 = vunpack.c.h.b16 %v1441
    %v1502 = vunpack.c.h.b16 %v1442
    %v1503 = vunpack.c.h.b16 %v1443
    %v1504 = vunpack.c.h.b16 %v1444
    %v1505 = vunpack.c.h.b16 %v1445
    %v1506 = vunpack.c.l.b16 %v1446
    %v1507 = vunpack.c.l.b16 %v1447
    %v1508 = vunpack.c.l.b16 %v1448
    %v1509 = vunpack.c.l.b16 %v1449
    %v1510 = vunpack.c.l.b16 %v1450
    %v1511 = vunpack.c.l.b16 %v1451
    %v1512 = vunpack.c.h.b16 %v1446
    %v1513 = vunpack.c.h.b16 %v1447
    %v1514 = vunpack.c.h.b16 %v1448
    %v1515 = vunpack.c.h.b16 %v1449
    %v1516 = vunpack.c.h.b16 %v1450
    %v1517 = vunpack.c.h.b16 %v1451
    %v1518 = vunpack.c.l.b16 %v1452
    %v1519 = vunpack.c.l.b16 %v1453
    %v1520 = vunpack.c.l.b16 %v1454
    %v1521 = vunpack.c.l.b16 %v1455
    %v1522 = vunpack.c.l.b16 %v1456
    %v1523 = vunpack.c.l.b16 %v1457
    %v1524 = vunpack.c.h.b16 %v1452
    %v1525 = vunpack.c.h.b16 %v1453
    %v1526 = vunpack.c.h.b16 %v1454
    %v1527 = vunpack.c.h.b16 %v1455
    %v1528 = vunpack.c.h.b16 %v1456
    %v1529 = vunpack.c.h.b16 %v1457
    %v1530 = vpack.c.b16 %v1483, %v1482
    %v1531 = vpack.c.b16 %v1485, %v1484
    %v1532 = vpack.c.b16 %v1487, %v1486
    %v1533 = vpack.c.b16 %v1489, %v1488
    %v1534 = vpack.c.b16 %v1491, %v1490
    %v1535 = vpack.c.b16 %v1493, %v1492
    %v1536 = vpack.c.b16 %v1495, %v1494
    %v1537 = vpack.c.b16 %v1497, %v1496
    %v1538 = vpack.c.b16 %v1499, %v1498
    %v1539 = vpack.c.b16 %v1501, %v1500
    %v1540 = vpack.c.b16 %v1503, %v1502
    %v1541 = vpack.c.b16 %v1505, %v1504
    %v1542 = vpack.c.b16 %v1507, %v1506
    %v1543 = vpack.c.b16 %v1509, %v1508
    %v1544 = vpack.c.b16 %v1511, %v1510
    %v1545 = vpack.c.b16 %v1513, %v1512
    %v1546 = vpack.c.b16 %v1515, %v1514
    %v1547 = vpack.c.b16 %v1517, %v1516
    %v1548 = vpack.c.b16 %v1519, %v1518
    %v1549 = vpack.c.b16 %v1521, %v1520
    %v1550 = vpack.c.b16 %v1523, %v1522
    %v1551 = vpack.c.b16 %v1525, %v1524
    %v1552 = vpack.c.b16 %v1527, %v1526
    %v1553 = vpack.c.b16 %v1529, %v1528
    %1578 = vst [vmem:[#allocation7] sm:$0xff] %v1530
    %1579 = vst [vmem:[#allocation7 + $0x8] sm:$0xff] %v1531
    %1580 = vst [vmem:[#allocation7 + $0x10] sm:$0xff] %v1532
    %1581 = vst [vmem:[#allocation7 + $0x18] sm:$0xff] %v1533
    %1582 = vst [vmem:[#allocation7 + $0x20] sm:$0xff] %v1534
    %1583 = vst [vmem:[#allocation7 + $0x28] sm:$0xff] %v1535
    %1584 = vst [vmem:[#allocation7 + $0x30] sm:$0xff] %v1536
    %1585 = vst [vmem:[#allocation7 + $0x38] sm:$0xff] %v1537
    %1586 = vst [vmem:[#allocation7 + $0x40] sm:$0xff] %v1538
    %1587 = vst [vmem:[#allocation7 + $0x48] sm:$0xff] %v1539
    %1588 = vst [vmem:[#allocation7 + $0x50] sm:$0xff] %v1540
    %1589 = vst [vmem:[#allocation7 + $0x58] sm:$0xff] %v1541
    %1590 = vst [vmem:[#allocation7 + $0x60] sm:$0xff] %v1542
    %1591 = vst [vmem:[#allocation7 + $0x68] sm:$0xff] %v1543
    %1592 = vst [vmem:[#allocation7 + $0x70] sm:$0xff] %v1544
    %1593 = vst [vmem:[#allocation7 + $0x78] sm:$0xff] %v1545
    %1594 = vst [vmem:[#allocation7 + $0x80] sm:$0xff] %v1546
    %1595 = vst [vmem:[#allocation7 + $0x88] sm:$0xff] %v1547
    %1596 = vst [vmem:[#allocation7 + $0x90] sm:$0xff] %v1548
    %1597 = vst [vmem:[#allocation7 + $0x98] sm:$0xff] %v1549
    %1598 = vst [vmem:[#allocation7 + $0xa0] sm:$0xff] %v1550
    %1599 = vst [vmem:[#allocation7 + $0xa8] sm:$0xff] %v1551
    %1600 = vst [vmem:[#allocation7 + $0xb0] sm:$0xff] %v1552
    %1601 = vst [vmem:[#allocation7 + $0xb8] sm:$0xff] %v1553
    %v1602 = vlaneseq
    %v1603 = vshrl.u32 %v1602, 7
    %v1604 = vadd.s32 %v1603, 8
    %v1605 = vadd.s32 %v1603, 16
    %v1606 = vadd.s32 %v1603, 24
    %v1607 = vadd.s32 %v1603, 32
    %v1608 = vadd.s32 %v1603, 40
    %v1609 = vadd.s32 %v1603, 48
    %v1610 = vadd.s32 %v1603, 56
    %v1611 = vadd.s32 %v1603, 64
    %v1612 = vadd.s32 %v1603, 72
    %v1613 = vadd.s32 %v1603, 80
    %v1614 = vadd.s32 %v1603, 88
    %v1615 = vadd.s32 %v1603, 96
    %v1616 = vadd.s32 %v1603, 104
    %v1617 = vadd.s32 %v1603, 112
    %v1618 = vadd.s32 %v1603, 120
    %v1619 = vlaneseq
    %v1620 = vand.u32 %v1619, 127
    %vm1621 = vcmp.le.s32.totalorder %v1603, %v1620
    %vm1622 = vcmp.le.s32.totalorder %v1604, %v1620
    %vm1623 = vcmp.le.s32.totalorder %v1605, %v1620
    %vm1624 = vcmp.le.s32.totalorder %v1606, %v1620
    %vm1625 = vcmp.le.s32.totalorder %v1607, %v1620
    %vm1626 = vcmp.le.s32.totalorder %v1608, %v1620
    %vm1627 = vcmp.le.s32.totalorder %v1609, %v1620
    %vm1628 = vcmp.le.s32.totalorder %v1610, %v1620
    %vm1629 = vcmp.le.s32.totalorder %v1611, %v1620
    %vm1630 = vcmp.le.s32.totalorder %v1612, %v1620
    %vm1631 = vcmp.le.s32.totalorder %v1613, %v1620
    %vm1632 = vcmp.le.s32.totalorder %v1614, %v1620
    %vm1633 = vcmp.le.s32.totalorder %v1615, %v1620
    %vm1634 = vcmp.le.s32.totalorder %v1616, %v1620
    %vm1635 = vcmp.le.s32.totalorder %v1617, %v1620
    %vm1636 = vcmp.le.s32.totalorder %v1618, %v1620
    %v1637 = vsel %vm1621, 1, 0
    %v1638 = vsel %vm1622, 1, 0
    %v1639 = vsel %vm1623, 1, 0
    %v1640 = vsel %vm1624, 1, 0
    %v1641 = vsel %vm1625, 1, 0
    %v1642 = vsel %vm1626, 1, 0
    %v1643 = vsel %vm1627, 1, 0
    %v1644 = vsel %vm1628, 1, 0
    %v1645 = vsel %vm1629, 1, 0
    %v1646 = vsel %vm1630, 1, 0
    %v1647 = vsel %vm1631, 1, 0
    %v1648 = vsel %vm1632, 1, 0
    %v1649 = vsel %vm1633, 1, 0
    %v1650 = vsel %vm1634, 1, 0
    %v1651 = vsel %vm1635, 1, 0
    %v1652 = vsel %vm1636, 1, 0
    %v1653 = vcvt.s32.f32 %v1637
    %v1654 = vcvt.s32.f32 %v1638
    %v1655 = vcvt.s32.f32 %v1639
    %v1656 = vcvt.s32.f32 %v1640
    %v1657 = vcvt.s32.f32 %v1641
    %v1658 = vcvt.s32.f32 %v1642
    %v1659 = vcvt.s32.f32 %v1643
    %v1660 = vcvt.s32.f32 %v1644
    %v1661 = vcvt.s32.f32 %v1645
    %v1662 = vcvt.s32.f32 %v1646
    %v1663 = vcvt.s32.f32 %v1647
    %v1664 = vcvt.s32.f32 %v1648
    %v1665 = vcvt.s32.f32 %v1649
    %v1666 = vcvt.s32.f32 %v1650
    %v1667 = vcvt.s32.f32 %v1651
    %v1668 = vcvt.s32.f32 %v1652
    %v1669 = vpack.c.bf16 %v1654, %v1653
    %v1670 = vpack.c.bf16 %v1656, %v1655
    %v1671 = vpack.c.bf16 %v1658, %v1657
    %v1672 = vpack.c.bf16 %v1660, %v1659
    %v1673 = vpack.c.bf16 %v1662, %v1661
    %v1674 = vpack.c.bf16 %v1664, %v1663
    %v1675 = vpack.c.bf16 %v1666, %v1665
    %v1676 = vpack.c.bf16 %v1668, %v1667
    %vm1677 = vcmp.lt.s32.totalorder %v1620, 37
    %v1678 = vld [vmem:[#allocation2] sm:$0xff]
    %v1679 = vld [vmem:[#allocation3] sm:$0xff]
    %v1680 = vld [vmem:[#allocation4] sm:$0xff]
    %v1681 = vld [vmem:[#allocation5] sm:$0xff]
    loop: start=0, step=1, limit=8
    $region62: #{tpu_custom_call.1} parent=1 // loop_pre_header
      _
    $region63: #{tpu_custom_call.1} parent=1 // loop_header
      %s1683 = sphi 0, %s1687
      %p1684 = scmp.ge.s32.totalorder %s1683, 8
      %v1688 = vphi %v1678, %v2251
      %v1689 = vphi %v1679, %v2245
      %v1690 = vphi %v1680, %v2812
      %v1691 = vphi %v1681, %v2806
    $region64: #{tpu_custom_call.1} parent=1 // loop_header_branch
      %1686 = sbr.rel (%p1684) target = $region68
    $region65: #{tpu_custom_call.1} parent=1 // loop_body
      %s1692 = smul.u32 %s1683, 6
      %s1693 = smul.addr %s1692, 4
      %s1694 = scalar_lea.vmem [#allocation6], %s1693
      %v1695 = vld [vmem:[%s1694] sm:$0xff]
      %v1696 = vld [vmem:[%s1694 + $0x8] sm:$0xff]
      %v1697 = vld [vmem:[%s1694 + $0x10] sm:$0xff]
      %v1698 = vunpack.c.l.bf16 %v1695
      %v1699 = vunpack.c.h.bf16 %v1695
      %v1700 = vunpack.c.l.bf16 %v1696
      %v1701 = vunpack.c.h.bf16 %v1696
      %v1702 = vunpack.c.l.bf16 %v1697
      %v1703 = vunpack.c.h.bf16 %v1697
      %v1704 = vpack.c.bf16 %v1688, %v1688
      %v1705 = vld [vmem:[#allocation16] sm:$0xff]
      %v1706 = vld [vmem:[#allocation16 + $0x8] sm:$0xff]
      %v1707 = vld [vmem:[#allocation16 + $0x10] sm:$0xff]
      %v1708 = vld [vmem:[#allocation16 + $0x18] sm:$0xff]
      %v1709 = vld [vmem:[#allocation16 + $0x20] sm:$0xff]
      %v1710 = vld [vmem:[#allocation16 + $0x28] sm:$0xff]
      %v1711 = vld [vmem:[#allocation16 + $0x30] sm:$0xff]
      %v1712 = vld [vmem:[#allocation16 + $0x38] sm:$0xff]
      %v1713 = vld [vmem:[#allocation16 + $0x40] sm:$0xff]
      %v1714 = vld [vmem:[#allocation16 + $0x48] sm:$0xff]
      %v1715 = vld [vmem:[#allocation16 + $0x50] sm:$0xff]
      %v1716 = vld [vmem:[#allocation16 + $0x58] sm:$0xff]
      %v1717 = vld [vmem:[#allocation16 + $0x60] sm:$0xff]
      %v1718 = vld [vmem:[#allocation16 + $0x68] sm:$0xff]
      %v1719 = vld [vmem:[#allocation16 + $0x70] sm:$0xff]
      %v1720 = vld [vmem:[#allocation16 + $0x78] sm:$0xff]
      %v1721 = vld [vmem:[#allocation16 + $0x80] sm:$0xff]
      %v1722 = vld [vmem:[#allocation16 + $0x88] sm:$0xff]
      %v1723 = vld [vmem:[#allocation16 + $0x90] sm:$0xff]
      %v1724 = vld [vmem:[#allocation16 + $0x98] sm:$0xff]
      %v1725 = vld [vmem:[#allocation16 + $0xa0] sm:$0xff]
      %v1726 = vld [vmem:[#allocation16 + $0xa8] sm:$0xff]
      %v1727 = vld [vmem:[#allocation16 + $0xb0] sm:$0xff]
      %v1728 = vld [vmem:[#allocation16 + $0xb8] sm:$0xff]
      %v1729 = vld [vmem:[#allocation16 + $0xc0] sm:$0xff]
      %v1730 = vld [vmem:[#allocation16 + $0xc8] sm:$0xff]
      %v1731 = vld [vmem:[#allocation16 + $0xd0] sm:$0xff]
      %v1732 = vld [vmem:[#allocation16 + $0xd8] sm:$0xff]
      %v1733 = vld [vmem:[#allocation16 + $0xe0] sm:$0xff]
      %v1734 = vld [vmem:[#allocation16 + $0xe8] sm:$0xff]
      %v1735 = vld [vmem:[#allocation16 + $0xf0] sm:$0xff]
      %v1736 = vld [vmem:[#allocation16 + $0xf8] sm:$0xff]
      %v1737 = vld [vmem:[#allocation16 + $0x100] sm:$0xff]
      %v1738 = vld [vmem:[#allocation16 + $0x108] sm:$0xff]
      %v1739 = vld [vmem:[#allocation16 + $0x110] sm:$0xff]
      %v1740 = vld [vmem:[#allocation16 + $0x118] sm:$0xff]
      %v1741 = vld [vmem:[#allocation16 + $0x120] sm:$0xff]
      %v1742 = vld [vmem:[#allocation16 + $0x128] sm:$0xff]
      %v1743 = vld [vmem:[#allocation16 + $0x130] sm:$0xff]
      %v1744 = vld [vmem:[#allocation16 + $0x138] sm:$0xff]
      %v1745 = vld [vmem:[#allocation16 + $0x140] sm:$0xff]
      %v1746 = vld [vmem:[#allocation16 + $0x148] sm:$0xff]
      %v1747 = vld [vmem:[#allocation16 + $0x150] sm:$0xff]
      %v1748 = vld [vmem:[#allocation16 + $0x158] sm:$0xff]
      %v1749 = vld [vmem:[#allocation16 + $0x160] sm:$0xff]
      %v1750 = vld [vmem:[#allocation16 + $0x168] sm:$0xff]
      %v1751 = vld [vmem:[#allocation16 + $0x170] sm:$0xff]
      %v1752 = vld [vmem:[#allocation16 + $0x178] sm:$0xff]
      %v1801 = vunpack.c.l.b16 %v1705
      %v1802 = vunpack.c.h.b16 %v1705
      %v1803 = vunpack.c.l.b16 %v1706
      %v1804 = vunpack.c.h.b16 %v1706
      %v1805 = vunpack.c.l.b16 %v1707
      %v1806 = vunpack.c.h.b16 %v1707
      %v1807 = vunpack.c.l.b16 %v1708
      %v1808 = vunpack.c.h.b16 %v1708
      %v1809 = vunpack.c.l.b16 %v1709
      %v1810 = vunpack.c.h.b16 %v1709
      %v1811 = vunpack.c.l.b16 %v1710
      %v1812 = vunpack.c.h.b16 %v1710
      %v1813 = vunpack.c.l.b16 %v1711
      %v1814 = vunpack.c.h.b16 %v1711
      %v1815 = vunpack.c.l.b16 %v1712
      %v1816 = vunpack.c.h.b16 %v1712
      %v1817 = vunpack.c.l.b16 %v1713
      %v1818 = vunpack.c.h.b16 %v1713
      %v1819 = vunpack.c.l.b16 %v1714
      %v1820 = vunpack.c.h.b16 %v1714
      %v1821 = vunpack.c.l.b16 %v1715
      %v1822 = vunpack.c.h.b16 %v1715
      %v1823 = vunpack.c.l.b16 %v1716
      %v1824 = vunpack.c.h.b16 %v1716
      %v1825 = vunpack.c.l.b16 %v1717
      %v1826 = vunpack.c.h.b16 %v1717
      %v1827 = vunpack.c.l.b16 %v1718
      %v1828 = vunpack.c.h.b16 %v1718
      %v1829 = vunpack.c.l.b16 %v1719
      %v1830 = vunpack.c.h.b16 %v1719
      %v1831 = vunpack.c.l.b16 %v1720
      %v1832 = vunpack.c.h.b16 %v1720
      %v1833 = vunpack.c.l.b16 %v1721
      %v1834 = vunpack.c.h.b16 %v1721
      %v1835 = vunpack.c.l.b16 %v1722
      %v1836 = vunpack.c.h.b16 %v1722
      %v1837 = vunpack.c.l.b16 %v1723
      %v1838 = vunpack.c.h.b16 %v1723
      %v1839 = vunpack.c.l.b16 %v1724
      %v1840 = vunpack.c.h.b16 %v1724
      %v1841 = vunpack.c.l.b16 %v1725
      %v1842 = vunpack.c.h.b16 %v1725
      %v1843 = vunpack.c.l.b16 %v1726
      %v1844 = vunpack.c.h.b16 %v1726
      %v1845 = vunpack.c.l.b16 %v1727
      %v1846 = vunpack.c.h.b16 %v1727
      %v1847 = vunpack.c.l.b16 %v1728
      %v1848 = vunpack.c.h.b16 %v1728
      %v1849 = vunpack.c.l.b16 %v1729
      %v1850 = vunpack.c.h.b16 %v1729
      %v1851 = vunpack.c.l.b16 %v1730
      %v1852 = vunpack.c.h.b16 %v1730
      %v1853 = vunpack.c.l.b16 %v1731
      %v1854 = vunpack.c.h.b16 %v1731
      %v1855 = vunpack.c.l.b16 %v1732
      %v1856 = vunpack.c.h.b16 %v1732
      %v1857 = vunpack.c.l.b16 %v1733
      %v1858 = vunpack.c.h.b16 %v1733
      %v1859 = vunpack.c.l.b16 %v1734
      %v1860 = vunpack.c.h.b16 %v1734
      %v1861 = vunpack.c.l.b16 %v1735
      %v1862 = vunpack.c.h.b16 %v1735
      %v1863 = vunpack.c.l.b16 %v1736
      %v1864 = vunpack.c.h.b16 %v1736
      %v1865 = vunpack.c.l.b16 %v1737
      %v1866 = vunpack.c.h.b16 %v1737
      %v1867 = vunpack.c.l.b16 %v1738
      %v1868 = vunpack.c.h.b16 %v1738
      %v1869 = vunpack.c.l.b16 %v1739
      %v1870 = vunpack.c.h.b16 %v1739
      %v1871 = vunpack.c.l.b16 %v1740
      %v1872 = vunpack.c.h.b16 %v1740
      %v1873 = vunpack.c.l.b16 %v1741
      %v1874 = vunpack.c.h.b16 %v1741
      %v1875 = vunpack.c.l.b16 %v1742
      %v1876 = vunpack.c.h.b16 %v1742
      %v1877 = vunpack.c.l.b16 %v1743
      %v1878 = vunpack.c.h.b16 %v1743
      %v1879 = vunpack.c.l.b16 %v1744
      %v1880 = vunpack.c.h.b16 %v1744
      %v1881 = vunpack.c.l.b16 %v1745
      %v1882 = vunpack.c.h.b16 %v1745
      %v1883 = vunpack.c.l.b16 %v1746
      %v1884 = vunpack.c.h.b16 %v1746
      %v1885 = vunpack.c.l.b16 %v1747
      %v1886 = vunpack.c.h.b16 %v1747
      %v1887 = vunpack.c.l.b16 %v1748
      %v1888 = vunpack.c.h.b16 %v1748
      %v1889 = vunpack.c.l.b16 %v1749
      %v1890 = vunpack.c.h.b16 %v1749
      %v1891 = vunpack.c.l.b16 %v1750
      %v1892 = vunpack.c.h.b16 %v1750
      %v1893 = vunpack.c.l.b16 %v1751
      %v1894 = vunpack.c.h.b16 %v1751
      %v1895 = vunpack.c.l.b16 %v1752
      %v1896 = vunpack.c.h.b16 %v1752
      %v1897 = vpack.c.b16 %v1807, %v1801
      %v1898 = vpack.c.b16 %v1808, %v1802
      %v1899 = vpack.c.b16 %v1809, %v1803
      %v1900 = vpack.c.b16 %v1810, %v1804
      %v1901 = vpack.c.b16 %v1811, %v1805
      %v1902 = vpack.c.b16 %v1812, %v1806
      %v1903 = vpack.c.b16 %v1819, %v1813
      %v1904 = vpack.c.b16 %v1820, %v1814
      %v1905 = vpack.c.b16 %v1821, %v1815
      %v1906 = vpack.c.b16 %v1822, %v1816
      %v1907 = vpack.c.b16 %v1823, %v1817
      %v1908 = vpack.c.b16 %v1824, %v1818
      %v1909 = vpack.c.b16 %v1831, %v1825
      %v1910 = vpack.c.b16 %v1832, %v1826
      %v1911 = vpack.c.b16 %v1833, %v1827
      %v1912 = vpack.c.b16 %v1834, %v1828
      %v1913 = vpack.c.b16 %v1835, %v1829
      %v1914 = vpack.c.b16 %v1836, %v1830
      %v1915 = vpack.c.b16 %v1843, %v1837
      %v1916 = vpack.c.b16 %v1844, %v1838
      %v1917 = vpack.c.b16 %v1845, %v1839
      %v1918 = vpack.c.b16 %v1846, %v1840
      %v1919 = vpack.c.b16 %v1847, %v1841
      %v1920 = vpack.c.b16 %v1848, %v1842
      %v1921 = vpack.c.b16 %v1855, %v1849
      %v1922 = vpack.c.b16 %v1856, %v1850
      %v1923 = vpack.c.b16 %v1857, %v1851
      %v1924 = vpack.c.b16 %v1858, %v1852
      %v1925 = vpack.c.b16 %v1859, %v1853
      %v1926 = vpack.c.b16 %v1860, %v1854
      %v1927 = vpack.c.b16 %v1867, %v1861
      %v1928 = vpack.c.b16 %v1868, %v1862
      %v1929 = vpack.c.b16 %v1869, %v1863
      %v1930 = vpack.c.b16 %v1870, %v1864
      %v1931 = vpack.c.b16 %v1871, %v1865
      %v1932 = vpack.c.b16 %v1872, %v1866
      %v1933 = vpack.c.b16 %v1879, %v1873
      %v1934 = vpack.c.b16 %v1880, %v1874
      %v1935 = vpack.c.b16 %v1881, %v1875
      %v1936 = vpack.c.b16 %v1882, %v1876
      %v1937 = vpack.c.b16 %v1883, %v1877
      %v1938 = vpack.c.b16 %v1884, %v1878
      %v1939 = vpack.c.b16 %v1891, %v1885
      %v1940 = vpack.c.b16 %v1892, %v1886
      %v1941 = vpack.c.b16 %v1893, %v1887
      %v1942 = vpack.c.b16 %v1894, %v1888
      %v1943 = vpack.c.b16 %v1895, %v1889
      %v1944 = vpack.c.b16 %v1896, %v1890
      %1993 = vmatprep.subr.bf16.mxu0 %v1940
      %1994 = vmatpush1.bf16.msra.mxu0 %v1939
      %1995 = vmatprep.subr.bf16.mxu0 %v1934
      %1996 = vmatpush1.bf16.msra.mxu0 %v1933
      %1997 = vmatprep.subr.bf16.mxu0 %v1928
      %1998 = vmatpush1.bf16.msra.mxu0 %v1927
      %1999 = vmatprep.subr.bf16.mxu0 %v1922
      %2000 = vmatpush1.bf16.msra.mxu0 %v1921
      %2001 = vmatprep.subr.bf16.mxu0 %v1916
      %2002 = vmatpush1.bf16.msra.mxu0 %v1915
      %2003 = vmatprep.subr.bf16.mxu0 %v1910
      %2004 = vmatpush1.bf16.msra.mxu0 %v1909
      %2005 = vmatprep.subr.bf16.mxu0 %v1904
      %2006 = vmatpush1.bf16.msra.mxu0 %v1903
      %2007 = vmatprep.subr.bf16.mxu0 %v1898
      %2008 = vmatpush1.bf16.msra.mxu0 %v1897
      %2009 = vmatprep.subr.bf16.mxu0 0
      %2010 = vmatpush2.bf16.msra.mxu0 0
      %2011 = vmatprep.subr.bf16.mxu0 0
      %2012 = vmatpush2.bf16.msra.mxu0 0
      %2013 = vmatprep.subr.bf16.mxu0 0
      %2014 = vmatpush2.bf16.msra.mxu0 0
      %2015 = vmatprep.subr.bf16.mxu0 0
      %2016 = vmatpush2.bf16.msra.mxu0 0
      %2017 = vmatprep.subr.bf16.mxu0 0
      %2018 = vmatpush2.bf16.msra.mxu0 0
      %2019 = vmatprep.subr.bf16.mxu0 0
      %2020 = vmatpush2.bf16.msra.mxu0 0
      %2021 = vmatprep.subr.bf16.mxu0 0
      %2022 = vmatpush2.bf16.msra.mxu0 0
      %2023 = vmatprep.subr.bf16.mxu0 0
      %2024 = vmatpush2.bf16.msra.mxu0 0
      %2025 = vmatprep.mubr.bf16.mxu0 0
      %2026 = vmatmul.mubr.bf16.gmra.mxu0 %v1704
      %v2027 = vpop.f32.mrf.mxu0
      %v2028 = vadd.f32 0.0, %v2027
      %v2029 = vpop.f32.mrf.mxu0
      %v2030 = vadd.f32 0.0, %v2029
      %v2031 = vpop.f32.mrf.mxu0
      %v2032 = vpop.f32.mrf.mxu0
      %2033 = vdwg.mxu0
      %2034 = vmatprep.subr.bf16.mxu0 %v1942
      %2035 = vmatpush1.bf16.msra.mxu0 %v1941
      %2036 = vmatprep.subr.bf16.mxu0 %v1936
      %2037 = vmatpush1.bf16.msra.mxu0 %v1935
      %2038 = vmatprep.subr.bf16.mxu0 %v1930
      %2039 = vmatpush1.bf16.msra.mxu0 %v1929
      %2040 = vmatprep.subr.bf16.mxu0 %v1924
      %2041 = vmatpush1.bf16.msra.mxu0 %v1923
      %2042 = vmatprep.subr.bf16.mxu0 %v1918
      %2043 = vmatpush1.bf16.msra.mxu0 %v1917
      %2044 = vmatprep.subr.bf16.mxu0 %v1912
      %2045 = vmatpush1.bf16.msra.mxu0 %v1911
      %2046 = vmatprep.subr.bf16.mxu0 %v1906
      %2047 = vmatpush1.bf16.msra.mxu0 %v1905
      %2048 = vmatprep.subr.bf16.mxu0 %v1900
      %2049 = vmatpush1.bf16.msra.mxu0 %v1899
      %2050 = vmatprep.subr.bf16.mxu0 0
      %2051 = vmatpush2.bf16.msra.mxu0 0
      %2052 = vmatprep.subr.bf16.mxu0 0
      %2053 = vmatpush2.bf16.msra.mxu0 0
      %2054 = vmatprep.subr.bf16.mxu0 0
      %2055 = vmatpush2.bf16.msra.mxu0 0
      %2056 = vmatprep.subr.bf16.mxu0 0
      %2057 = vmatpush2.bf16.msra.mxu0 0
      %2058 = vmatprep.subr.bf16.mxu0 0
      %2059 = vmatpush2.bf16.msra.mxu0 0
      %2060 = vmatprep.subr.bf16.mxu0 0
      %2061 = vmatpush2.bf16.msra.mxu0 0
      %2062 = vmatprep.subr.bf16.mxu0 0
      %2063 = vmatpush2.bf16.msra.mxu0 0
      %2064 = vmatprep.subr.bf16.mxu0 0
      %2065 = vmatpush2.bf16.msra.mxu0 0
      %2066 = vmatprep.mubr.bf16.mxu0 0
      %2067 = vmatmul.mubr.bf16.gmra.mxu0 %v1704
      %v2068 = vpop.f32.mrf.mxu0
      %v2069 = vadd.f32 0.0, %v2068
      %v2070 = vpop.f32.mrf.mxu0
      %v2071 = vadd.f32 0.0, %v2070
      %v2072 = vpop.f32.mrf.mxu0
      %v2073 = vpop.f32.mrf.mxu0
      %2074 = vdwg.mxu0
      %2075 = vmatprep.subr.bf16.mxu0 %v1944
      %2076 = vmatpush1.bf16.msra.mxu0 %v1943
      %2077 = vmatprep.subr.bf16.mxu0 %v1938
      %2078 = vmatpush1.bf16.msra.mxu0 %v1937
      %2079 = vmatprep.subr.bf16.mxu0 %v1932
      %2080 = vmatpush1.bf16.msra.mxu0 %v1931
      %2081 = vmatprep.subr.bf16.mxu0 %v1926
      %2082 = vmatpush1.bf16.msra.mxu0 %v1925
      %2083 = vmatprep.subr.bf16.mxu0 %v1920
      %2084 = vmatpush1.bf16.msra.mxu0 %v1919
      %2085 = vmatprep.subr.bf16.mxu0 %v1914
      %2086 = vmatpush1.bf16.msra.mxu0 %v1913
      %2087 = vmatprep.subr.bf16.mxu0 %v1908
      %2088 = vmatpush1.bf16.msra.mxu0 %v1907
      %2089 = vmatprep.subr.bf16.mxu0 %v1902
      %2090 = vmatpush1.bf16.msra.mxu0 %v1901
      %2091 = vmatprep.subr.bf16.mxu0 0
      %2092 = vmatpush2.bf16.msra.mxu0 0
      %2093 = vmatprep.subr.bf16.mxu0 0
      %2094 = vmatpush2.bf16.msra.mxu0 0
      %2095 = vmatprep.subr.bf16.mxu0 0
      %2096 = vmatpush2.bf16.msra.mxu0 0
      %2097 = vmatprep.subr.bf16.mxu0 0
      %2098 = vmatpush2.bf16.msra.mxu0 0
      %2099 = vmatprep.subr.bf16.mxu0 0
      %2100 = vmatpush2.bf16.msra.mxu0 0
      %2101 = vmatprep.subr.bf16.mxu0 0
      %2102 = vmatpush2.bf16.msra.mxu0 0
      %2103 = vmatprep.subr.bf16.mxu0 0
      %2104 = vmatpush2.bf16.msra.mxu0 0
      %2105 = vmatprep.subr.bf16.mxu0 0
      %2106 = vmatpush2.bf16.msra.mxu0 0
      %2107 = vmatprep.mubr.bf16.mxu0 0
      %2108 = vmatmul.mubr.bf16.gmra.mxu0 %v1704
      %v2109 = vpop.f32.mrf.mxu0
      %v2110 = vadd.f32 0.0, %v2109
      %v2111 = vpop.f32.mrf.mxu0
      %v2112 = vadd.f32 0.0, %v2111
      %v2113 = vpop.f32.mrf.mxu0
      %v2114 = vpop.f32.mrf.mxu0
      %2115 = vdwg.mxu0
      %v2116 = vadd.f32 %v1698, %v2028
      %v2117 = vadd.f32 %v1699, %v2030
      %v2118 = vadd.f32 %v1700, %v2069
      %v2119 = vadd.f32 %v1701, %v2071
      %v2120 = vadd.f32 %v1702, %v2110
      %v2121 = vadd.f32 %v1703, %v2112
      %v2122 = vsel %vm1677, 1, 0
      %vm2123 = vcmp.eq.s32.totalorder %v2122, 1
      %v2124 = vsel %vm2123, %v2116, -1e+30
      %2125 = vmax.xlane.f32.xlu0 %v2124
      %v2126 = vpop.xlane.xlu0 %2125
      %v2127 = vsub.f32 %v2124, %v2126
      %v2128 = vmul.f32 %v2127, 1.442695
      %v2129 = vpow.pop %v2128
      %2130 = vadd.xlane.f32.xlu0 %v2129
      %v2131 = vpop.xlane.xlu0 %2130
      %v2132 = vrcp.pop %v2131
      %v2133 = vmul.f32 %v2129, %v2132
      %v2134 = vpack.c.bf16 %v2133, %v2133
      %2135 = vmatprep.subr.bf16.mxu0 0
      %2136 = vmatpush1.bf16.msra.mxu0 %v1676
      %2137 = vmatprep.subr.bf16.mxu0 0
      %2138 = vmatpush1.bf16.msra.mxu0 %v1675
      %2139 = vmatprep.subr.bf16.mxu0 0
      %2140 = vmatpush1.bf16.msra.mxu0 %v1674
      %2141 = vmatprep.subr.bf16.mxu0 0
      %2142 = vmatpush1.bf16.msra.mxu0 %v1673
      %2143 = vmatprep.subr.bf16.mxu0 0
      %2144 = vmatpush1.bf16.msra.mxu0 %v1672
      %2145 = vmatprep.subr.bf16.mxu0 0
      %2146 = vmatpush1.bf16.msra.mxu0 %v1671
      %2147 = vmatprep.subr.bf16.mxu0 0
      %2148 = vmatpush1.bf16.msra.mxu0 %v1670
      %2149 = vmatprep.subr.bf16.mxu0 0
      %2150 = vmatpush1.bf16.msra.mxu0 %v1669
      %2151 = vmatprep.subr.bf16.mxu0 0
      %2152 = vmatpush2.bf16.msra.mxu0 0
      %2153 = vmatprep.subr.bf16.mxu0 0
      %2154 = vmatpush2.bf16.msra.mxu0 0
      %2155 = vmatprep.subr.bf16.mxu0 0
      %2156 = vmatpush2.bf16.msra.mxu0 0
      %2157 = vmatprep.subr.bf16.mxu0 0
      %2158 = vmatpush2.bf16.msra.mxu0 0
      %2159 = vmatprep.subr.bf16.mxu0 0
      %2160 = vmatpush2.bf16.msra.mxu0 0
      %2161 = vmatprep.subr.bf16.mxu0 0
      %2162 = vmatpush2.bf16.msra.mxu0 0
      %2163 = vmatprep.subr.bf16.mxu0 0
      %2164 = vmatpush2.bf16.msra.mxu0 0
      %2165 = vmatprep.subr.bf16.mxu0 0
      %2166 = vmatpush2.bf16.msra.mxu0 0
      %2167 = vmatprep.mubr.bf16.mxu0 0
      %2168 = vmatmul.mubr.bf16.gmra.mxu0 %v2134
      %v2169 = vpop.f32.mrf.mxu0
      %v2170 = vadd.f32 0.0, %v2169
      %v2171 = vpop.f32.mrf.mxu0
      %v2172 = vpop.f32.mrf.mxu0
      %v2173 = vpop.f32.mrf.mxu0
      %2174 = vdwg.mxu0
      %v2175 = vsel %vm2123, %v2117, -1e+30
      %2176 = vmax.xlane.f32.xlu0 %v2175
      %v2177 = vpop.xlane.xlu0 %2176
      %v2178 = vsub.f32 %v2175, %v2177
      %v2179 = vmul.f32 %v2178, 1.442695
      %v2180 = vpow.pop %v2179
      %2181 = vadd.xlane.f32.xlu0 %v2180
      %v2182 = vpop.xlane.xlu0 %2181
      %v2183 = vrcp.pop %v2182
      %v2184 = vmul.f32 %v2180, %v2183
      %v2185 = vpack.c.bf16 %v2184, %v2184
      %2186 = vmatprep.subr.bf16.mxu0 0
      %2187 = vmatpush1.bf16.msra.mxu0 %v1676
      %2188 = vmatprep.subr.bf16.mxu0 0
      %2189 = vmatpush1.bf16.msra.mxu0 %v1675
      %2190 = vmatprep.subr.bf16.mxu0 0
      %2191 = vmatpush1.bf16.msra.mxu0 %v1674
      %2192 = vmatprep.subr.bf16.mxu0 0
      %2193 = vmatpush1.bf16.msra.mxu0 %v1673
      %2194 = vmatprep.subr.bf16.mxu0 0
      %2195 = vmatpush1.bf16.msra.mxu0 %v1672
      %2196 = vmatprep.subr.bf16.mxu0 0
      %2197 = vmatpush1.bf16.msra.mxu0 %v1671
      %2198 = vmatprep.subr.bf16.mxu0 0
      %2199 = vmatpush1.bf16.msra.mxu0 %v1670
      %2200 = vmatprep.subr.bf16.mxu0 0
      %2201 = vmatpush1.bf16.msra.mxu0 %v1669
      %2202 = vmatprep.subr.bf16.mxu0 0
      %2203 = vmatpush2.bf16.msra.mxu0 0
      %2204 = vmatprep.subr.bf16.mxu0 0
      %2205 = vmatpush2.bf16.msra.mxu0 0
      %2206 = vmatprep.subr.bf16.mxu0 0
      %2207 = vmatpush2.bf16.msra.mxu0 0
      %2208 = vmatprep.subr.bf16.mxu0 0
      %2209 = vmatpush2.bf16.msra.mxu0 0
      %2210 = vmatprep.subr.bf16.mxu0 0
      %2211 = vmatpush2.bf16.msra.mxu0 0
      %2212 = vmatprep.subr.bf16.mxu0 0
      %2213 = vmatpush2.bf16.msra.mxu0 0
      %2214 = vmatprep.subr.bf16.mxu0 0
      %2215 = vmatpush2.bf16.msra.mxu0 0
      %2216 = vmatprep.subr.bf16.mxu0 0
      %2217 = vmatpush2.bf16.msra.mxu0 0
      %2218 = vmatprep.mubr.bf16.mxu0 0
      %2219 = vmatmul.mubr.bf16.gmra.mxu0 %v2185
      %v2220 = vpop.f32.mrf.mxu0
      %v2221 = vadd.f32 0.0, %v2220
      %v2222 = vpop.f32.mrf.mxu0
      %v2223 = vpop.f32.mrf.mxu0
      %v2224 = vpop.f32.mrf.mxu0
      %2225 = vdwg.mxu0
      %v2226 = vsub.f32 1.0, %v2221
      %v2227 = vmul.f32 %v2170, %v2226
      %v2228 = vmul.f32 %v2118, 0.5
      %v2229 = vtanh.pop %v2228
      %v2230 = vadd.f32 %v2229, 1.0
      %v2231 = vmul.f32 %v2230, 0.5
      %v2232 = vmul.f32 %v2231, %v2227
      %v2233 = vsub.f32 %v2170, %v2227
      %v2234 = vadd.f32 %v2232, %v2233
      %v2235 = vmul.f32 %v2234, %v1689
      %v2236 = vmul.f32 %v2119, 0.5
      %v2237 = vtanh.pop %v2236
      %v2238 = vadd.f32 %v2237, 1.0
      %v2239 = vmul.f32 %v2238, 0.5
      %v2240 = vmul.f32 %v2239, %v2227
      %v2241 = vsub.f32 %v2226, %v2227
      %v2242 = vadd.f32 %v2240, %v2241
      %v2243 = vtanh.pop %v2121
      %v2244 = vmul.f32 %v2242, %v2243
      %v2245 = vadd.f32 %v2235, %v2244
      %v2246 = vmul.f32 %v2120, 0.5
      %v2247 = vtanh.pop %v2246
      %v2248 = vadd.f32 %v2247, 1.0
      %v2249 = vmul.f32 %v2248, 0.5
      %v2250 = vtanh.pop %v2245
      %v2251 = vmul.f32 %v2249, %v2250
      %v2252 = vpack.c.bf16 %v2251, %v2251
      %s2253 = smul.addr %s1683, 4
      %s2254 = scalar_lea.vmem [#allocation19], %s2253
      %2255 = vst [vmem:[%s2254] sm:$0xf] %v2252
      %s2256 = smul.addr %s1692, 4
      %s2257 = scalar_lea.vmem [#allocation7], %s2256
      %v2258 = vld [vmem:[%s2257] sm:$0xff]
      %v2259 = vld [vmem:[%s2257 + $0x8] sm:$0xff]
      %v2260 = vld [vmem:[%s2257 + $0x10] sm:$0xff]
      %v2261 = vunpack.c.l.bf16 %v2258
      %v2262 = vunpack.c.h.bf16 %v2258
      %v2263 = vunpack.c.l.bf16 %v2259
      %v2264 = vunpack.c.h.bf16 %v2259
      %v2265 = vunpack.c.l.bf16 %v2260
      %v2266 = vunpack.c.h.bf16 %v2260
      %v2267 = vpack.c.bf16 %v1690, %v1690
      %v2268 = vld [vmem:[#allocation17] sm:$0xff]
      %v2269 = vld [vmem:[#allocation17 + $0x8] sm:$0xff]
      %v2270 = vld [vmem:[#allocation17 + $0x10] sm:$0xff]
      %v2271 = vld [vmem:[#allocation17 + $0x18] sm:$0xff]
      %v2272 = vld [vmem:[#allocation17 + $0x20] sm:$0xff]
      %v2273 = vld [vmem:[#allocation17 + $0x28] sm:$0xff]
      %v2274 = vld [vmem:[#allocation17 + $0x30] sm:$0xff]
      %v2275 = vld [vmem:[#allocation17 + $0x38] sm:$0xff]
      %v2276 = vld [vmem:[#allocation17 + $0x40] sm:$0xff]
      %v2277 = vld [vmem:[#allocation17 + $0x48] sm:$0xff]
      %v2278 = vld [vmem:[#allocation17 + $0x50] sm:$0xff]
      %v2279 = vld [vmem:[#allocation17 + $0x58] sm:$0xff]
      %v2280 = vld [vmem:[#allocation17 + $0x60] sm:$0xff]
      %v2281 = vld [vmem:[#allocation17 + $0x68] sm:$0xff]
      %v2282 = vld [vmem:[#allocation17 + $0x70] sm:$0xff]
      %v2283 = vld [vmem:[#allocation17 + $0x78] sm:$0xff]
      %v2284 = vld [vmem:[#allocation17 + $0x80] sm:$0xff]
      %v2285 = vld [vmem:[#allocation17 + $0x88] sm:$0xff]
      %v2286 = vld [vmem:[#allocation17 + $0x90] sm:$0xff]
      %v2287 = vld [vmem:[#allocation17 + $0x98] sm:$0xff]
      %v2288 = vld [vmem:[#allocation17 + $0xa0] sm:$0xff]
      %v2289 = vld [vmem:[#allocation17 + $0xa8] sm:$0xff]
      %v2290 = vld [vmem:[#allocation17 + $0xb0] sm:$0xff]
      %v2291 = vld [vmem:[#allocation17 + $0xb8] sm:$0xff]
      %v2292 = vld [vmem:[#allocation17 + $0xc0] sm:$0xff]
      %v2293 = vld [vmem:[#allocation17 + $0xc8] sm:$0xff]
      %v2294 = vld [vmem:[#allocation17 + $0xd0] sm:$0xff]
      %v2295 = vld [vmem:[#allocation17 + $0xd8] sm:$0xff]
      %v2296 = vld [vmem:[#allocation17 + $0xe0] sm:$0xff]
      %v2297 = vld [vmem:[#allocation17 + $0xe8] sm:$0xff]
      %v2298 = vld [vmem:[#allocation17 + $0xf0] sm:$0xff]
      %v2299 = vld [vmem:[#allocation17 + $0xf8] sm:$0xff]
      %v2300 = vld [vmem:[#allocation17 + $0x100] sm:$0xff]
      %v2301 = vld [vmem:[#allocation17 + $0x108] sm:$0xff]
      %v2302 = vld [vmem:[#allocation17 + $0x110] sm:$0xff]
      %v2303 = vld [vmem:[#allocation17 + $0x118] sm:$0xff]
      %v2304 = vld [vmem:[#allocation17 + $0x120] sm:$0xff]
      %v2305 = vld [vmem:[#allocation17 + $0x128] sm:$0xff]
      %v2306 = vld [vmem:[#allocation17 + $0x130] sm:$0xff]
      %v2307 = vld [vmem:[#allocation17 + $0x138] sm:$0xff]
      %v2308 = vld [vmem:[#allocation17 + $0x140] sm:$0xff]
      %v2309 = vld [vmem:[#allocation17 + $0x148] sm:$0xff]
      %v2310 = vld [vmem:[#allocation17 + $0x150] sm:$0xff]
      %v2311 = vld [vmem:[#allocation17 + $0x158] sm:$0xff]
      %v2312 = vld [vmem:[#allocation17 + $0x160] sm:$0xff]
      %v2313 = vld [vmem:[#allocation17 + $0x168] sm:$0xff]
      %v2314 = vld [vmem:[#allocation17 + $0x170] sm:$0xff]
      %v2315 = vld [vmem:[#allocation17 + $0x178] sm:$0xff]
      %v2364 = vunpack.c.l.b16 %v2268
      %v2365 = vunpack.c.h.b16 %v2268
      %v2366 = vunpack.c.l.b16 %v2269
      %v2367 = vunpack.c.h.b16 %v2269
      %v2368 = vunpack.c.l.b16 %v2270
      %v2369 = vunpack.c.h.b16 %v2270
      %v2370 = vunpack.c.l.b16 %v2271
      %v2371 = vunpack.c.h.b16 %v2271
      %v2372 = vunpack.c.l.b16 %v2272
      %v2373 = vunpack.c.h.b16 %v2272
      %v2374 = vunpack.c.l.b16 %v2273
      %v2375 = vunpack.c.h.b16 %v2273
      %v2376 = vunpack.c.l.b16 %v2274
      %v2377 = vunpack.c.h.b16 %v2274
      %v2378 = vunpack.c.l.b16 %v2275
      %v2379 = vunpack.c.h.b16 %v2275
      %v2380 = vunpack.c.l.b16 %v2276
      %v2381 = vunpack.c.h.b16 %v2276
      %v2382 = vunpack.c.l.b16 %v2277
      %v2383 = vunpack.c.h.b16 %v2277
      %v2384 = vunpack.c.l.b16 %v2278
      %v2385 = vunpack.c.h.b16 %v2278
      %v2386 = vunpack.c.l.b16 %v2279
      %v2387 = vunpack.c.h.b16 %v2279
      %v2388 = vunpack.c.l.b16 %v2280
      %v2389 = vunpack.c.h.b16 %v2280
      %v2390 = vunpack.c.l.b16 %v2281
      %v2391 = vunpack.c.h.b16 %v2281
      %v2392 = vunpack.c.l.b16 %v2282
      %v2393 = vunpack.c.h.b16 %v2282
      %v2394 = vunpack.c.l.b16 %v2283
      %v2395 = vunpack.c.h.b16 %v2283
      %v2396 = vunpack.c.l.b16 %v2284
      %v2397 = vunpack.c.h.b16 %v2284
      %v2398 = vunpack.c.l.b16 %v2285
      %v2399 = vunpack.c.h.b16 %v2285
      %v2400 = vunpack.c.l.b16 %v2286
      %v2401 = vunpack.c.h.b16 %v2286
      %v2402 = vunpack.c.l.b16 %v2287
      %v2403 = vunpack.c.h.b16 %v2287
      %v2404 = vunpack.c.l.b16 %v2288
      %v2405 = vunpack.c.h.b16 %v2288
      %v2406 = vunpack.c.l.b16 %v2289
      %v2407 = vunpack.c.h.b16 %v2289
      %v2408 = vunpack.c.l.b16 %v2290
      %v2409 = vunpack.c.h.b16 %v2290
      %v2410 = vunpack.c.l.b16 %v2291
      %v2411 = vunpack.c.h.b16 %v2291
      %v2412 = vunpack.c.l.b16 %v2292
      %v2413 = vunpack.c.h.b16 %v2292
      %v2414 = vunpack.c.l.b16 %v2293
      %v2415 = vunpack.c.h.b16 %v2293
      %v2416 = vunpack.c.l.b16 %v2294
      %v2417 = vunpack.c.h.b16 %v2294
      %v2418 = vunpack.c.l.b16 %v2295
      %v2419 = vunpack.c.h.b16 %v2295
      %v2420 = vunpack.c.l.b16 %v2296
      %v2421 = vunpack.c.h.b16 %v2296
      %v2422 = vunpack.c.l.b16 %v2297
      %v2423 = vunpack.c.h.b16 %v2297
      %v2424 = vunpack.c.l.b16 %v2298
      %v2425 = vunpack.c.h.b16 %v2298
      %v2426 = vunpack.c.l.b16 %v2299
      %v2427 = vunpack.c.h.b16 %v2299
      %v2428 = vunpack.c.l.b16 %v2300
      %v2429 = vunpack.c.h.b16 %v2300
      %v2430 = vunpack.c.l.b16 %v2301
      %v2431 = vunpack.c.h.b16 %v2301
      %v2432 = vunpack.c.l.b16 %v2302
      %v2433 = vunpack.c.h.b16 %v2302
      %v2434 = vunpack.c.l.b16 %v2303
      %v2435 = vunpack.c.h.b16 %v2303
      %v2436 = vunpack.c.l.b16 %v2304
      %v2437 = vunpack.c.h.b16 %v2304
      %v2438 = vunpack.c.l.b16 %v2305
      %v2439 = vunpack.c.h.b16 %v2305
      %v2440 = vunpack.c.l.b16 %v2306
      %v2441 = vunpack.c.h.b16 %v2306
      %v2442 = vunpack.c.l.b16 %v2307
      %v2443 = vunpack.c.h.b16 %v2307
      %v2444 = vunpack.c.l.b16 %v2308
      %v2445 = vunpack.c.h.b16 %v2308
      %v2446 = vunpack.c.l.b16 %v2309
      %v2447 = vunpack.c.h.b16 %v2309
      %v2448 = vunpack.c.l.b16 %v2310
      %v2449 = vunpack.c.h.b16 %v2310
      %v2450 = vunpack.c.l.b16 %v2311
      %v2451 = vunpack.c.h.b16 %v2311
      %v2452 = vunpack.c.l.b16 %v2312
      %v2453 = vunpack.c.h.b16 %v2312
      %v2454 = vunpack.c.l.b16 %v2313
      %v2455 = vunpack.c.h.b16 %v2313
      %v2456 = vunpack.c.l.b16 %v2314
      %v2457 = vunpack.c.h.b16 %v2314
      %v2458 = vunpack.c.l.b16 %v2315
      %v2459 = vunpack.c.h.b16 %v2315
      %v2460 = vpack.c.b16 %v2370, %v2364
      %v2461 = vpack.c.b16 %v2371, %v2365
      %v2462 = vpack.c.b16 %v2372, %v2366
      %v2463 = vpack.c.b16 %v2373, %v2367
      %v2464 = vpack.c.b16 %v2374, %v2368
      %v2465 = vpack.c.b16 %v2375, %v2369
      %v2466 = vpack.c.b16 %v2382, %v2376
      %v2467 = vpack.c.b16 %v2383, %v2377
      %v2468 = vpack.c.b16 %v2384, %v2378
      %v2469 = vpack.c.b16 %v2385, %v2379
      %v2470 = vpack.c.b16 %v2386, %v2380
      %v2471 = vpack.c.b16 %v2387, %v2381
      %v2472 = vpack.c.b16 %v2394, %v2388
      %v2473 = vpack.c.b16 %v2395, %v2389
      %v2474 = vpack.c.b16 %v2396, %v2390
      %v2475 = vpack.c.b16 %v2397, %v2391
      %v2476 = vpack.c.b16 %v2398, %v2392
      %v2477 = vpack.c.b16 %v2399, %v2393
      %v2478 = vpack.c.b16 %v2406, %v2400
      %v2479 = vpack.c.b16 %v2407, %v2401
      %v2480 = vpack.c.b16 %v2408, %v2402
      %v2481 = vpack.c.b16 %v2409, %v2403
      %v2482 = vpack.c.b16 %v2410, %v2404
      %v2483 = vpack.c.b16 %v2411, %v2405
      %v2484 = vpack.c.b16 %v2418, %v2412
      %v2485 = vpack.c.b16 %v2419, %v2413
      %v2486 = vpack.c.b16 %v2420, %v2414
      %v2487 = vpack.c.b16 %v2421, %v2415
      %v2488 = vpack.c.b16 %v2422, %v2416
      %v2489 = vpack.c.b16 %v2423, %v2417
      %v2490 = vpack.c.b16 %v2430, %v2424
      %v2491 = vpack.c.b16 %v2431, %v2425
      %v2492 = vpack.c.b16 %v2432, %v2426
      %v2493 = vpack.c.b16 %v2433, %v2427
      %v2494 = vpack.c.b16 %v2434, %v2428
      %v2495 = vpack.c.b16 %v2435, %v2429
      %v2496 = vpack.c.b16 %v2442, %v2436
      %v2497 = vpack.c.b16 %v2443, %v2437
      %v2498 = vpack.c.b16 %v2444, %v2438
      %v2499 = vpack.c.b16 %v2445, %v2439
      %v2500 = vpack.c.b16 %v2446, %v2440
      %v2501 = vpack.c.b16 %v2447, %v2441
      %v2502 = vpack.c.b16 %v2454, %v2448
      %v2503 = vpack.c.b16 %v2455, %v2449
      %v2504 = vpack.c.b16 %v2456, %v2450
      %v2505 = vpack.c.b16 %v2457, %v2451
      %v2506 = vpack.c.b16 %v2458, %v2452
      %v2507 = vpack.c.b16 %v2459, %v2453
      %2556 = vmatprep.subr.bf16.mxu0 %v2503
      %2557 = vmatpush1.bf16.msra.mxu0 %v2502
      %2558 = vmatprep.subr.bf16.mxu0 %v2497
      %2559 = vmatpush1.bf16.msra.mxu0 %v2496
      %2560 = vmatprep.subr.bf16.mxu0 %v2491
      %2561 = vmatpush1.bf16.msra.mxu0 %v2490
      %2562 = vmatprep.subr.bf16.mxu0 %v2485
      %2563 = vmatpush1.bf16.msra.mxu0 %v2484
      %2564 = vmatprep.subr.bf16.mxu0 %v2479
      %2565 = vmatpush1.bf16.msra.mxu0 %v2478
      %2566 = vmatprep.subr.bf16.mxu0 %v2473
      %2567 = vmatpush1.bf16.msra.mxu0 %v2472
      %2568 = vmatprep.subr.bf16.mxu0 %v2467
      %2569 = vmatpush1.bf16.msra.mxu0 %v2466
      %2570 = vmatprep.subr.bf16.mxu0 %v2461
      %2571 = vmatpush1.bf16.msra.mxu0 %v2460
      %2572 = vmatprep.subr.bf16.mxu0 0
      %2573 = vmatpush2.bf16.msra.mxu0 0
      %2574 = vmatprep.subr.bf16.mxu0 0
      %2575 = vmatpush2.bf16.msra.mxu0 0
      %2576 = vmatprep.subr.bf16.mxu0 0
      %2577 = vmatpush2.bf16.msra.mxu0 0
      %2578 = vmatprep.subr.bf16.mxu0 0
      %2579 = vmatpush2.bf16.msra.mxu0 0
      %2580 = vmatprep.subr.bf16.mxu0 0
      %2581 = vmatpush2.bf16.msra.mxu0 0
      %2582 = vmatprep.subr.bf16.mxu0 0
      %2583 = vmatpush2.bf16.msra.mxu0 0
      %2584 = vmatprep.subr.bf16.mxu0 0
      %2585 = vmatpush2.bf16.msra.mxu0 0
      %2586 = vmatprep.subr.bf16.mxu0 0
      %2587 = vmatpush2.bf16.msra.mxu0 0
      %2588 = vmatprep.mubr.bf16.mxu0 0
      %2589 = vmatmul.mubr.bf16.gmra.mxu0 %v2267
      %v2590 = vpop.f32.mrf.mxu0
      %v2591 = vadd.f32 0.0, %v2590
      %v2592 = vpop.f32.mrf.mxu0
      %v2593 = vadd.f32 0.0, %v2592
      %v2594 = vpop.f32.mrf.mxu0
      %v2595 = vpop.f32.mrf.mxu0
      %2596 = vdwg.mxu0
      %2597 = vmatprep.subr.bf16.mxu0 %v2505
      %2598 = vmatpush1.bf16.msra.mxu0 %v2504
      %2599 = vmatprep.subr.bf16.mxu0 %v2499
      %2600 = vmatpush1.bf16.msra.mxu0 %v2498
      %2601 = vmatprep.subr.bf16.mxu0 %v2493
      %2602 = vmatpush1.bf16.msra.mxu0 %v2492
      %2603 = vmatprep.subr.bf16.mxu0 %v2487
      %2604 = vmatpush1.bf16.msra.mxu0 %v2486
      %2605 = vmatprep.subr.bf16.mxu0 %v2481
      %2606 = vmatpush1.bf16.msra.mxu0 %v2480
      %2607 = vmatprep.subr.bf16.mxu0 %v2475
      %2608 = vmatpush1.bf16.msra.mxu0 %v2474
      %2609 = vmatprep.subr.bf16.mxu0 %v2469
      %2610 = vmatpush1.bf16.msra.mxu0 %v2468
      %2611 = vmatprep.subr.bf16.mxu0 %v2463
      %2612 = vmatpush1.bf16.msra.mxu0 %v2462
      %2613 = vmatprep.subr.bf16.mxu0 0
      %2614 = vmatpush2.bf16.msra.mxu0 0
      %2615 = vmatprep.subr.bf16.mxu0 0
      %2616 = vmatpush2.bf16.msra.mxu0 0
      %2617 = vmatprep.subr.bf16.mxu0 0
      %2618 = vmatpush2.bf16.msra.mxu0 0
      %2619 = vmatprep.subr.bf16.mxu0 0
      %2620 = vmatpush2.bf16.msra.mxu0 0
      %2621 = vmatprep.subr.bf16.mxu0 0
      %2622 = vmatpush2.bf16.msra.mxu0 0
      %2623 = vmatprep.subr.bf16.mxu0 0
      %2624 = vmatpush2.bf16.msra.mxu0 0
      %2625 = vmatprep.subr.bf16.mxu0 0
      %2626 = vmatpush2.bf16.msra.mxu0 0
      %2627 = vmatprep.subr.bf16.mxu0 0
      %2628 = vmatpush2.bf16.msra.mxu0 0
      %2629 = vmatprep.mubr.bf16.mxu0 0
      %2630 = vmatmul.mubr.bf16.gmra.mxu0 %v2267
      %v2631 = vpop.f32.mrf.mxu0
      %v2632 = vadd.f32 0.0, %v2631
      %v2633 = vpop.f32.mrf.mxu0
      %v2634 = vadd.f32 0.0, %v2633
      %v2635 = vpop.f32.mrf.mxu0
      %v2636 = vpop.f32.mrf.mxu0
      %2637 = vdwg.mxu0
      %2638 = vmatprep.subr.bf16.mxu0 %v2507
      %2639 = vmatpush1.bf16.msra.mxu0 %v2506
      %2640 = vmatprep.subr.bf16.mxu0 %v2501
      %2641 = vmatpush1.bf16.msra.mxu0 %v2500
      %2642 = vmatprep.subr.bf16.mxu0 %v2495
      %2643 = vmatpush1.bf16.msra.mxu0 %v2494
      %2644 = vmatprep.subr.bf16.mxu0 %v2489
      %2645 = vmatpush1.bf16.msra.mxu0 %v2488
      %2646 = vmatprep.subr.bf16.mxu0 %v2483
      %2647 = vmatpush1.bf16.msra.mxu0 %v2482
      %2648 = vmatprep.subr.bf16.mxu0 %v2477
      %2649 = vmatpush1.bf16.msra.mxu0 %v2476
      %2650 = vmatprep.subr.bf16.mxu0 %v2471
      %2651 = vmatpush1.bf16.msra.mxu0 %v2470
      %2652 = vmatprep.subr.bf16.mxu0 %v2465
      %2653 = vmatpush1.bf16.msra.mxu0 %v2464
      %2654 = vmatprep.subr.bf16.mxu0 0
      %2655 = vmatpush2.bf16.msra.mxu0 0
      %2656 = vmatprep.subr.bf16.mxu0 0
      %2657 = vmatpush2.bf16.msra.mxu0 0
      %2658 = vmatprep.subr.bf16.mxu0 0
      %2659 = vmatpush2.bf16.msra.mxu0 0
      %2660 = vmatprep.subr.bf16.mxu0 0
      %2661 = vmatpush2.bf16.msra.mxu0 0
      %2662 = vmatprep.subr.bf16.mxu0 0
      %2663 = vmatpush2.bf16.msra.mxu0 0
      %2664 = vmatprep.subr.bf16.mxu0 0
      %2665 = vmatpush2.bf16.msra.mxu0 0
      %2666 = vmatprep.subr.bf16.mxu0 0
      %2667 = vmatpush2.bf16.msra.mxu0 0
      %2668 = vmatprep.subr.bf16.mxu0 0
      %2669 = vmatpush2.bf16.msra.mxu0 0
      %2670 = vmatprep.mubr.bf16.mxu0 0
      %2671 = vmatmul.mubr.bf16.gmra.mxu0 %v2267
      %v2672 = vpop.f32.mrf.mxu0
      %v2673 = vadd.f32 0.0, %v2672
      %v2674 = vpop.f32.mrf.mxu0
      %v2675 = vadd.f32 0.0, %v2674
      %v2676 = vpop.f32.mrf.mxu0
      %v2677 = vpop.f32.mrf.mxu0
      %2678 = vdwg.mxu0
      %v2679 = vadd.f32 %v2261, %v2591
      %v2680 = vadd.f32 %v2262, %v2593
      %v2681 = vadd.f32 %v2263, %v2632
      %v2682 = vadd.f32 %v2264, %v2634
      %v2683 = vadd.f32 %v2265, %v2673
      %v2684 = vadd.f32 %v2266, %v2675
      %v2685 = vsel %vm2123, %v2679, -1e+30
      %2686 = vmax.xlane.f32.xlu0 %v2685
      %v2687 = vpop.xlane.xlu0 %2686
      %v2688 = vsub.f32 %v2685, %v2687
      %v2689 = vmul.f32 %v2688, 1.442695
      %v2690 = vpow.pop %v2689
      %2691 = vadd.xlane.f32.xlu0 %v2690
      %v2692 = vpop.xlane.xlu0 %2691
      %v2693 = vrcp.pop %v2692
      %v2694 = vmul.f32 %v2690, %v2693
      %v2695 = vpack.c.bf16 %v2694, %v2694
      %2696 = vmatprep.subr.bf16.mxu0 0
      %2697 = vmatpush1.bf16.msra.mxu0 %v1676
      %2698 = vmatprep.subr.bf16.mxu0 0
      %2699 = vmatpush1.bf16.msra.mxu0 %v1675
      %2700 = vmatprep.subr.bf16.mxu0 0
      %2701 = vmatpush1.bf16.msra.mxu0 %v1674
      %2702 = vmatprep.subr.bf16.mxu0 0
      %2703 = vmatpush1.bf16.msra.mxu0 %v1673
      %2704 = vmatprep.subr.bf16.mxu0 0
      %2705 = vmatpush1.bf16.msra.mxu0 %v1672
      %2706 = vmatprep.subr.bf16.mxu0 0
      %2707 = vmatpush1.bf16.msra.mxu0 %v1671
      %2708 = vmatprep.subr.bf16.mxu0 0
      %2709 = vmatpush1.bf16.msra.mxu0 %v1670
      %2710 = vmatprep.subr.bf16.mxu0 0
      %2711 = vmatpush1.bf16.msra.mxu0 %v1669
      %2712 = vmatprep.subr.bf16.mxu0 0
      %2713 = vmatpush2.bf16.msra.mxu0 0
      %2714 = vmatprep.subr.bf16.mxu0 0
      %2715 = vmatpush2.bf16.msra.mxu0 0
      %2716 = vmatprep.subr.bf16.mxu0 0
      %2717 = vmatpush2.bf16.msra.mxu0 0
      %2718 = vmatprep.subr.bf16.mxu0 0
      %2719 = vmatpush2.bf16.msra.mxu0 0
      %2720 = vmatprep.subr.bf16.mxu0 0
      %2721 = vmatpush2.bf16.msra.mxu0 0
      %2722 = vmatprep.subr.bf16.mxu0 0
      %2723 = vmatpush2.bf16.msra.mxu0 0
      %2724 = vmatprep.subr.bf16.mxu0 0
      %2725 = vmatpush2.bf16.msra.mxu0 0
      %2726 = vmatprep.subr.bf16.mxu0 0
      %2727 = vmatpush2.bf16.msra.mxu0 0
      %2728 = vmatprep.mubr.bf16.mxu0 0
      %2729 = vmatmul.mubr.bf16.gmra.mxu0 %v2695
      %v2730 = vpop.f32.mrf.mxu0
      %v2731 = vadd.f32 0.0, %v2730
      %v2732 = vpop.f32.mrf.mxu0
      %v2733 = vpop.f32.mrf.mxu0
      %v2734 = vpop.f32.mrf.mxu0
      %2735 = vdwg.mxu0
      %v2736 = vsel %vm2123, %v2680, -1e+30
      %2737 = vmax.xlane.f32.xlu0 %v2736
      %v2738 = vpop.xlane.xlu0 %2737
      %v2739 = vsub.f32 %v2736, %v2738
      %v2740 = vmul.f32 %v2739, 1.442695
      %v2741 = vpow.pop %v2740
      %2742 = vadd.xlane.f32.xlu0 %v2741
      %v2743 = vpop.xlane.xlu0 %2742
      %v2744 = vrcp.pop %v2743
      %v2745 = vmul.f32 %v2741, %v2744
      %v2746 = vpack.c.bf16 %v2745, %v2745
      %2747 = vmatprep.subr.bf16.mxu0 0
      %2748 = vmatpush1.bf16.msra.mxu0 %v1676
      %2749 = vmatprep.subr.bf16.mxu0 0
      %2750 = vmatpush1.bf16.msra.mxu0 %v1675
      %2751 = vmatprep.subr.bf16.mxu0 0
      %2752 = vmatpush1.bf16.msra.mxu0 %v1674
      %2753 = vmatprep.subr.bf16.mxu0 0
      %2754 = vmatpush1.bf16.msra.mxu0 %v1673
      %2755 = vmatprep.subr.bf16.mxu0 0
      %2756 = vmatpush1.bf16.msra.mxu0 %v1672
      %2757 = vmatprep.subr.bf16.mxu0 0
      %2758 = vmatpush1.bf16.msra.mxu0 %v1671
      %2759 = vmatprep.subr.bf16.mxu0 0
      %2760 = vmatpush1.bf16.msra.mxu0 %v1670
      %2761 = vmatprep.subr.bf16.mxu0 0
      %2762 = vmatpush1.bf16.msra.mxu0 %v1669
      %2763 = vmatprep.subr.bf16.mxu0 0
      %2764 = vmatpush2.bf16.msra.mxu0 0
      %2765 = vmatprep.subr.bf16.mxu0 0
      %2766 = vmatpush2.bf16.msra.mxu0 0
      %2767 = vmatprep.subr.bf16.mxu0 0
      %2768 = vmatpush2.bf16.msra.mxu0 0
      %2769 = vmatprep.subr.bf16.mxu0 0
      %2770 = vmatpush2.bf16.msra.mxu0 0
      %2771 = vmatprep.subr.bf16.mxu0 0
      %2772 = vmatpush2.bf16.msra.mxu0 0
      %2773 = vmatprep.subr.bf16.mxu0 0
      %2774 = vmatpush2.bf16.msra.mxu0 0
      %2775 = vmatprep.subr.bf16.mxu0 0
      %2776 = vmatpush2.bf16.msra.mxu0 0
      %2777 = vmatprep.subr.bf16.mxu0 0
      %2778 = vmatpush2.bf16.msra.mxu0 0
      %2779 = vmatprep.mubr.bf16.mxu0 0
      %2780 = vmatmul.mubr.bf16.gmra.mxu0 %v2746
      %v2781 = vpop.f32.mrf.mxu0
      %v2782 = vadd.f32 0.0, %v2781
      %v2783 = vpop.f32.mrf.mxu0
      %v2784 = vpop.f32.mrf.mxu0
      %v2785 = vpop.f32.mrf.mxu0
      %2786 = vdwg.mxu0
      %v2787 = vsub.f32 1.0, %v2782
      %v2788 = vmul.f32 %v2731, %v2787
      %v2789 = vmul.f32 %v2681, 0.5
      %v2790 = vtanh.pop %v2789
      %v2791 = vadd.f32 %v2790, 1.0
      %v2792 = vmul.f32 %v2791, 0.5
      %v2793 = vmul.f32 %v2792, %v2788
      %v2794 = vsub.f32 %v2731, %v2788
      %v2795 = vadd.f32 %v2793, %v2794
      %v2796 = vmul.f32 %v2795, %v1691
      %v2797 = vmul.f32 %v2682, 0.5
      %v2798 = vtanh.pop %v2797
      %v2799 = vadd.f32 %v2798, 1.0
      %v2800 = vmul.f32 %v2799, 0.5
      %v2801 = vmul.f32 %v2800, %v2788
      %v2802 = vsub.f32 %v2787, %v2788
      %v2803 = vadd.f32 %v2801, %v2802
      %v2804 = vtanh.pop %v2684
      %v2805 = vmul.f32 %v2803, %v2804
      %v2806 = vadd.f32 %v2796, %v2805
      %v2807 = vmul.f32 %v2683, 0.5
      %v2808 = vtanh.pop %v2807
      %v2809 = vadd.f32 %v2808, 1.0
      %v2810 = vmul.f32 %v2809, 0.5
      %v2811 = vtanh.pop %v2806
      %v2812 = vmul.f32 %v2810, %v2811
      %v2813 = vpack.c.bf16 %v2812, %v2812
      %s2814 = smul.addr %s1683, 4
      %s2815 = scalar_lea.vmem [#allocation20], %s2814
      %2816 = vst [vmem:[%s2815] sm:$0xf] %v2813
    $region66: #{tpu_custom_call.1} parent=1 // loop_footer
      %s1687 = sadd.s32 1, %s1683
    $region67: #{tpu_custom_call.1} parent=1 // loop_footer_branch
      %1682 = sbr.rel target = $region63
    $region68: #{tpu_custom_call.1} parent=1 // loop_exit
      _
    %2817 = vst [vmem:[#allocation2] sm:$0xff] %v1688
    %2818 = vst [vmem:[#allocation3] sm:$0xff] %v1689
    %2819 = vst [vmem:[#allocation4] sm:$0xff] %v1690
    %2820 = vst [vmem:[#allocation5] sm:$0xff] %v1691
    // Predicated region
    $region69: #{tpu_custom_call.1} parent=1 // pred_check
      _
    $region70: #{tpu_custom_call.1} parent=1 // pred_check_branch
      %2822 = sbr.rel (0) target = $region72
    $region71: #{tpu_custom_call.1} parent=1 // pred_region
      %s2824 = ssub.s32 512, 512
      %2825 = vsyncadd [#allocation10], %s2824
      %s2826 = sshll.u32 [#allocation19], 4
      %s2827 = int_to_ptr.vmem [resolvable:$true] %s2826
      %2832 = dma.vmem_to_hbm [thread:$0]  %s2827, 512, %s8, [#allocation10], 64, 64, 4
    $region72: #{tpu_custom_call.1} parent=1 // pred_fallthru
      _
    // Predicated region
    $region73: #{tpu_custom_call.1} parent=1 // pred_check
      _
    $region74: #{tpu_custom_call.1} parent=1 // pred_check_branch
      %2834 = sbr.rel (0) target = $region76
    $region75: #{tpu_custom_call.1} parent=1 // pred_region
      %s2836 = ssub.s32 512, 512
      %2837 = vsyncadd [#allocation21], %s2836
      %s2838 = sshll.u32 [#allocation20], 4
      %s2839 = int_to_ptr.vmem [resolvable:$true] %s2838
      %2844 = dma.vmem_to_hbm [thread:$0]  %s2839, 512, %s9, [#allocation21], 64, 64, 4
    $region76: #{tpu_custom_call.1} parent=1 // pred_fallthru
      _
    // Predicated region
    $region77: #{tpu_custom_call.1} parent=1 // pred_check
      _
    $region78: #{tpu_custom_call.1} parent=1 // pred_check_branch
      %2846 = sbr.rel (0) target = $region80
    $region79: #{tpu_custom_call.1} parent=1 // pred_region
      %2847 = dma.done [#allocation10], 512
    $region80: #{tpu_custom_call.1} parent=1 // pred_fallthru
      _
    // Predicated region
    $region81: #{tpu_custom_call.1} parent=1 // pred_check
      _
    $region82: #{tpu_custom_call.1} parent=1 // pred_check_branch
      %2849 = sbr.rel (0) target = $region84
    $region83: #{tpu_custom_call.1} parent=1 // pred_region
      %2850 = dma.done [#allocation21], 512
    $region84: #{tpu_custom_call.1} parent=1 // pred_fallthru
      _
    %2851 = vsyncpa [#allocation9], 1
    %2852 = vsyncpa [#allocation12], 1
    %2853 = vsyncpa [#allocation15], 1
    %2854 = vsyncpa [#allocation18], 1
    %2855 = vsyncpa [#allocation10], 1
    %2856 = vsyncpa [#allocation21], 1

</llo_original>
